<compile_context>
chip_gen: v7x
topology: tpu7x:2x2x1
jax: 0.10.0
libtpu: 0.0.40
codegen_flags: <defaults>
</compile_context>

<pallas_src>
import functools

import jax
import jax.numpy as jnp
from jax.experimental import pallas as pl
from jax.experimental.pallas import tpu as pltpu


# ----------------------------- in-kernel helpers -----------------------------

def _layernorm(x, g, b, eps):
    # Annotated-Transformer LayerNorm: a_2 * (x - mean) / (std + eps) + b_2
    # (torch.std default is unbiased, ddof=1).  Exact division for accuracy.
    d = x.shape[-1]
    mean = jnp.mean(x, axis=-1, keepdims=True)
    diff = x - mean
    var = jnp.sum(diff * diff, axis=-1, keepdims=True) * (1.0 / (d - 1))
    return g * diff / (jnp.sqrt(var) + eps) + b


def _mha(q_in, kv_in, bias, wq, bq, wkv, bkv, wo, bo, n_heads):
    """Multi-head attention on flattened (rows, D) activations.

    bias: additive (rows_q, rows_k) mask bias (0 keep / -1e9 masked), already
    block-diagonal across batch -- hoisted out of any per-head work.
    """
    d = q_in.shape[-1]
    dk = d // n_heads
    scale = 1.0 / (dk ** 0.5)

    q = jnp.dot(q_in.astype(jnp.bfloat16), wq,
                preferred_element_type=jnp.float32) + bq            # (Mq, D)
    kv = jnp.dot(kv_in.astype(jnp.bfloat16), wkv,
                 preferred_element_type=jnp.float32) + bkv           # (Mk, 2D)
    k = kv[:, :d]
    v = kv[:, d:]

    # Build (H, M, dk) with head leading via static lane slices, then one
    # batched contraction per attention matmul (no per-head jnp.dot / .T).
    qh = jnp.stack([q[:, h * dk:(h + 1) * dk] for h in range(n_heads)],
                   axis=0).astype(jnp.bfloat16)
    kh = jnp.stack([k[:, h * dk:(h + 1) * dk] for h in range(n_heads)],
                   axis=0).astype(jnp.bfloat16)
    vh = jnp.stack([v[:, h * dk:(h + 1) * dk] for h in range(n_heads)],
                   axis=0).astype(jnp.bfloat16)

    s = jnp.einsum('hqd,hkd->hqk', qh, kh,
                   preferred_element_type=jnp.float32) * scale       # (H,Mq,Mk)
    s = s + bias[None, :, :]                                          # hoisted mask
    s = s - jnp.max(s, axis=-1, keepdims=True)
    p = jnp.exp(s)
    p = p / jnp.sum(p, axis=-1, keepdims=True)                        # exact divide

    o = jnp.einsum('hqk,hkd->hqd', p.astype(jnp.bfloat16), vh,
                   preferred_element_type=jnp.float32)                # (H,Mq,dk)
    attn = jnp.concatenate([o[h] for h in range(n_heads)], axis=-1)   # (Mq, D)

    return jnp.dot(attn.astype(jnp.bfloat16), wo,
                   preferred_element_type=jnp.float32) + bo


# ----------------------------- fused decoder kernel -----------------------------

def _decoder_stack_kernel(x_ref, mem_ref, sab_ref, cab_ref, fng_ref, fnb_ref,
                          ln0g_ref, ln0b_ref,
                          sa_wq_ref, sa_bq_ref, sa_wkv_ref, sa_bkv_ref,
                          sa_wo_ref, sa_bo_ref,
                          ln1g_ref, ln1b_ref,
                          ca_wq_ref, ca_bq_ref, ca_wkv_ref, ca_bkv_ref,
                          ca_wo_ref, ca_bo_ref,
                          ln2g_ref, ln2b_ref,
                          w1_ref, b1_ref, w2_ref, b2_ref,
                          o_ref, h_ref, *, n_heads, eps):
    # One grid step == one decoder layer; residual stream stays in VMEM scratch.
    l = pl.program_id(0)

    @pl.when(l == 0)
    def _():
        h_ref[...] = x_ref[...]

    x = h_ref[...]

    # ---- sublayer 0: masked self-attention (pre-LN, residual; dropout = identity) ----
    xn = _layernorm(x, ln0g_ref[...], ln0b_ref[...], eps)
    x = x + _mha(xn, xn, sab_ref[...],
                 sa_wq_ref[...], sa_bq_ref[...], sa_wkv_ref[...], sa_bkv_ref[...],
                 sa_wo_ref[...], sa_bo_ref[...], n_heads)

    # ---- sublayer 1: encoder-decoder (source) attention ----
    xn = _layernorm(x, ln1g_ref[...], ln1b_ref[...], eps)
    x = x + _mha(xn, mem_ref[...], cab_ref[...],
                 ca_wq_ref[...], ca_bq_ref[...], ca_wkv_ref[...], ca_bkv_ref[...],
                 ca_wo_ref[...], ca_bo_ref[...], n_heads)

    # ---- sublayer 2: position-wise feed-forward ----
    xn = _layernorm(x, ln2g_ref[...], ln2b_ref[...], eps)
    hdn = jnp.dot(xn.astype(jnp.bfloat16), w1_ref[...],
                  preferred_element_type=jnp.float32) + b1_ref[...]
    hdn = jnp.maximum(hdn, 0.0)
    y = jnp.dot(hdn.astype(jnp.bfloat16), w2_ref[...],
                preferred_element_type=jnp.float32) + b2_ref[...]
    x = x + y

    h_ref[...] = x

    @pl.when(l == pl.num_programs(0) - 1)
    def _():
        o_ref[...] = _layernorm(x, fng_ref[...], fnb_ref[...], eps)


# ----------------------------- wrapper -----------------------------

def _const_spec(shape):
    nd = len(shape)
    return pl.BlockSpec(shape, lambda l, nd=nd: (0,) * nd)


def _layer_spec(shape):
    nd = len(shape)
    return pl.BlockSpec((None,) + shape, lambda l, nd=nd: (l,) + (0,) * nd)


def _blockdiag_bias(mask, b, tq, tk):
    """(B, Tq, Tk) 1/0 mask -> (B*Tq, B*Tk) additive bias, block-diagonal in B."""
    keep = jnp.broadcast_to(mask, (b, tq, tk)) != 0
    eye = jnp.eye(b, dtype=bool)
    keep4 = keep[:, :, None, :] & eye[:, None, :, None]     # (B, Tq, B, Tk)
    return jnp.where(keep4.reshape(b * tq, b * tk), 0.0, -1e9).astype(jnp.float32)


@functools.partial(jax.jit, static_argnames=("n_heads",))
def decoder_forward(params, x, memory, src_mask, tgt_mask, *, n_heads):
    B, Tq, D = x.shape
    Ts = memory.shape[1]
    L = params["sa_wq"].shape[0]
    Dff = params["ff_w1"].shape[2]
    M, Mk = B * Tq, B * Ts

    x_flat = x.reshape(M, D)
    mem_flat = memory.reshape(Mk, D)
    sa_bias = _blockdiag_bias(tgt_mask, B, Tq, Tq)           # (M, M)
    ca_bias = _blockdiag_bias(src_mask, B, Tq, Ts)           # (M, Mk)

    in_specs = [
        _const_spec((M, D)), _const_spec((Mk, D)),
        _const_spec((M, M)), _const_spec((M, Mk)),
        _const_spec((1, D)), _const_spec((1, D)),
        # per-layer stacked params, streamed by the layer grid axis
        _layer_spec((1, D)), _layer_spec((1, D)),
        _layer_spec((D, D)), _layer_spec((1, D)),
        _layer_spec((D, 2 * D)), _layer_spec((1, 2 * D)),
        _layer_spec((D, D)), _layer_spec((1, D)),
        _layer_spec((1, D)), _layer_spec((1, D)),
        _layer_spec((D, D)), _layer_spec((1, D)),
        _layer_spec((D, 2 * D)), _layer_spec((1, 2 * D)),
        _layer_spec((D, D)), _layer_spec((1, D)),
        _layer_spec((1, D)), _layer_spec((1, D)),
        _layer_spec((D, Dff)), _layer_spec((1, Dff)),
        _layer_spec((Dff, D)), _layer_spec((1, D)),
    ]

    out = pl.pallas_call(
        functools.partial(_decoder_stack_kernel, n_heads=n_heads, eps=1e-6),
        out_shape=jax.ShapeDtypeStruct((M, D), jnp.float32),
        grid=(L,),
        in_specs=in_specs,
        out_specs=_const_spec((M, D)),
        scratch_shapes=[pltpu.VMEM((M, D), jnp.float32)],
        compiler_params=pltpu.CompilerParams(
            dimension_semantics=("arbitrary",)),
    )(x_flat, mem_flat, sa_bias, ca_bias,
      params["norm_g"], params["norm_b"],
      params["ln0_g"], params["ln0_b"],
      params["sa_wq"], params["sa_bq"], params["sa_wkv"], params["sa_bkv"],
      params["sa_wo"], params["sa_bo"],
      params["ln1_g"], params["ln1_b"],
      params["ca_wq"], params["ca_bq"], params["ca_wkv"], params["ca_bkv"],
      params["ca_wo"], params["ca_bo"],
      params["ln2_g"], params["ln2_b"],
      params["ff_w1"], params["ff_b1"], params["ff_w2"], params["ff_b2"])

    return out.reshape(B, Tq, D)


# ----------------------------- deterministic init -----------------------------

def _init_linear(key, din, dout):
    k1, k2 = jax.random.split(key)
    bound = din ** -0.5
    w = jax.random.uniform(k1, (din, dout), jnp.float32, -bound, bound)
    b = jax.random.uniform(k2, (1, dout), jnp.float32, -bound, bound)
    return w, b


def _init_attn(keys, d):
    wq, bq = _init_linear(keys[0], d, d)
    wk, bk = _init_linear(keys[1], d, d)
    wv, bv = _init_linear(keys[2], d, d)
    wo, bo = _init_linear(keys[3], d, d)
    return (wq, bq,
            jnp.concatenate([wk, wv], axis=1), jnp.concatenate([bk, bv], axis=1),
            wo, bo)


def init_params(key, n_layers, d_model, d_ff):
    per_layer = []
    ones = jnp.ones((1, d_model), jnp.float32)
    zeros = jnp.zeros((1, d_model), jnp.float32)
    for _ in range(n_layers):
        key, *ks = jax.random.split(key, 11)
        sa = _init_attn(ks[0:4], d_model)
        ca = _init_attn(ks[4:8], d_model)
        w1, b1 = _init_linear(ks[8], d_model, d_ff)
        w2, b2 = _init_linear(ks[9], d_ff, d_model)
        per_layer.append(dict(
            ln0_g=ones, ln0_b=zeros, ln1_g=ones, ln1_b=zeros,
            ln2_g=ones, ln2_b=zeros,
            sa_wq=sa[0], sa_bq=sa[1], sa_wkv=sa[2], sa_bkv=sa[3],
            sa_wo=sa[4], sa_bo=sa[5],
            ca_wq=ca[0], ca_bq=ca[1], ca_wkv=ca[2], ca_bkv=ca[3],
            ca_wo=ca[4], ca_bo=ca[5],
            ff_w1=w1, ff_b1=b1, ff_w2=w2, ff_b2=b2))
    stacked = {k: jnp.stack([lp[k] for lp in per_layer], axis=0)
               for k in per_layer[0]}
    # bf16 weight matrices: MXU-native and half the weight DMA bytes.
    for k in ("sa_wq", "sa_wkv", "sa_wo", "ca_wq", "ca_wkv", "ca_wo",
              "ff_w1", "ff_w2"):
        stacked[k] = stacked[k].astype(jnp.bfloat16)
    stacked["norm_g"] = ones
    stacked["norm_b"] = zeros
    return stacked


# ----------------------------- main -----------------------------

if __name__ == "__main__":
    B, T_TGT, T_SRC = 2, 8, 8
    D_MODEL, N_HEADS, D_FF, N_LAYERS = 32, 4, 64, 2

    key = jax.random.PRNGKey(0)
    kp, kx, km = jax.random.split(key, 3)

    params = init_params(kp, N_LAYERS, D_MODEL, D_FF)
    x = jax.random.normal(kx, (B, T_TGT, D_MODEL), jnp.float32)
    memory = jax.random.normal(km, (B, T_SRC, D_MODEL), jnp.float32)

    # tgt_mask: causal (subsequent) mask; src_mask: all-ones padding mask.
    tgt_mask = jnp.broadcast_to(
        jnp.tril(jnp.ones((T_TGT, T_TGT), jnp.float32)), (B, T_TGT, T_TGT))
    src_mask = jnp.ones((B, T_TGT, T_SRC), jnp.float32)

    # TODO(synk): nn.Dropout inside each SublayerConnection is identity at
    # inference and is therefore omitted.
    out = decoder_forward(params, x, memory, src_mask, tgt_mask, n_heads=N_HEADS)
    out = jax.block_until_ready(out)
    assert out.shape == (B, T_TGT, D_MODEL)
    assert bool(jnp.all(jnp.isfinite(out)))
    print("KERNEL_OK")
</pallas_src>

<mosaic_0001>
module attributes {stable_mosaic.version = 11 : i64} {
  func.func @_decoder_stack_kernel(%arg0: i32, %arg1: memref<16x32xf32, #tpu.memory_space<vmem>>, %arg2: memref<16x32xf32, #tpu.memory_space<vmem>>, %arg3: memref<16x16xf32, #tpu.memory_space<vmem>>, %arg4: memref<16x16xf32, #tpu.memory_space<vmem>>, %arg5: memref<1x32xf32, #tpu.memory_space<vmem>>, %arg6: memref<1x32xf32, #tpu.memory_space<vmem>>, %arg7: memref<1x1x32xf32, #tpu.memory_space<vmem>>, %arg8: memref<1x1x32xf32, #tpu.memory_space<vmem>>, %arg9: memref<1x32x32xbf16, #tpu.memory_space<vmem>>, %arg10: memref<1x1x32xf32, #tpu.memory_space<vmem>>, %arg11: memref<1x32x64xbf16, #tpu.memory_space<vmem>>, %arg12: memref<1x1x64xf32, #tpu.memory_space<vmem>>, %arg13: memref<1x32x32xbf16, #tpu.memory_space<vmem>>, %arg14: memref<1x1x32xf32, #tpu.memory_space<vmem>>, %arg15: memref<1x1x32xf32, #tpu.memory_space<vmem>>, %arg16: memref<1x1x32xf32, #tpu.memory_space<vmem>>, %arg17: memref<1x32x32xbf16, #tpu.memory_space<vmem>>, %arg18: memref<1x1x32xf32, #tpu.memory_space<vmem>>, %arg19: memref<1x32x64xbf16, #tpu.memory_space<vmem>>, %arg20: memref<1x1x64xf32, #tpu.memory_space<vmem>>, %arg21: memref<1x32x32xbf16, #tpu.memory_space<vmem>>, %arg22: memref<1x1x32xf32, #tpu.memory_space<vmem>>, %arg23: memref<1x1x32xf32, #tpu.memory_space<vmem>>, %arg24: memref<1x1x32xf32, #tpu.memory_space<vmem>>, %arg25: memref<1x32x64xbf16, #tpu.memory_space<vmem>>, %arg26: memref<1x1x64xf32, #tpu.memory_space<vmem>>, %arg27: memref<1x64x32xbf16, #tpu.memory_space<vmem>>, %arg28: memref<1x1x32xf32, #tpu.memory_space<vmem>>, %arg29: memref<16x32xf32, #tpu.memory_space<vmem>>, %arg30: memref<16x32xf32, #tpu.memory_space<vmem>>) attributes {dimension_semantics = [#tpu.dimension_semantics<arbitrary>], iteration_bounds = array<i64: 2>, scalar_prefetch = 0 : i64, scratch_operands = 1 : i64, tpu.core_type = #tpu.core_type<tc>, window_params = [{pipeline_mode = #tpu.pipeline_mode<synchronous>, transform_indices = @transform_0, window_bounds = array<i64: 16, 32>}, {pipeline_mode = #tpu.pipeline_mode<synchronous>, transform_indices = @transform_1, window_bounds = array<i64: 16, 32>}, {pipeline_mode = #tpu.pipeline_mode<synchronous>, transform_indices = @transform_2, window_bounds = array<i64: 16, 16>}, {pipeline_mode = #tpu.pipeline_mode<synchronous>, transform_indices = @transform_3, window_bounds = array<i64: 16, 16>}, {pipeline_mode = #tpu.pipeline_mode<synchronous>, transform_indices = @transform_4, window_bounds = array<i64: 1, 32>}, {pipeline_mode = #tpu.pipeline_mode<synchronous>, transform_indices = @transform_5, window_bounds = array<i64: 1, 32>}, {transform_indices = @transform_6, window_bounds = array<i64: 1, 1, 32>}, {transform_indices = @transform_7, window_bounds = array<i64: 1, 1, 32>}, {transform_indices = @transform_8, window_bounds = array<i64: 1, 32, 32>}, {transform_indices = @transform_9, window_bounds = array<i64: 1, 1, 32>}, {transform_indices = @transform_10, window_bounds = array<i64: 1, 32, 64>}, {transform_indices = @transform_11, window_bounds = array<i64: 1, 1, 64>}, {transform_indices = @transform_12, window_bounds = array<i64: 1, 32, 32>}, {transform_indices = @transform_13, window_bounds = array<i64: 1, 1, 32>}, {transform_indices = @transform_14, window_bounds = array<i64: 1, 1, 32>}, {transform_indices = @transform_15, window_bounds = array<i64: 1, 1, 32>}, {transform_indices = @transform_16, window_bounds = array<i64: 1, 32, 32>}, {transform_indices = @transform_17, window_bounds = array<i64: 1, 1, 32>}, {transform_indices = @transform_18, window_bounds = array<i64: 1, 32, 64>}, {transform_indices = @transform_19, window_bounds = array<i64: 1, 1, 64>}, {transform_indices = @transform_20, window_bounds = array<i64: 1, 32, 32>}, {transform_indices = @transform_21, window_bounds = array<i64: 1, 1, 32>}, {transform_indices = @transform_22, window_bounds = array<i64: 1, 1, 32>}, {transform_indices = @transform_23, window_bounds = array<i64: 1, 1, 32>}, {transform_indices = @transform_24, window_bounds = array<i64: 1, 32, 64>}, {transform_indices = @transform_25, window_bounds = array<i64: 1, 1, 64>}, {transform_indices = @transform_26, window_bounds = array<i64: 1, 64, 32>}, {transform_indices = @transform_27, window_bounds = array<i64: 1, 1, 32>}, {pipeline_mode = #tpu.pipeline_mode<synchronous>, transform_indices = @transform_28, window_bounds = array<i64: 16, 32>}]} {
    %c0_i32 = arith.constant 0 : i32
    %0 = arith.cmpi eq, %arg0, %c0_i32 : i32
    %1 = arith.extui %0 : i1 to i32
    %c0_i32_0 = arith.constant 0 : i32
    %2 = arith.cmpi ne, %1, %c0_i32_0 : i32
    scf.if %2 {
      %c0_110 = arith.constant 0 : index
      %c0_111 = arith.constant 0 : index
      %268 = vector.load %arg1[%c0_110, %c0_111] : memref<16x32xf32, #tpu.memory_space<vmem>>, vector<16x32xf32>
      %c0_112 = arith.constant 0 : index
      %c0_113 = arith.constant 0 : index
      %269 = vector.load %arg30[%c0_112, %c0_113] : memref<16x32xf32, #tpu.memory_space<vmem>>, vector<16x32xf32>
      tpu.vector_store %arg30[%c0_112, %c0_113], %268 {strides = array<i32>} : memref<16x32xf32, #tpu.memory_space<vmem>>, vector<16x32xf32>,
    } else {
    }
    %c0 = arith.constant 0 : index
    %c0_1 = arith.constant 0 : index
    %3 = vector.load %arg30[%c0, %c0_1] : memref<16x32xf32, #tpu.memory_space<vmem>>, vector<16x32xf32>
    %c0_2 = arith.constant 0 : index
    %c0_3 = arith.constant 0 : index
    %c0_4 = arith.constant 0 : index
    %4 = vector.load %arg7[%c0_2, %c0_3, %c0_4] : memref<1x1x32xf32, #tpu.memory_space<vmem>>, vector<1x1x32xf32>
    %5 = vector.shape_cast %4 : vector<1x1x32xf32> to vector<1x32xf32>
    %c0_5 = arith.constant 0 : index
    %c0_6 = arith.constant 0 : index
    %c0_7 = arith.constant 0 : index
    %6 = vector.load %arg8[%c0_5, %c0_6, %c0_7] : memref<1x1x32xf32, #tpu.memory_space<vmem>>, vector<1x1x32xf32>
    %7 = vector.shape_cast %6 : vector<1x1x32xf32> to vector<1x32xf32>
    %cst = arith.constant dense<0.000000e+00> : vector<16xf32>
    %8 = vector.multi_reduction <add>, %3, %cst [1] : vector<16x32xf32> to vector<16xf32>
    %9 = vector.shape_cast %8 : vector<16xf32> to vector<16x1xf32>
    %cst_8 = arith.constant 3.200000e+01 : f32
    %10 = vector.broadcast %cst_8 : f32 to vector<16x1xf32>
    %11 = arith.divf %9, %10 : vector<16x1xf32>
    %12 = vector.broadcast %11 : vector<16x1xf32> to vector<16x32xf32>
    %13 = arith.subf %3, %12 : vector<16x32xf32>
    %14 = arith.mulf %13, %13 : vector<16x32xf32>
    %cst_9 = arith.constant dense<0.000000e+00> : vector<16xf32>
    %15 = vector.multi_reduction <add>, %14, %cst_9 [1] : vector<16x32xf32> to vector<16xf32>
    %16 = vector.shape_cast %15 : vector<16xf32> to vector<16x1xf32>
    %cst_10 = arith.constant 0.0322580636 : f32
    %17 = vector.broadcast %cst_10 : f32 to vector<16x1xf32>
    %18 = arith.mulf %16, %17 : vector<16x1xf32>
    %19 = vector.broadcast %5 : vector<1x32xf32> to vector<16x32xf32>
    %20 = arith.mulf %19, %13 : vector<16x32xf32>
    %21 = math.sqrt %18 : vector<16x1xf32>
    %cst_11 = arith.constant 9.99999997E-7 : f32
    %22 = vector.broadcast %cst_11 : f32 to vector<16x1xf32>
    %23 = arith.addf %21, %22 : vector<16x1xf32>
    %24 = vector.broadcast %23 : vector<16x1xf32> to vector<16x32xf32>
    %25 = arith.divf %20, %24 : vector<16x32xf32>
    %26 = vector.broadcast %7 : vector<1x32xf32> to vector<16x32xf32>
    %27 = arith.addf %25, %26 : vector<16x32xf32>
    %c0_12 = arith.constant 0 : index
    %c0_13 = arith.constant 0 : index
    %28 = vector.load %arg3[%c0_12, %c0_13] : memref<16x16xf32, #tpu.memory_space<vmem>>, vector<16x16xf32>
    %c0_14 = arith.constant 0 : index
    %c0_15 = arith.constant 0 : index
    %c0_16 = arith.constant 0 : index
    %29 = vector.load %arg9[%c0_14, %c0_15, %c0_16] : memref<1x32x32xbf16, #tpu.memory_space<vmem>>, vector<1x32x32xbf16>
    %30 = vector.shape_cast %29 : vector<1x32x32xbf16> to vector<32x32xbf16>
    %c0_17 = arith.constant 0 : index
    %c0_18 = arith.constant 0 : index
    %c0_19 = arith.constant 0 : index
    %31 = vector.load %arg10[%c0_17, %c0_18, %c0_19] : memref<1x1x32xf32, #tpu.memory_space<vmem>>, vector<1x1x32xf32>
    %32 = vector.shape_cast %31 : vector<1x1x32xf32> to vector<1x32xf32>
    %c0_20 = arith.constant 0 : index
    %c0_21 = arith.constant 0 : index
    %c0_22 = arith.constant 0 : index
    %33 = vector.load %arg11[%c0_20, %c0_21, %c0_22] : memref<1x32x64xbf16, #tpu.memory_space<vmem>>, vector<1x32x64xbf16>
    %34 = vector.shape_cast %33 : vector<1x32x64xbf16> to vector<32x64xbf16>
    %c0_23 = arith.constant 0 : index
    %c0_24 = arith.constant 0 : index
    %c0_25 = arith.constant 0 : index
    %35 = vector.load %arg12[%c0_23, %c0_24, %c0_25] : memref<1x1x64xf32, #tpu.memory_space<vmem>>, vector<1x1x64xf32>
    %36 = vector.shape_cast %35 : vector<1x1x64xf32> to vector<1x64xf32>
    %c0_26 = arith.constant 0 : index
    %c0_27 = arith.constant 0 : index
    %c0_28 = arith.constant 0 : index
    %37 = vector.load %arg13[%c0_26, %c0_27, %c0_28] : memref<1x32x32xbf16, #tpu.memory_space<vmem>>, vector<1x32x32xbf16>
    %38 = vector.shape_cast %37 : vector<1x32x32xbf16> to vector<32x32xbf16>
    %c0_29 = arith.constant 0 : index
    %c0_30 = arith.constant 0 : index
    %c0_31 = arith.constant 0 : index
    %39 = vector.load %arg14[%c0_29, %c0_30, %c0_31] : memref<1x1x32xf32, #tpu.memory_space<vmem>>, vector<1x1x32xf32>
    %40 = vector.shape_cast %39 : vector<1x1x32xf32> to vector<1x32xf32>
    %41 = arith.truncf %27 : vector<16x32xf32> to vector<16x32xbf16>
    %cst_32 = arith.constant dense<0.000000e+00> : vector<16x32xf32>
    %42 = tpu.matmul %41, %30, %cst_32 {dimension_numbers = #tpu.dot_dimension_numbers<[1], [0], [0], [1], [0, 0, 1, 1], [], []>} : vector<16x32xbf16>, vector<32x32xbf16>, vector<16x32xf32> -> vector<16x32xf32>
    %43 = vector.broadcast %32 : vector<1x32xf32> to vector<16x32xf32>
    %44 = arith.addf %42, %43 : vector<16x32xf32>
    %45 = arith.truncf %27 : vector<16x32xf32> to vector<16x32xbf16>
    %cst_33 = arith.constant dense<0.000000e+00> : vector<16x64xf32>
    %46 = tpu.matmul %45, %34, %cst_33 {dimension_numbers = #tpu.dot_dimension_numbers<[1], [0], [0], [1], [0, 0, 1, 1], [], []>} : vector<16x32xbf16>, vector<32x64xbf16>, vector<16x64xf32> -> vector<16x64xf32>
    %47 = vector.broadcast %36 : vector<1x64xf32> to vector<16x64xf32>
    %48 = arith.addf %46, %47 : vector<16x64xf32>
    %49 = vector.extract_strided_slice %48 {offsets = [0, 0], sizes = [16, 32], strides = [1, 1]} : vector<16x64xf32> to vector<16x32xf32>
    %50 = vector.extract_strided_slice %48 {offsets = [0, 32], sizes = [16, 32], strides = [1, 1]} : vector<16x64xf32> to vector<16x32xf32>
    %51 = vector.extract_strided_slice %44 {offsets = [0, 0], sizes = [16, 8], strides = [1, 1]} : vector<16x32xf32> to vector<16x8xf32>
    %52 = vector.extract_strided_slice %44 {offsets = [0, 8], sizes = [16, 8], strides = [1, 1]} : vector<16x32xf32> to vector<16x8xf32>
    %53 = vector.extract_strided_slice %44 {offsets = [0, 16], sizes = [16, 8], strides = [1, 1]} : vector<16x32xf32> to vector<16x8xf32>
    %54 = vector.extract_strided_slice %44 {offsets = [0, 24], sizes = [16, 8], strides = [1, 1]} : vector<16x32xf32> to vector<16x8xf32>
    %55 = vector.shape_cast %51 : vector<16x8xf32> to vector<1x16x8xf32>
    %56 = vector.shape_cast %52 : vector<16x8xf32> to vector<1x16x8xf32>
    %57 = vector.shape_cast %53 : vector<16x8xf32> to vector<1x16x8xf32>
    %58 = vector.shape_cast %54 : vector<16x8xf32> to vector<1x16x8xf32>
    %59 = tpu.concatenate %55, %56, %57, %58 in 0 : vector<1x16x8xf32>, vector<1x16x8xf32>, vector<1x16x8xf32>, vector<1x16x8xf32> -> vector<4x16x8xf32>
    %60 = arith.truncf %59 : vector<4x16x8xf32> to vector<4x16x8xbf16>
    %61 = vector.extract_strided_slice %49 {offsets = [0, 0], sizes = [16, 8], strides = [1, 1]} : vector<16x32xf32> to vector<16x8xf32>
    %62 = vector.extract_strided_slice %49 {offsets = [0, 8], sizes = [16, 8], strides = [1, 1]} : vector<16x32xf32> to vector<16x8xf32>
    %63 = vector.extract_strided_slice %49 {offsets = [0, 16], sizes = [16, 8], strides = [1, 1]} : vector<16x32xf32> to vector<16x8xf32>
    %64 = vector.extract_strided_slice %49 {offsets = [0, 24], sizes = [16, 8], strides = [1, 1]} : vector<16x32xf32> to vector<16x8xf32>
    %65 = vector.shape_cast %61 : vector<16x8xf32> to vector<1x16x8xf32>
    %66 = vector.shape_cast %62 : vector<16x8xf32> to vector<1x16x8xf32>
    %67 = vector.shape_cast %63 : vector<16x8xf32> to vector<1x16x8xf32>
    %68 = vector.shape_cast %64 : vector<16x8xf32> to vector<1x16x8xf32>
    %69 = tpu.concatenate %65, %66, %67, %68 in 0 : vector<1x16x8xf32>, vector<1x16x8xf32>, vector<1x16x8xf32>, vector<1x16x8xf32> -> vector<4x16x8xf32>
    %70 = arith.truncf %69 : vector<4x16x8xf32> to vector<4x16x8xbf16>
    %71 = vector.extract_strided_slice %50 {offsets = [0, 0], sizes = [16, 8], strides = [1, 1]} : vector<16x32xf32> to vector<16x8xf32>
    %72 = vector.extract_strided_slice %50 {offsets = [0, 8], sizes = [16, 8], strides = [1, 1]} : vector<16x32xf32> to vector<16x8xf32>
    %73 = vector.extract_strided_slice %50 {offsets = [0, 16], sizes = [16, 8], strides = [1, 1]} : vector<16x32xf32> to vector<16x8xf32>
    %74 = vector.extract_strided_slice %50 {offsets = [0, 24], sizes = [16, 8], strides = [1, 1]} : vector<16x32xf32> to vector<16x8xf32>
    %75 = vector.shape_cast %71 : vector<16x8xf32> to vector<1x16x8xf32>
    %76 = vector.shape_cast %72 : vector<16x8xf32> to vector<1x16x8xf32>
    %77 = vector.shape_cast %73 : vector<16x8xf32> to vector<1x16x8xf32>
    %78 = vector.shape_cast %74 : vector<16x8xf32> to vector<1x16x8xf32>
    %79 = tpu.concatenate %75, %76, %77, %78 in 0 : vector<1x16x8xf32>, vector<1x16x8xf32>, vector<1x16x8xf32>, vector<1x16x8xf32> -> vector<4x16x8xf32>
    %80 = arith.truncf %79 : vector<4x16x8xf32> to vector<4x16x8xbf16>
    "tpu.trace_start"() <{level = 10 : i32, message = "hqd,hkd->hqk"}> : () -> ()
    %cst_34 = arith.constant dense<0.000000e+00> : vector<4x16x16xf32>
    %81 = tpu.matmul %60, %70, %cst_34 {dimension_numbers = #tpu.dot_dimension_numbers<[2], [2], [1], [1], [0, 0, 0, 1, 1, 1], [0], [0]>} : vector<4x16x8xbf16>, vector<4x16x8xbf16>, vector<4x16x16xf32> -> vector<4x16x16xf32>
    "tpu.trace_stop"() : () -> ()
    %cst_35 = arith.constant 0.353553385 : f32
    %82 = vector.broadcast %cst_35 : f32 to vector<4x16x16xf32>
    %83 = arith.mulf %81, %82 : vector<4x16x16xf32>
    %84 = vector.shape_cast %28 : vector<16x16xf32> to vector<1x16x16xf32>
    %85 = vector.broadcast %84 : vector<1x16x16xf32> to vector<4x16x16xf32>
    %86 = arith.addf %83, %85 : vector<4x16x16xf32>
    %cst_36 = arith.constant dense<0xFF800000> : vector<4x16xf32>
    %87 = vector.multi_reduction <maximumf>, %86, %cst_36 [2] : vector<4x16x16xf32> to vector<4x16xf32>
    %88 = vector.shape_cast %87 : vector<4x16xf32> to vector<4x16x1xf32>
    %89 = vector.broadcast %88 : vector<4x16x1xf32> to vector<4x16x16xf32>
    %90 = arith.subf %86, %89 : vector<4x16x16xf32>
    %91 = math.exp %90 : vector<4x16x16xf32>
    %cst_37 = arith.constant dense<0.000000e+00> : vector<4x16xf32>
    %92 = vector.multi_reduction <add>, %91, %cst_37 [2] : vector<4x16x16xf32> to vector<4x16xf32>
    %93 = vector.shape_cast %92 : vector<4x16xf32> to vector<4x16x1xf32>
    %94 = vector.broadcast %93 : vector<4x16x1xf32> to vector<4x16x16xf32>
    %95 = arith.divf %91, %94 : vector<4x16x16xf32>
    %96 = arith.truncf %95 : vector<4x16x16xf32> to vector<4x16x16xbf16>
    "tpu.trace_start"() <{level = 10 : i32, message = "hqk,hkd->hqd"}> : () -> ()
    %cst_38 = arith.constant dense<0.000000e+00> : vector<4x16x8xf32>
    %97 = tpu.matmul %96, %80, %cst_38 {dimension_numbers = #tpu.dot_dimension_numbers<[2], [1], [1], [2], [0, 0, 0, 1, 1, 2], [0], [0]>} : vector<4x16x16xbf16>, vector<4x16x8xbf16>, vector<4x16x8xf32> -> vector<4x16x8xf32>
    "tpu.trace_stop"() : () -> ()
    %98 = vector.extract_strided_slice %97 {offsets = [0, 0, 0], sizes = [1, 16, 8], strides = [1, 1, 1]} : vector<4x16x8xf32> to vector<1x16x8xf32>
    %99 = vector.shape_cast %98 : vector<1x16x8xf32> to vector<16x8xf32>
    %100 = vector.extract_strided_slice %97 {offsets = [1, 0, 0], sizes = [1, 16, 8], strides = [1, 1, 1]} : vector<4x16x8xf32> to vector<1x16x8xf32>
    %101 = vector.shape_cast %100 : vector<1x16x8xf32> to vector<16x8xf32>
    %102 = vector.extract_strided_slice %97 {offsets = [2, 0, 0], sizes = [1, 16, 8], strides = [1, 1, 1]} : vector<4x16x8xf32> to vector<1x16x8xf32>
    %103 = vector.shape_cast %102 : vector<1x16x8xf32> to vector<16x8xf32>
    %104 = vector.extract_strided_slice %97 {offsets = [3, 0, 0], sizes = [1, 16, 8], strides = [1, 1, 1]} : vector<4x16x8xf32> to vector<1x16x8xf32>
    %105 = vector.shape_cast %104 : vector<1x16x8xf32> to vector<16x8xf32>
    %106 = tpu.concatenate %99, %101, %103, %105 in 1 : vector<16x8xf32>, vector<16x8xf32>, vector<16x8xf32>, vector<16x8xf32> -> vector<16x32xf32>
    %107 = arith.truncf %106 : vector<16x32xf32> to vector<16x32xbf16>
    %cst_39 = arith.constant dense<0.000000e+00> : vector<16x32xf32>
    %108 = tpu.matmul %107, %38, %cst_39 {dimension_numbers = #tpu.dot_dimension_numbers<[1], [0], [0], [1], [0, 0, 1, 1], [], []>} : vector<16x32xbf16>, vector<32x32xbf16>, vector<16x32xf32> -> vector<16x32xf32>
    %109 = vector.broadcast %40 : vector<1x32xf32> to vector<16x32xf32>
    %110 = arith.addf %108, %109 : vector<16x32xf32>
    %111 = arith.addf %3, %110 : vector<16x32xf32>
    %c0_40 = arith.constant 0 : index
    %c0_41 = arith.constant 0 : index
    %c0_42 = arith.constant 0 : index
    %112 = vector.load %arg15[%c0_40, %c0_41, %c0_42] : memref<1x1x32xf32, #tpu.memory_space<vmem>>, vector<1x1x32xf32>
    %113 = vector.shape_cast %112 : vector<1x1x32xf32> to vector<1x32xf32>
    %c0_43 = arith.constant 0 : index
    %c0_44 = arith.constant 0 : index
    %c0_45 = arith.constant 0 : index
    %114 = vector.load %arg16[%c0_43, %c0_44, %c0_45] : memref<1x1x32xf32, #tpu.memory_space<vmem>>, vector<1x1x32xf32>
    %115 = vector.shape_cast %114 : vector<1x1x32xf32> to vector<1x32xf32>
    %cst_46 = arith.constant dense<0.000000e+00> : vector<16xf32>
    %116 = vector.multi_reduction <add>, %111, %cst_46 [1] : vector<16x32xf32> to vector<16xf32>
    %117 = vector.shape_cast %116 : vector<16xf32> to vector<16x1xf32>
    %cst_47 = arith.constant 3.200000e+01 : f32
    %118 = vector.broadcast %cst_47 : f32 to vector<16x1xf32>
    %119 = arith.divf %117, %118 : vector<16x1xf32>
    %120 = vector.broadcast %119 : vector<16x1xf32> to vector<16x32xf32>
    %121 = arith.subf %111, %120 : vector<16x32xf32>
    %122 = arith.mulf %121, %121 : vector<16x32xf32>
    %cst_48 = arith.constant dense<0.000000e+00> : vector<16xf32>
    %123 = vector.multi_reduction <add>, %122, %cst_48 [1] : vector<16x32xf32> to vector<16xf32>
    %124 = vector.shape_cast %123 : vector<16xf32> to vector<16x1xf32>
    %cst_49 = arith.constant 0.0322580636 : f32
    %125 = vector.broadcast %cst_49 : f32 to vector<16x1xf32>
    %126 = arith.mulf %124, %125 : vector<16x1xf32>
    %127 = vector.broadcast %113 : vector<1x32xf32> to vector<16x32xf32>
    %128 = arith.mulf %127, %121 : vector<16x32xf32>
    %129 = math.sqrt %126 : vector<16x1xf32>
    %cst_50 = arith.constant 9.99999997E-7 : f32
    %130 = vector.broadcast %cst_50 : f32 to vector<16x1xf32>
    %131 = arith.addf %129, %130 : vector<16x1xf32>
    %132 = vector.broadcast %131 : vector<16x1xf32> to vector<16x32xf32>
    %133 = arith.divf %128, %132 : vector<16x32xf32>
    %134 = vector.broadcast %115 : vector<1x32xf32> to vector<16x32xf32>
    %135 = arith.addf %133, %134 : vector<16x32xf32>
    %c0_51 = arith.constant 0 : index
    %c0_52 = arith.constant 0 : index
    %136 = vector.load %arg2[%c0_51, %c0_52] : memref<16x32xf32, #tpu.memory_space<vmem>>, vector<16x32xf32>
    %c0_53 = arith.constant 0 : index
    %c0_54 = arith.constant 0 : index
    %137 = vector.load %arg4[%c0_53, %c0_54] : memref<16x16xf32, #tpu.memory_space<vmem>>, vector<16x16xf32>
    %c0_55 = arith.constant 0 : index
    %c0_56 = arith.constant 0 : index
    %c0_57 = arith.constant 0 : index
    %138 = vector.load %arg17[%c0_55, %c0_56, %c0_57] : memref<1x32x32xbf16, #tpu.memory_space<vmem>>, vector<1x32x32xbf16>
    %139 = vector.shape_cast %138 : vector<1x32x32xbf16> to vector<32x32xbf16>
    %c0_58 = arith.constant 0 : index
    %c0_59 = arith.constant 0 : index
    %c0_60 = arith.constant 0 : index
    %140 = vector.load %arg18[%c0_58, %c0_59, %c0_60] : memref<1x1x32xf32, #tpu.memory_space<vmem>>, vector<1x1x32xf32>
    %141 = vector.shape_cast %140 : vector<1x1x32xf32> to vector<1x32xf32>
    %c0_61 = arith.constant 0 : index
    %c0_62 = arith.constant 0 : index
    %c0_63 = arith.constant 0 : index
    %142 = vector.load %arg19[%c0_61, %c0_62, %c0_63] : memref<1x32x64xbf16, #tpu.memory_space<vmem>>, vector<1x32x64xbf16>
    %143 = vector.shape_cast %142 : vector<1x32x64xbf16> to vector<32x64xbf16>
    %c0_64 = arith.constant 0 : index
    %c0_65 = arith.constant 0 : index
    %c0_66 = arith.constant 0 : index
    %144 = vector.load %arg20[%c0_64, %c0_65, %c0_66] : memref<1x1x64xf32, #tpu.memory_space<vmem>>, vector<1x1x64xf32>
    %145 = vector.shape_cast %144 : vector<1x1x64xf32> to vector<1x64xf32>
    %c0_67 = arith.constant 0 : index
    %c0_68 = arith.constant 0 : index
    %c0_69 = arith.constant 0 : index
    %146 = vector.load %arg21[%c0_67, %c0_68, %c0_69] : memref<1x32x32xbf16, #tpu.memory_space<vmem>>, vector<1x32x32xbf16>
    %147 = vector.shape_cast %146 : vector<1x32x32xbf16> to vector<32x32xbf16>
    %c0_70 = arith.constant 0 : index
    %c0_71 = arith.constant 0 : index
    %c0_72 = arith.constant 0 : index
    %148 = vector.load %arg22[%c0_70, %c0_71, %c0_72] : memref<1x1x32xf32, #tpu.memory_space<vmem>>, vector<1x1x32xf32>
    %149 = vector.shape_cast %148 : vector<1x1x32xf32> to vector<1x32xf32>
    %150 = arith.truncf %135 : vector<16x32xf32> to vector<16x32xbf16>
    %cst_73 = arith.constant dense<0.000000e+00> : vector<16x32xf32>
    %151 = tpu.matmul %150, %139, %cst_73 {dimension_numbers = #tpu.dot_dimension_numbers<[1], [0], [0], [1], [0, 0, 1, 1], [], []>} : vector<16x32xbf16>, vector<32x32xbf16>, vector<16x32xf32> -> vector<16x32xf32>
    %152 = vector.broadcast %141 : vector<1x32xf32> to vector<16x32xf32>
    %153 = arith.addf %151, %152 : vector<16x32xf32>
    %154 = arith.truncf %136 : vector<16x32xf32> to vector<16x32xbf16>
    %cst_74 = arith.constant dense<0.000000e+00> : vector<16x64xf32>
    %155 = tpu.matmul %154, %143, %cst_74 {dimension_numbers = #tpu.dot_dimension_numbers<[1], [0], [0], [1], [0, 0, 1, 1], [], []>} : vector<16x32xbf16>, vector<32x64xbf16>, vector<16x64xf32> -> vector<16x64xf32>
    %156 = vector.broadcast %145 : vector<1x64xf32> to vector<16x64xf32>
    %157 = arith.addf %155, %156 : vector<16x64xf32>
    %158 = vector.extract_strided_slice %157 {offsets = [0, 0], sizes = [16, 32], strides = [1, 1]} : vector<16x64xf32> to vector<16x32xf32>
    %159 = vector.extract_strided_slice %157 {offsets = [0, 32], sizes = [16, 32], strides = [1, 1]} : vector<16x64xf32> to vector<16x32xf32>
    %160 = vector.extract_strided_slice %153 {offsets = [0, 0], sizes = [16, 8], strides = [1, 1]} : vector<16x32xf32> to vector<16x8xf32>
    %161 = vector.extract_strided_slice %153 {offsets = [0, 8], sizes = [16, 8], strides = [1, 1]} : vector<16x32xf32> to vector<16x8xf32>
    %162 = vector.extract_strided_slice %153 {offsets = [0, 16], sizes = [16, 8], strides = [1, 1]} : vector<16x32xf32> to vector<16x8xf32>
    %163 = vector.extract_strided_slice %153 {offsets = [0, 24], sizes = [16, 8], strides = [1, 1]} : vector<16x32xf32> to vector<16x8xf32>
    %164 = vector.shape_cast %160 : vector<16x8xf32> to vector<1x16x8xf32>
    %165 = vector.shape_cast %161 : vector<16x8xf32> to vector<1x16x8xf32>
    %166 = vector.shape_cast %162 : vector<16x8xf32> to vector<1x16x8xf32>
    %167 = vector.shape_cast %163 : vector<16x8xf32> to vector<1x16x8xf32>
    %168 = tpu.concatenate %164, %165, %166, %167 in 0 : vector<1x16x8xf32>, vector<1x16x8xf32>, vector<1x16x8xf32>, vector<1x16x8xf32> -> vector<4x16x8xf32>
    %169 = arith.truncf %168 : vector<4x16x8xf32> to vector<4x16x8xbf16>
    %170 = vector.extract_strided_slice %158 {offsets = [0, 0], sizes = [16, 8], strides = [1, 1]} : vector<16x32xf32> to vector<16x8xf32>
    %171 = vector.extract_strided_slice %158 {offsets = [0, 8], sizes = [16, 8], strides = [1, 1]} : vector<16x32xf32> to vector<16x8xf32>
    %172 = vector.extract_strided_slice %158 {offsets = [0, 16], sizes = [16, 8], strides = [1, 1]} : vector<16x32xf32> to vector<16x8xf32>
    %173 = vector.extract_strided_slice %158 {offsets = [0, 24], sizes = [16, 8], strides = [1, 1]} : vector<16x32xf32> to vector<16x8xf32>
    %174 = vector.shape_cast %170 : vector<16x8xf32> to vector<1x16x8xf32>
    %175 = vector.shape_cast %171 : vector<16x8xf32> to vector<1x16x8xf32>
    %176 = vector.shape_cast %172 : vector<16x8xf32> to vector<1x16x8xf32>
    %177 = vector.shape_cast %173 : vector<16x8xf32> to vector<1x16x8xf32>
    %178 = tpu.concatenate %174, %175, %176, %177 in 0 : vector<1x16x8xf32>, vector<1x16x8xf32>, vector<1x16x8xf32>, vector<1x16x8xf32> -> vector<4x16x8xf32>
    %179 = arith.truncf %178 : vector<4x16x8xf32> to vector<4x16x8xbf16>
    %180 = vector.extract_strided_slice %159 {offsets = [0, 0], sizes = [16, 8], strides = [1, 1]} : vector<16x32xf32> to vector<16x8xf32>
    %181 = vector.extract_strided_slice %159 {offsets = [0, 8], sizes = [16, 8], strides = [1, 1]} : vector<16x32xf32> to vector<16x8xf32>
    %182 = vector.extract_strided_slice %159 {offsets = [0, 16], sizes = [16, 8], strides = [1, 1]} : vector<16x32xf32> to vector<16x8xf32>
    %183 = vector.extract_strided_slice %159 {offsets = [0, 24], sizes = [16, 8], strides = [1, 1]} : vector<16x32xf32> to vector<16x8xf32>
    %184 = vector.shape_cast %180 : vector<16x8xf32> to vector<1x16x8xf32>
    %185 = vector.shape_cast %181 : vector<16x8xf32> to vector<1x16x8xf32>
    %186 = vector.shape_cast %182 : vector<16x8xf32> to vector<1x16x8xf32>
    %187 = vector.shape_cast %183 : vector<16x8xf32> to vector<1x16x8xf32>
    %188 = tpu.concatenate %184, %185, %186, %187 in 0 : vector<1x16x8xf32>, vector<1x16x8xf32>, vector<1x16x8xf32>, vector<1x16x8xf32> -> vector<4x16x8xf32>
    %189 = arith.truncf %188 : vector<4x16x8xf32> to vector<4x16x8xbf16>
    "tpu.trace_start"() <{level = 10 : i32, message = "hqd,hkd->hqk"}> : () -> ()
    %cst_75 = arith.constant dense<0.000000e+00> : vector<4x16x16xf32>
    %190 = tpu.matmul %169, %179, %cst_75 {dimension_numbers = #tpu.dot_dimension_numbers<[2], [2], [1], [1], [0, 0, 0, 1, 1, 1], [0], [0]>} : vector<4x16x8xbf16>, vector<4x16x8xbf16>, vector<4x16x16xf32> -> vector<4x16x16xf32>
    "tpu.trace_stop"() : () -> ()
    %cst_76 = arith.constant 0.353553385 : f32
    %191 = vector.broadcast %cst_76 : f32 to vector<4x16x16xf32>
    %192 = arith.mulf %190, %191 : vector<4x16x16xf32>
    %193 = vector.shape_cast %137 : vector<16x16xf32> to vector<1x16x16xf32>
    %194 = vector.broadcast %193 : vector<1x16x16xf32> to vector<4x16x16xf32>
    %195 = arith.addf %192, %194 : vector<4x16x16xf32>
    %cst_77 = arith.constant dense<0xFF800000> : vector<4x16xf32>
    %196 = vector.multi_reduction <maximumf>, %195, %cst_77 [2] : vector<4x16x16xf32> to vector<4x16xf32>
    %197 = vector.shape_cast %196 : vector<4x16xf32> to vector<4x16x1xf32>
    %198 = vector.broadcast %197 : vector<4x16x1xf32> to vector<4x16x16xf32>
    %199 = arith.subf %195, %198 : vector<4x16x16xf32>
    %200 = math.exp %199 : vector<4x16x16xf32>
    %cst_78 = arith.constant dense<0.000000e+00> : vector<4x16xf32>
    %201 = vector.multi_reduction <add>, %200, %cst_78 [2] : vector<4x16x16xf32> to vector<4x16xf32>
    %202 = vector.shape_cast %201 : vector<4x16xf32> to vector<4x16x1xf32>
    %203 = vector.broadcast %202 : vector<4x16x1xf32> to vector<4x16x16xf32>
    %204 = arith.divf %200, %203 : vector<4x16x16xf32>
    %205 = arith.truncf %204 : vector<4x16x16xf32> to vector<4x16x16xbf16>
    "tpu.trace_start"() <{level = 10 : i32, message = "hqk,hkd->hqd"}> : () -> ()
    %cst_79 = arith.constant dense<0.000000e+00> : vector<4x16x8xf32>
    %206 = tpu.matmul %205, %189, %cst_79 {dimension_numbers = #tpu.dot_dimension_numbers<[2], [1], [1], [2], [0, 0, 0, 1, 1, 2], [0], [0]>} : vector<4x16x16xbf16>, vector<4x16x8xbf16>, vector<4x16x8xf32> -> vector<4x16x8xf32>
    "tpu.trace_stop"() : () -> ()
    %207 = vector.extract_strided_slice %206 {offsets = [0, 0, 0], sizes = [1, 16, 8], strides = [1, 1, 1]} : vector<4x16x8xf32> to vector<1x16x8xf32>
    %208 = vector.shape_cast %207 : vector<1x16x8xf32> to vector<16x8xf32>
    %209 = vector.extract_strided_slice %206 {offsets = [1, 0, 0], sizes = [1, 16, 8], strides = [1, 1, 1]} : vector<4x16x8xf32> to vector<1x16x8xf32>
    %210 = vector.shape_cast %209 : vector<1x16x8xf32> to vector<16x8xf32>
    %211 = vector.extract_strided_slice %206 {offsets = [2, 0, 0], sizes = [1, 16, 8], strides = [1, 1, 1]} : vector<4x16x8xf32> to vector<1x16x8xf32>
    %212 = vector.shape_cast %211 : vector<1x16x8xf32> to vector<16x8xf32>
    %213 = vector.extract_strided_slice %206 {offsets = [3, 0, 0], sizes = [1, 16, 8], strides = [1, 1, 1]} : vector<4x16x8xf32> to vector<1x16x8xf32>
    %214 = vector.shape_cast %213 : vector<1x16x8xf32> to vector<16x8xf32>
    %215 = tpu.concatenate %208, %210, %212, %214 in 1 : vector<16x8xf32>, vector<16x8xf32>, vector<16x8xf32>, vector<16x8xf32> -> vector<16x32xf32>
    %216 = arith.truncf %215 : vector<16x32xf32> to vector<16x32xbf16>
    %cst_80 = arith.constant dense<0.000000e+00> : vector<16x32xf32>
    %217 = tpu.matmul %216, %147, %cst_80 {dimension_numbers = #tpu.dot_dimension_numbers<[1], [0], [0], [1], [0, 0, 1, 1], [], []>} : vector<16x32xbf16>, vector<32x32xbf16>, vector<16x32xf32> -> vector<16x32xf32>
    %218 = vector.broadcast %149 : vector<1x32xf32> to vector<16x32xf32>
    %219 = arith.addf %217, %218 : vector<16x32xf32>
    %220 = arith.addf %111, %219 : vector<16x32xf32>
    %c0_81 = arith.constant 0 : index
    %c0_82 = arith.constant 0 : index
    %c0_83 = arith.constant 0 : index
    %221 = vector.load %arg23[%c0_81, %c0_82, %c0_83] : memref<1x1x32xf32, #tpu.memory_space<vmem>>, vector<1x1x32xf32>
    %222 = vector.shape_cast %221 : vector<1x1x32xf32> to vector<1x32xf32>
    %c0_84 = arith.constant 0 : index
    %c0_85 = arith.constant 0 : index
    %c0_86 = arith.constant 0 : index
    %223 = vector.load %arg24[%c0_84, %c0_85, %c0_86] : memref<1x1x32xf32, #tpu.memory_space<vmem>>, vector<1x1x32xf32>
    %224 = vector.shape_cast %223 : vector<1x1x32xf32> to vector<1x32xf32>
    %cst_87 = arith.constant dense<0.000000e+00> : vector<16xf32>
    %225 = vector.multi_reduction <add>, %220, %cst_87 [1] : vector<16x32xf32> to vector<16xf32>
    %226 = vector.shape_cast %225 : vector<16xf32> to vector<16x1xf32>
    %cst_88 = arith.constant 3.200000e+01 : f32
    %227 = vector.broadcast %cst_88 : f32 to vector<16x1xf32>
    %228 = arith.divf %226, %227 : vector<16x1xf32>
    %229 = vector.broadcast %228 : vector<16x1xf32> to vector<16x32xf32>
    %230 = arith.subf %220, %229 : vector<16x32xf32>
    %231 = arith.mulf %230, %230 : vector<16x32xf32>
    %cst_89 = arith.constant dense<0.000000e+00> : vector<16xf32>
    %232 = vector.multi_reduction <add>, %231, %cst_89 [1] : vector<16x32xf32> to vector<16xf32>
    %233 = vector.shape_cast %232 : vector<16xf32> to vector<16x1xf32>
    %cst_90 = arith.constant 0.0322580636 : f32
    %234 = vector.broadcast %cst_90 : f32 to vector<16x1xf32>
    %235 = arith.mulf %233, %234 : vector<16x1xf32>
    %236 = vector.broadcast %222 : vector<1x32xf32> to vector<16x32xf32>
    %237 = arith.mulf %236, %230 : vector<16x32xf32>
    %238 = math.sqrt %235 : vector<16x1xf32>
    %cst_91 = arith.constant 9.99999997E-7 : f32
    %239 = vector.broadcast %cst_91 : f32 to vector<16x1xf32>
    %240 = arith.addf %238, %239 : vector<16x1xf32>
    %241 = vector.broadcast %240 : vector<16x1xf32> to vector<16x32xf32>
    %242 = arith.divf %237, %241 : vector<16x32xf32>
    %243 = vector.broadcast %224 : vector<1x32xf32> to vector<16x32xf32>
    %244 = arith.addf %242, %243 : vector<16x32xf32>
    %245 = arith.truncf %244 : vector<16x32xf32> to vector<16x32xbf16>
    %c0_92 = arith.constant 0 : index
    %c0_93 = arith.constant 0 : index
    %c0_94 = arith.constant 0 : index
    %246 = vector.load %arg25[%c0_92, %c0_93, %c0_94] : memref<1x32x64xbf16, #tpu.memory_space<vmem>>, vector<1x32x64xbf16>
    %247 = vector.shape_cast %246 : vector<1x32x64xbf16> to vector<32x64xbf16>
    %cst_95 = arith.constant dense<0.000000e+00> : vector<16x64xf32>
    %248 = tpu.matmul %245, %247, %cst_95 {dimension_numbers = #tpu.dot_dimension_numbers<[1], [0], [0], [1], [0, 0, 1, 1], [], []>} : vector<16x32xbf16>, vector<32x64xbf16>, vector<16x64xf32> -> vector<16x64xf32>
    %c0_96 = arith.constant 0 : index
    %c0_97 = arith.constant 0 : index
    %c0_98 = arith.constant 0 : index
    %249 = vector.load %arg26[%c0_96, %c0_97, %c0_98] : memref<1x1x64xf32, #tpu.memory_space<vmem>>, vector<1x1x64xf32>
    %250 = vector.shape_cast %249 : vector<1x1x64xf32> to vector<1x64xf32>
    %251 = vector.broadcast %250 : vector<1x64xf32> to vector<16x64xf32>
    %252 = arith.addf %248, %251 : vector<16x64xf32>
    %cst_99 = arith.constant 0.000000e+00 : f32
    %253 = vector.broadcast %cst_99 : f32 to vector<16x64xf32>
    %254 = arith.maximumf %252, %253 : vector<16x64xf32>
    %255 = arith.truncf %254 : vector<16x64xf32> to vector<16x64xbf16>
    %c0_100 = arith.constant 0 : index
    %c0_101 = arith.constant 0 : index
    %c0_102 = arith.constant 0 : index
    %256 = vector.load %arg27[%c0_100, %c0_101, %c0_102] : memref<1x64x32xbf16, #tpu.memory_space<vmem>>, vector<1x64x32xbf16>
    %257 = vector.shape_cast %256 : vector<1x64x32xbf16> to vector<64x32xbf16>
    %cst_103 = arith.constant dense<0.000000e+00> : vector<16x32xf32>
    %258 = tpu.matmul %255, %257, %cst_103 {dimension_numbers = #tpu.dot_dimension_numbers<[1], [0], [0], [1], [0, 0, 1, 1], [], []>} : vector<16x64xbf16>, vector<64x32xbf16>, vector<16x32xf32> -> vector<16x32xf32>
    %c0_104 = arith.constant 0 : index
    %c0_105 = arith.constant 0 : index
    %c0_106 = arith.constant 0 : index
    %259 = vector.load %arg28[%c0_104, %c0_105, %c0_106] : memref<1x1x32xf32, #tpu.memory_space<vmem>>, vector<1x1x32xf32>
    %260 = vector.shape_cast %259 : vector<1x1x32xf32> to vector<1x32xf32>
    %261 = vector.broadcast %260 : vector<1x32xf32> to vector<16x32xf32>
    %262 = arith.addf %258, %261 : vector<16x32xf32>
    %263 = arith.addf %220, %262 : vector<16x32xf32>
    %c0_107 = arith.constant 0 : index
    %c0_108 = arith.constant 0 : index
    %264 = vector.load %arg30[%c0_107, %c0_108] : memref<16x32xf32, #tpu.memory_space<vmem>>, vector<16x32xf32>
    tpu.vector_store %arg30[%c0_107, %c0_108], %263 {strides = array<i32>} : memref<16x32xf32, #tpu.memory_space<vmem>>, vector<16x32xf32>,
    %c1_i32 = arith.constant 1 : i32
    %265 = arith.cmpi eq, %arg0, %c1_i32 : i32
    %266 = arith.extui %265 : i1 to i32
    %c0_i32_109 = arith.constant 0 : i32
    %267 = arith.cmpi ne, %266, %c0_i32_109 : i32
    scf.if %267 {
      %c0_110 = arith.constant 0 : index
      %c0_111 = arith.constant 0 : index
      %268 = vector.load %arg5[%c0_110, %c0_111] : memref<1x32xf32, #tpu.memory_space<vmem>>, vector<1x32xf32>
      %c0_112 = arith.constant 0 : index
      %c0_113 = arith.constant 0 : index
      %269 = vector.load %arg6[%c0_112, %c0_113] : memref<1x32xf32, #tpu.memory_space<vmem>>, vector<1x32xf32>
      %cst_114 = arith.constant dense<0.000000e+00> : vector<16xf32>
      %270 = vector.multi_reduction <add>, %263, %cst_114 [1] : vector<16x32xf32> to vector<16xf32>
      %271 = vector.shape_cast %270 : vector<16xf32> to vector<16x1xf32>
      %cst_115 = arith.constant 3.200000e+01 : f32
      %272 = vector.broadcast %cst_115 : f32 to vector<16x1xf32>
      %273 = arith.divf %271, %272 : vector<16x1xf32>
      %274 = vector.broadcast %273 : vector<16x1xf32> to vector<16x32xf32>
      %275 = arith.subf %263, %274 : vector<16x32xf32>
      %276 = arith.mulf %275, %275 : vector<16x32xf32>
      %cst_116 = arith.constant dense<0.000000e+00> : vector<16xf32>
      %277 = vector.multi_reduction <add>, %276, %cst_116 [1] : vector<16x32xf32> to vector<16xf32>
      %278 = vector.shape_cast %277 : vector<16xf32> to vector<16x1xf32>
      %cst_117 = arith.constant 0.0322580636 : f32
      %279 = vector.broadcast %cst_117 : f32 to vector<16x1xf32>
      %280 = arith.mulf %278, %279 : vector<16x1xf32>
      %281 = vector.broadcast %268 : vector<1x32xf32> to vector<16x32xf32>
      %282 = arith.mulf %281, %275 : vector<16x32xf32>
      %283 = math.sqrt %280 : vector<16x1xf32>
      %cst_118 = arith.constant 9.99999997E-7 : f32
      %284 = vector.broadcast %cst_118 : f32 to vector<16x1xf32>
      %285 = arith.addf %283, %284 : vector<16x1xf32>
      %286 = vector.broadcast %285 : vector<16x1xf32> to vector<16x32xf32>
      %287 = arith.divf %282, %286 : vector<16x32xf32>
      %288 = vector.broadcast %269 : vector<1x32xf32> to vector<16x32xf32>
      %289 = arith.addf %287, %288 : vector<16x32xf32>
      %c0_119 = arith.constant 0 : index
      %c0_120 = arith.constant 0 : index
      %290 = vector.load %arg29[%c0_119, %c0_120] : memref<16x32xf32, #tpu.memory_space<vmem>>, vector<16x32xf32>
      tpu.vector_store %arg29[%c0_119, %c0_120], %289 {strides = array<i32>} : memref<16x32xf32, #tpu.memory_space<vmem>>, vector<16x32xf32>,
    } else {
    }
    return
  }
  func.func @transform_0(%arg0: i32) -> (i32, i32) {
    %c0_i32 = arith.constant 0 : i32
    %c0_i32_0 = arith.constant 0 : i32
    %c0_i32_1 = arith.constant 0 : i32
    return %c0_i32, %c0_i32_0 : i32, i32
  }
  func.func @transform_1(%arg0: i32) -> (i32, i32) {
    %c0_i32 = arith.constant 0 : i32
    %c0_i32_0 = arith.constant 0 : i32
    %c0_i32_1 = arith.constant 0 : i32
    return %c0_i32, %c0_i32_0 : i32, i32
  }
  func.func @transform_2(%arg0: i32) -> (i32, i32) {
    %c0_i32 = arith.constant 0 : i32
    %c0_i32_0 = arith.constant 0 : i32
    %c0_i32_1 = arith.constant 0 : i32
    return %c0_i32, %c0_i32_0 : i32, i32
  }
  func.func @transform_3(%arg0: i32) -> (i32, i32) {
    %c0_i32 = arith.constant 0 : i32
    %c0_i32_0 = arith.constant 0 : i32
    %c0_i32_1 = arith.constant 0 : i32
    return %c0_i32, %c0_i32_0 : i32, i32
  }
  func.func @transform_4(%arg0: i32) -> (i32, i32) {
    %c0_i32 = arith.constant 0 : i32
    %c0_i32_0 = arith.constant 0 : i32
    %c0_i32_1 = arith.constant 0 : i32
    return %c0_i32, %c0_i32_0 : i32, i32
  }
  func.func @transform_5(%arg0: i32) -> (i32, i32) {
    %c0_i32 = arith.constant 0 : i32
    %c0_i32_0 = arith.constant 0 : i32
    %c0_i32_1 = arith.constant 0 : i32
    return %c0_i32, %c0_i32_0 : i32, i32
  }
  func.func @transform_6(%arg0: i32) -> (i32, i32, i32) {
    %c0_i32 = arith.constant 0 : i32
    %c0_i32_0 = arith.constant 0 : i32
    %c0_i32_1 = arith.constant 0 : i32
    return %arg0, %c0_i32, %c0_i32_0 : i32, i32, i32
  }
  func.func @transform_7(%arg0: i32) -> (i32, i32, i32) {
    %c0_i32 = arith.constant 0 : i32
    %c0_i32_0 = arith.constant 0 : i32
    %c0_i32_1 = arith.constant 0 : i32
    return %arg0, %c0_i32, %c0_i32_0 : i32, i32, i32
  }
  func.func @transform_8(%arg0: i32) -> (i32, i32, i32) {
    %c0_i32 = arith.constant 0 : i32
    %c0_i32_0 = arith.constant 0 : i32
    %c0_i32_1 = arith.constant 0 : i32
    return %arg0, %c0_i32, %c0_i32_0 : i32, i32, i32
  }
  func.func @transform_9(%arg0: i32) -> (i32, i32, i32) {
    %c0_i32 = arith.constant 0 : i32
    %c0_i32_0 = arith.constant 0 : i32
    %c0_i32_1 = arith.constant 0 : i32
    return %arg0, %c0_i32, %c0_i32_0 : i32, i32, i32
  }
  func.func @transform_10(%arg0: i32) -> (i32, i32, i32) {
    %c0_i32 = arith.constant 0 : i32
    %c0_i32_0 = arith.constant 0 : i32
    %c0_i32_1 = arith.constant 0 : i32
    return %arg0, %c0_i32, %c0_i32_0 : i32, i32, i32
  }
  func.func @transform_11(%arg0: i32) -> (i32, i32, i32) {
    %c0_i32 = arith.constant 0 : i32
    %c0_i32_0 = arith.constant 0 : i32
    %c0_i32_1 = arith.constant 0 : i32
    return %arg0, %c0_i32, %c0_i32_0 : i32, i32, i32
  }
  func.func @transform_12(%arg0: i32) -> (i32, i32, i32) {
    %c0_i32 = arith.constant 0 : i32
    %c0_i32_0 = arith.constant 0 : i32
    %c0_i32_1 = arith.constant 0 : i32
    return %arg0, %c0_i32, %c0_i32_0 : i32, i32, i32
  }
  func.func @transform_13(%arg0: i32) -> (i32, i32, i32) {
    %c0_i32 = arith.constant 0 : i32
    %c0_i32_0 = arith.constant 0 : i32
    %c0_i32_1 = arith.constant 0 : i32
    return %arg0, %c0_i32, %c0_i32_0 : i32, i32, i32
  }
  func.func @transform_14(%arg0: i32) -> (i32, i32, i32) {
    %c0_i32 = arith.constant 0 : i32
    %c0_i32_0 = arith.constant 0 : i32
    %c0_i32_1 = arith.constant 0 : i32
    return %arg0, %c0_i32, %c0_i32_0 : i32, i32, i32
  }
  func.func @transform_15(%arg0: i32) -> (i32, i32, i32) {
    %c0_i32 = arith.constant 0 : i32
    %c0_i32_0 = arith.constant 0 : i32
    %c0_i32_1 = arith.constant 0 : i32
    return %arg0, %c0_i32, %c0_i32_0 : i32, i32, i32
  }
  func.func @transform_16(%arg0: i32) -> (i32, i32, i32) {
    %c0_i32 = arith.constant 0 : i32
    %c0_i32_0 = arith.constant 0 : i32
    %c0_i32_1 = arith.constant 0 : i32
    return %arg0, %c0_i32, %c0_i32_0 : i32, i32, i32
  }
  func.func @transform_17(%arg0: i32) -> (i32, i32, i32) {
    %c0_i32 = arith.constant 0 : i32
    %c0_i32_0 = arith.constant 0 : i32
    %c0_i32_1 = arith.constant 0 : i32
    return %arg0, %c0_i32, %c0_i32_0 : i32, i32, i32
  }
  func.func @transform_18(%arg0: i32) -> (i32, i32, i32) {
    %c0_i32 = arith.constant 0 : i32
    %c0_i32_0 = arith.constant 0 : i32
    %c0_i32_1 = arith.constant 0 : i32
    return %arg0, %c0_i32, %c0_i32_0 : i32, i32, i32
  }
  func.func @transform_19(%arg0: i32) -> (i32, i32, i32) {
    %c0_i32 = arith.constant 0 : i32
    %c0_i32_0 = arith.constant 0 : i32
    %c0_i32_1 = arith.constant 0 : i32
    return %arg0, %c0_i32, %c0_i32_0 : i32, i32, i32
  }
  func.func @transform_20(%arg0: i32) -> (i32, i32, i32) {
    %c0_i32 = arith.constant 0 : i32
    %c0_i32_0 = arith.constant 0 : i32
    %c0_i32_1 = arith.constant 0 : i32
    return %arg0, %c0_i32, %c0_i32_0 : i32, i32, i32
  }
  func.func @transform_21(%arg0: i32) -> (i32, i32, i32) {
    %c0_i32 = arith.constant 0 : i32
    %c0_i32_0 = arith.constant 0 : i32
    %c0_i32_1 = arith.constant 0 : i32
    return %arg0, %c0_i32, %c0_i32_0 : i32, i32, i32
  }
  func.func @transform_22(%arg0: i32) -> (i32, i32, i32) {
    %c0_i32 = arith.constant 0 : i32
    %c0_i32_0 = arith.constant 0 : i32
    %c0_i32_1 = arith.constant 0 : i32
    return %arg0, %c0_i32, %c0_i32_0 : i32, i32, i32
  }
  func.func @transform_23(%arg0: i32) -> (i32, i32, i32) {
    %c0_i32 = arith.constant 0 : i32
    %c0_i32_0 = arith.constant 0 : i32
    %c0_i32_1 = arith.constant 0 : i32
    return %arg0, %c0_i32, %c0_i32_0 : i32, i32, i32
  }
  func.func @transform_24(%arg0: i32) -> (i32, i32, i32) {
    %c0_i32 = arith.constant 0 : i32
    %c0_i32_0 = arith.constant 0 : i32
    %c0_i32_1 = arith.constant 0 : i32
    return %arg0, %c0_i32, %c0_i32_0 : i32, i32, i32
  }
  func.func @transform_25(%arg0: i32) -> (i32, i32, i32) {
    %c0_i32 = arith.constant 0 : i32
    %c0_i32_0 = arith.constant 0 : i32
    %c0_i32_1 = arith.constant 0 : i32
    return %arg0, %c0_i32, %c0_i32_0 : i32, i32, i32
  }
  func.func @transform_26(%arg0: i32) -> (i32, i32, i32) {
    %c0_i32 = arith.constant 0 : i32
    %c0_i32_0 = arith.constant 0 : i32
    %c0_i32_1 = arith.constant 0 : i32
    return %arg0, %c0_i32, %c0_i32_0 : i32, i32, i32
  }
  func.func @transform_27(%arg0: i32) -> (i32, i32, i32) {
    %c0_i32 = arith.constant 0 : i32
    %c0_i32_0 = arith.constant 0 : i32
    %c0_i32_1 = arith.constant 0 : i32
    return %arg0, %c0_i32, %c0_i32_0 : i32, i32, i32
  }
  func.func @transform_28(%arg0: i32) -> (i32, i32) {
    %c0_i32 = arith.constant 0 : i32
    %c0_i32_0 = arith.constant 0 : i32
    %c0_i32_1 = arith.constant 0 : i32
    return %c0_i32, %c0_i32_0 : i32, i32
  }
}

</mosaic_0001>

<llo_original>
// kernel: decoder_forward.1
$region0: #{decoder_forward.1}
  #allocation0 [shape = 'u32[]', space=smem, size = 0x4, offset = 0x4, fixed_abs, tag = 'smem constant byte address 0x4 - core index']
  #allocation1 [shape = 'u32[144,128]{1,0:T(1,128)}', space=vmem, size = 0x12000, scoped, tag = 'internal scratch']
  #allocation2 [shape = 'f32[16,32]{1,0:T(8,128)}', space=vmem, size = 0x2000, scoped, tag = 'scratch operand']
  %s0 = inlined_call_operand.vmem [shape: f32[16,32], index: 0, kind: input, shape index: {}]
  %s1 = inlined_call_operand.vmem [shape: f32[16,32], index: 1, kind: input, shape index: {}]
  %s2 = inlined_call_operand.vmem [shape: f32[16,16], index: 2, kind: input, shape index: {}]
  %s3 = inlined_call_operand.vmem [shape: f32[16,16], index: 3, kind: input, shape index: {}]
  %s4 = inlined_call_operand.vmem [shape: f32[1,32], index: 4, kind: input, shape index: {}]
  %s5 = inlined_call_operand.vmem [shape: f32[1,32], index: 5, kind: input, shape index: {}]
  %s6 = inlined_call_operand.vmem [shape: f32[2,1,32], index: 6, kind: input, shape index: {}]
  %s7 = inlined_call_operand.vmem [shape: f32[2,1,32], index: 7, kind: input, shape index: {}]
  %s8 = inlined_call_operand.vmem [shape: bf16[2,32,32], index: 8, kind: input, shape index: {}]
  %s9 = inlined_call_operand.vmem [shape: f32[2,1,32], index: 9, kind: input, shape index: {}]
  %s10 = inlined_call_operand.vmem [shape: bf16[2,32,64], index: 10, kind: input, shape index: {}]
  %s11 = inlined_call_operand.vmem [shape: f32[2,1,64], index: 11, kind: input, shape index: {}]
  %s12 = inlined_call_operand.vmem [shape: bf16[2,32,32], index: 12, kind: input, shape index: {}]
  %s13 = inlined_call_operand.vmem [shape: f32[2,1,32], index: 13, kind: input, shape index: {}]
  %s14 = inlined_call_operand.vmem [shape: f32[2,1,32], index: 14, kind: input, shape index: {}]
  %s15 = inlined_call_operand.vmem [shape: f32[2,1,32], index: 15, kind: input, shape index: {}]
  %s16 = inlined_call_operand.vmem [shape: bf16[2,32,32], index: 16, kind: input, shape index: {}]
  %s17 = inlined_call_operand.vmem [shape: f32[2,1,32], index: 17, kind: input, shape index: {}]
  %s18 = inlined_call_operand.vmem [shape: bf16[2,32,64], index: 18, kind: input, shape index: {}]
  %s19 = inlined_call_operand.vmem [shape: f32[2,1,64], index: 19, kind: input, shape index: {}]
  %s20 = inlined_call_operand.vmem [shape: bf16[2,32,32], index: 20, kind: input, shape index: {}]
  %s21 = inlined_call_operand.vmem [shape: f32[2,1,32], index: 21, kind: input, shape index: {}]
  %s22 = inlined_call_operand.vmem [shape: f32[2,1,32], index: 22, kind: input, shape index: {}]
  %s23 = inlined_call_operand.vmem [shape: f32[2,1,32], index: 23, kind: input, shape index: {}]
  %s24 = inlined_call_operand.vmem [shape: bf16[2,32,64], index: 24, kind: input, shape index: {}]
  %s25 = inlined_call_operand.vmem [shape: f32[2,1,64], index: 25, kind: input, shape index: {}]
  %s26 = inlined_call_operand.vmem [shape: bf16[2,64,32], index: 26, kind: input, shape index: {}]
  %s27 = inlined_call_operand.vmem [shape: f32[2,1,32], index: 27, kind: input, shape index: {}]
  %s28 = inlined_call_operand.hbm [shape: f32[16,32], index: 28, kind: output, shape index: {}]
  %s29 = sld [smem:[#allocation0]]
  $region153: #{decoder_forward.1} parent=0
    _
  %s31 = ssub.s32 1, %s29
  %s32 = scalar_select 0, %s31, %s29
  $region1: #{decoder_forward.1} parent=0
    #allocation3 [shape = 'u8[8192]{0}', space=vmem, size = 0x2000, scoped, tag = 'output window, operand 0, single buffered']
    #allocation4 [shape = 's32[2]{0}', space=sflag, size = 0x8, scoped, tag = 'scoped memory for decoder_forward.1']
    %33 = vsyncpa [#allocation4], 0
    loop: start=0, step=1, limit=4
    $region2: #{decoder_forward.1} parent=1 // loop_pre_header
      _
    $region3: #{decoder_forward.1} parent=1 // loop_header
      %s35 = sphi 0, %s39
      %p36 = scmp.ge.s32.totalorder %s35, 4
      %s43 = sphi 0, %s43
      %s45 = sphi 0, %s43
      %s46 = sphi 0, %s45
      %s60 = sphi 0, %s46
      %s64 = sphi 0, %s64
      %s66 = sphi 0, %s64
      %s67 = sphi 0, %s66
      %s81 = sphi 0, %s67
      %s85 = sphi 0, %s85
      %s87 = sphi 0, %s85
      %s88 = sphi 0, %s87
      %s102 = sphi 0, %s88
      %s106 = sphi 0, %s106
      %s108 = sphi 0, %s106
      %s109 = sphi 0, %s108
      %s123 = sphi 0, %s109
      %s127 = sphi 0, %s127
      %s129 = sphi 0, %s127
      %s130 = sphi 0, %s129
      %s144 = sphi 0, %s130
      %s148 = sphi 0, %s148
      %s150 = sphi 0, %s148
      %s151 = sphi 0, %s150
      %s165 = sphi 0, %s151
      %s171 = sphi 0, %s173
      %s174 = sphi 0, %s171
      %s175 = sphi 0, %s174
      %s191 = sphi 0, %s175
      %s197 = sphi 0, %s199
      %s200 = sphi 0, %s197
      %s201 = sphi 0, %s200
      %s217 = sphi 0, %s201
      %s223 = sphi 0, %s225
      %s226 = sphi 0, %s223
      %s227 = sphi 0, %s226
      %s243 = sphi 0, %s227
      %s249 = sphi 0, %s251
      %s252 = sphi 0, %s249
      %s253 = sphi 0, %s252
      %s269 = sphi 0, %s253
      %s275 = sphi 0, %s277
      %s278 = sphi 0, %s275
      %s279 = sphi 0, %s278
      %s295 = sphi 0, %s279
      %s301 = sphi 0, %s303
      %s304 = sphi 0, %s301
      %s305 = sphi 0, %s304
      %s321 = sphi 0, %s305
      %s327 = sphi 0, %s329
      %s330 = sphi 0, %s327
      %s331 = sphi 0, %s330
      %s347 = sphi 0, %s331
      %s353 = sphi 0, %s355
      %s356 = sphi 0, %s353
      %s357 = sphi 0, %s356
      %s373 = sphi 0, %s357
      %s379 = sphi 0, %s381
      %s382 = sphi 0, %s379
      %s383 = sphi 0, %s382
      %s399 = sphi 0, %s383
      %s405 = sphi 0, %s407
      %s408 = sphi 0, %s405
      %s409 = sphi 0, %s408
      %s425 = sphi 0, %s409
      %s431 = sphi 0, %s433
      %s434 = sphi 0, %s431
      %s435 = sphi 0, %s434
      %s451 = sphi 0, %s435
      %s457 = sphi 0, %s459
      %s460 = sphi 0, %s457
      %s461 = sphi 0, %s460
      %s477 = sphi 0, %s461
      %s483 = sphi 0, %s485
      %s486 = sphi 0, %s483
      %s487 = sphi 0, %s486
      %s503 = sphi 0, %s487
      %s509 = sphi 0, %s511
      %s512 = sphi 0, %s509
      %s513 = sphi 0, %s512
      %s529 = sphi 0, %s513
      %s535 = sphi 0, %s537
      %s538 = sphi 0, %s535
      %s539 = sphi 0, %s538
      %s555 = sphi 0, %s539
      %s561 = sphi 0, %s563
      %s564 = sphi 0, %s561
      %s565 = sphi 0, %s564
      %s581 = sphi 0, %s565
      %s587 = sphi 0, %s589
      %s590 = sphi 0, %s587
      %s591 = sphi 0, %s590
      %s607 = sphi 0, %s591
      %s613 = sphi 0, %s615
      %s616 = sphi 0, %s613
      %s617 = sphi 0, %s616
      %s633 = sphi 0, %s617
      %s639 = sphi 0, %s641
      %s642 = sphi 0, %s639
      %s643 = sphi 0, %s642
      %s659 = sphi 0, %s643
      %s665 = sphi 0, %s667
      %s668 = sphi 0, %s665
      %s669 = sphi 0, %s668
      %s685 = sphi 0, %s669
      %s691 = sphi 0, %s693
      %s694 = sphi 0, %s691
      %s695 = sphi 0, %s694
      %s711 = sphi 0, %s695
      %s717 = sphi 0, %s719
      %s720 = sphi 0, %s717
      %s721 = sphi 0, %s720
      %s737 = sphi 0, %s721
      %s741 = sphi 0, %s741
      %s743 = sphi 0, %s741
      %s744 = sphi 0, %s743
      %s758 = sphi 0, %s744
    $region4: #{decoder_forward.1} parent=1 // loop_header_branch
      %38 = sbr.rel (%p36) target = $region8
    $region5: #{decoder_forward.1} parent=1 // loop_body
      %s40 = ssub.s32 %s35, 1
      %s41 = ssub.s32 %s35, 2
      %s42 = sadd.s32 %s35, 1
      %s44 = sadd.s32 %s43, 1
      %p47 = scmp.eq.s32.totalorder %s35, 1
      %p48 = scmp.ne.s32.totalorder %s43, %s45
      %p49 = scmp.eq.s32.totalorder %s35, 0
      %p50 = por %p48, %p49
      %p51 = scmp.ne.s32.totalorder %s43, %s45
      %p52 = scmp.eq.s32.totalorder %s40, 1
      %p53 = por %p51, %p52
      %p54 = scmp.ne.s32.totalorder %s45, %s46
      %p55 = scmp.eq.s32.totalorder %s40, 0
      %p56 = por %p54, %p55
      %p57 = scmp.ne.s32.totalorder %s45, %s46
      %p58 = scmp.eq.s32.totalorder %s41, 1
      %p59 = por %p57, %p58
      %p61 = scmp.ne.s32.totalorder %s46, %s60
      %p62 = scmp.eq.s32.totalorder %s41, 0
      %p63 = por %p61, %p62
      %s65 = sadd.s32 %s64, 1
      %p68 = scmp.eq.s32.totalorder %s35, 1
      %p69 = scmp.ne.s32.totalorder %s64, %s66
      %p70 = scmp.eq.s32.totalorder %s35, 0
      %p71 = por %p69, %p70
      %p72 = scmp.ne.s32.totalorder %s64, %s66
      %p73 = scmp.eq.s32.totalorder %s40, 1
      %p74 = por %p72, %p73
      %p75 = scmp.ne.s32.totalorder %s66, %s67
      %p76 = scmp.eq.s32.totalorder %s40, 0
      %p77 = por %p75, %p76
      %p78 = scmp.ne.s32.totalorder %s66, %s67
      %p79 = scmp.eq.s32.totalorder %s41, 1
      %p80 = por %p78, %p79
      %p82 = scmp.ne.s32.totalorder %s67, %s81
      %p83 = scmp.eq.s32.totalorder %s41, 0
      %p84 = por %p82, %p83
      %s86 = sadd.s32 %s85, 1
      %p89 = scmp.eq.s32.totalorder %s35, 1
      %p90 = scmp.ne.s32.totalorder %s85, %s87
      %p91 = scmp.eq.s32.totalorder %s35, 0
      %p92 = por %p90, %p91
      %p93 = scmp.ne.s32.totalorder %s85, %s87
      %p94 = scmp.eq.s32.totalorder %s40, 1
      %p95 = por %p93, %p94
      %p96 = scmp.ne.s32.totalorder %s87, %s88
      %p97 = scmp.eq.s32.totalorder %s40, 0
      %p98 = por %p96, %p97
      %p99 = scmp.ne.s32.totalorder %s87, %s88
      %p100 = scmp.eq.s32.totalorder %s41, 1
      %p101 = por %p99, %p100
      %p103 = scmp.ne.s32.totalorder %s88, %s102
      %p104 = scmp.eq.s32.totalorder %s41, 0
      %p105 = por %p103, %p104
      %s107 = sadd.s32 %s106, 1
      %p110 = scmp.eq.s32.totalorder %s35, 1
      %p111 = scmp.ne.s32.totalorder %s106, %s108
      %p112 = scmp.eq.s32.totalorder %s35, 0
      %p113 = por %p111, %p112
      %p114 = scmp.ne.s32.totalorder %s106, %s108
      %p115 = scmp.eq.s32.totalorder %s40, 1
      %p116 = por %p114, %p115
      %p117 = scmp.ne.s32.totalorder %s108, %s109
      %p118 = scmp.eq.s32.totalorder %s40, 0
      %p119 = por %p117, %p118
      %p120 = scmp.ne.s32.totalorder %s108, %s109
      %p121 = scmp.eq.s32.totalorder %s41, 1
      %p122 = por %p120, %p121
      %p124 = scmp.ne.s32.totalorder %s109, %s123
      %p125 = scmp.eq.s32.totalorder %s41, 0
      %p126 = por %p124, %p125
      %s128 = sadd.s32 %s127, 1
      %p131 = scmp.eq.s32.totalorder %s35, 1
      %p132 = scmp.ne.s32.totalorder %s127, %s129
      %p133 = scmp.eq.s32.totalorder %s35, 0
      %p134 = por %p132, %p133
      %p135 = scmp.ne.s32.totalorder %s127, %s129
      %p136 = scmp.eq.s32.totalorder %s40, 1
      %p137 = por %p135, %p136
      %p138 = scmp.ne.s32.totalorder %s129, %s130
      %p139 = scmp.eq.s32.totalorder %s40, 0
      %p140 = por %p138, %p139
      %p141 = scmp.ne.s32.totalorder %s129, %s130
      %p142 = scmp.eq.s32.totalorder %s41, 1
      %p143 = por %p141, %p142
      %p145 = scmp.ne.s32.totalorder %s130, %s144
      %p146 = scmp.eq.s32.totalorder %s41, 0
      %p147 = por %p145, %p146
      %s149 = sadd.s32 %s148, 1
      %p152 = scmp.eq.s32.totalorder %s35, 1
      %p153 = scmp.ne.s32.totalorder %s148, %s150
      %p154 = scmp.eq.s32.totalorder %s35, 0
      %p155 = por %p153, %p154
      %p156 = scmp.ne.s32.totalorder %s148, %s150
      %p157 = scmp.eq.s32.totalorder %s40, 1
      %p158 = por %p156, %p157
      %p159 = scmp.ne.s32.totalorder %s150, %s151
      %p160 = scmp.eq.s32.totalorder %s40, 0
      %p161 = por %p159, %p160
      %p162 = scmp.ne.s32.totalorder %s150, %s151
      %p163 = scmp.eq.s32.totalorder %s41, 1
      %p164 = por %p162, %p163
      %p166 = scmp.ne.s32.totalorder %s151, %s165
      %p167 = scmp.eq.s32.totalorder %s41, 0
      %p168 = por %p166, %p167
      %s169 = ssub.s32 %s35, %s42
      %p170 = scmp.eq.s32.totalorder %s169, 0
      %s172 = sadd.s32 %s171, 1
      %s173 = scalar_select %p170, %s171, %s172
      %p176 = pneg %p170
      %p177 = scmp.eq.s32.totalorder %s35, 1
      %p178 = por %p176, %p177
      %p179 = scmp.ne.s32.totalorder %s171, %s174
      %p180 = scmp.eq.s32.totalorder %s35, 0
      %p181 = por %p179, %p180
      %p182 = scmp.ne.s32.totalorder %s171, %s174
      %p183 = scmp.eq.s32.totalorder %s40, 1
      %p184 = por %p182, %p183
      %p185 = scmp.ne.s32.totalorder %s174, %s175
      %p186 = scmp.eq.s32.totalorder %s40, 0
      %p187 = por %p185, %p186
      %p188 = scmp.ne.s32.totalorder %s174, %s175
      %p189 = scmp.eq.s32.totalorder %s41, 1
      %p190 = por %p188, %p189
      %p192 = scmp.ne.s32.totalorder %s175, %s191
      %p193 = scmp.eq.s32.totalorder %s41, 0
      %p194 = por %p192, %p193
      %s195 = ssub.s32 %s35, %s42
      %p196 = scmp.eq.s32.totalorder %s195, 0
      %s198 = sadd.s32 %s197, 1
      %s199 = scalar_select %p196, %s197, %s198
      %p202 = pneg %p196
      %p203 = scmp.eq.s32.totalorder %s35, 1
      %p204 = por %p202, %p203
      %p205 = scmp.ne.s32.totalorder %s197, %s200
      %p206 = scmp.eq.s32.totalorder %s35, 0
      %p207 = por %p205, %p206
      %p208 = scmp.ne.s32.totalorder %s197, %s200
      %p209 = scmp.eq.s32.totalorder %s40, 1
      %p210 = por %p208, %p209
      %p211 = scmp.ne.s32.totalorder %s200, %s201
      %p212 = scmp.eq.s32.totalorder %s40, 0
      %p213 = por %p211, %p212
      %p214 = scmp.ne.s32.totalorder %s200, %s201
      %p215 = scmp.eq.s32.totalorder %s41, 1
      %p216 = por %p214, %p215
      %p218 = scmp.ne.s32.totalorder %s201, %s217
      %p219 = scmp.eq.s32.totalorder %s41, 0
      %p220 = por %p218, %p219
      %s221 = ssub.s32 %s35, %s42
      %p222 = scmp.eq.s32.totalorder %s221, 0
      %s224 = sadd.s32 %s223, 1
      %s225 = scalar_select %p222, %s223, %s224
      %p228 = pneg %p222
      %p229 = scmp.eq.s32.totalorder %s35, 1
      %p230 = por %p228, %p229
      %p231 = scmp.ne.s32.totalorder %s223, %s226
      %p232 = scmp.eq.s32.totalorder %s35, 0
      %p233 = por %p231, %p232
      %p234 = scmp.ne.s32.totalorder %s223, %s226
      %p235 = scmp.eq.s32.totalorder %s40, 1
      %p236 = por %p234, %p235
      %p237 = scmp.ne.s32.totalorder %s226, %s227
      %p238 = scmp.eq.s32.totalorder %s40, 0
      %p239 = por %p237, %p238
      %p240 = scmp.ne.s32.totalorder %s226, %s227
      %p241 = scmp.eq.s32.totalorder %s41, 1
      %p242 = por %p240, %p241
      %p244 = scmp.ne.s32.totalorder %s227, %s243
      %p245 = scmp.eq.s32.totalorder %s41, 0
      %p246 = por %p244, %p245
      %s247 = ssub.s32 %s35, %s42
      %p248 = scmp.eq.s32.totalorder %s247, 0
      %s250 = sadd.s32 %s249, 1
      %s251 = scalar_select %p248, %s249, %s250
      %p254 = pneg %p248
      %p255 = scmp.eq.s32.totalorder %s35, 1
      %p256 = por %p254, %p255
      %p257 = scmp.ne.s32.totalorder %s249, %s252
      %p258 = scmp.eq.s32.totalorder %s35, 0
      %p259 = por %p257, %p258
      %p260 = scmp.ne.s32.totalorder %s249, %s252
      %p261 = scmp.eq.s32.totalorder %s40, 1
      %p262 = por %p260, %p261
      %p263 = scmp.ne.s32.totalorder %s252, %s253
      %p264 = scmp.eq.s32.totalorder %s40, 0
      %p265 = por %p263, %p264
      %p266 = scmp.ne.s32.totalorder %s252, %s253
      %p267 = scmp.eq.s32.totalorder %s41, 1
      %p268 = por %p266, %p267
      %p270 = scmp.ne.s32.totalorder %s253, %s269
      %p271 = scmp.eq.s32.totalorder %s41, 0
      %p272 = por %p270, %p271
      %s273 = ssub.s32 %s35, %s42
      %p274 = scmp.eq.s32.totalorder %s273, 0
      %s276 = sadd.s32 %s275, 1
      %s277 = scalar_select %p274, %s275, %s276
      %p280 = pneg %p274
      %p281 = scmp.eq.s32.totalorder %s35, 1
      %p282 = por %p280, %p281
      %p283 = scmp.ne.s32.totalorder %s275, %s278
      %p284 = scmp.eq.s32.totalorder %s35, 0
      %p285 = por %p283, %p284
      %p286 = scmp.ne.s32.totalorder %s275, %s278
      %p287 = scmp.eq.s32.totalorder %s40, 1
      %p288 = por %p286, %p287
      %p289 = scmp.ne.s32.totalorder %s278, %s279
      %p290 = scmp.eq.s32.totalorder %s40, 0
      %p291 = por %p289, %p290
      %p292 = scmp.ne.s32.totalorder %s278, %s279
      %p293 = scmp.eq.s32.totalorder %s41, 1
      %p294 = por %p292, %p293
      %p296 = scmp.ne.s32.totalorder %s279, %s295
      %p297 = scmp.eq.s32.totalorder %s41, 0
      %p298 = por %p296, %p297
      %s299 = ssub.s32 %s35, %s42
      %p300 = scmp.eq.s32.totalorder %s299, 0
      %s302 = sadd.s32 %s301, 1
      %s303 = scalar_select %p300, %s301, %s302
      %p306 = pneg %p300
      %p307 = scmp.eq.s32.totalorder %s35, 1
      %p308 = por %p306, %p307
      %p309 = scmp.ne.s32.totalorder %s301, %s304
      %p310 = scmp.eq.s32.totalorder %s35, 0
      %p311 = por %p309, %p310
      %p312 = scmp.ne.s32.totalorder %s301, %s304
      %p313 = scmp.eq.s32.totalorder %s40, 1
      %p314 = por %p312, %p313
      %p315 = scmp.ne.s32.totalorder %s304, %s305
      %p316 = scmp.eq.s32.totalorder %s40, 0
      %p317 = por %p315, %p316
      %p318 = scmp.ne.s32.totalorder %s304, %s305
      %p319 = scmp.eq.s32.totalorder %s41, 1
      %p320 = por %p318, %p319
      %p322 = scmp.ne.s32.totalorder %s305, %s321
      %p323 = scmp.eq.s32.totalorder %s41, 0
      %p324 = por %p322, %p323
      %s325 = ssub.s32 %s35, %s42
      %p326 = scmp.eq.s32.totalorder %s325, 0
      %s328 = sadd.s32 %s327, 1
      %s329 = scalar_select %p326, %s327, %s328
      %p332 = pneg %p326
      %p333 = scmp.eq.s32.totalorder %s35, 1
      %p334 = por %p332, %p333
      %p335 = scmp.ne.s32.totalorder %s327, %s330
      %p336 = scmp.eq.s32.totalorder %s35, 0
      %p337 = por %p335, %p336
      %p338 = scmp.ne.s32.totalorder %s327, %s330
      %p339 = scmp.eq.s32.totalorder %s40, 1
      %p340 = por %p338, %p339
      %p341 = scmp.ne.s32.totalorder %s330, %s331
      %p342 = scmp.eq.s32.totalorder %s40, 0
      %p343 = por %p341, %p342
      %p344 = scmp.ne.s32.totalorder %s330, %s331
      %p345 = scmp.eq.s32.totalorder %s41, 1
      %p346 = por %p344, %p345
      %p348 = scmp.ne.s32.totalorder %s331, %s347
      %p349 = scmp.eq.s32.totalorder %s41, 0
      %p350 = por %p348, %p349
      %s351 = ssub.s32 %s35, %s42
      %p352 = scmp.eq.s32.totalorder %s351, 0
      %s354 = sadd.s32 %s353, 1
      %s355 = scalar_select %p352, %s353, %s354
      %p358 = pneg %p352
      %p359 = scmp.eq.s32.totalorder %s35, 1
      %p360 = por %p358, %p359
      %p361 = scmp.ne.s32.totalorder %s353, %s356
      %p362 = scmp.eq.s32.totalorder %s35, 0
      %p363 = por %p361, %p362
      %p364 = scmp.ne.s32.totalorder %s353, %s356
      %p365 = scmp.eq.s32.totalorder %s40, 1
      %p366 = por %p364, %p365
      %p367 = scmp.ne.s32.totalorder %s356, %s357
      %p368 = scmp.eq.s32.totalorder %s40, 0
      %p369 = por %p367, %p368
      %p370 = scmp.ne.s32.totalorder %s356, %s357
      %p371 = scmp.eq.s32.totalorder %s41, 1
      %p372 = por %p370, %p371
      %p374 = scmp.ne.s32.totalorder %s357, %s373
      %p375 = scmp.eq.s32.totalorder %s41, 0
      %p376 = por %p374, %p375
      %s377 = ssub.s32 %s35, %s42
      %p378 = scmp.eq.s32.totalorder %s377, 0
      %s380 = sadd.s32 %s379, 1
      %s381 = scalar_select %p378, %s379, %s380
      %p384 = pneg %p378
      %p385 = scmp.eq.s32.totalorder %s35, 1
      %p386 = por %p384, %p385
      %p387 = scmp.ne.s32.totalorder %s379, %s382
      %p388 = scmp.eq.s32.totalorder %s35, 0
      %p389 = por %p387, %p388
      %p390 = scmp.ne.s32.totalorder %s379, %s382
      %p391 = scmp.eq.s32.totalorder %s40, 1
      %p392 = por %p390, %p391
      %p393 = scmp.ne.s32.totalorder %s382, %s383
      %p394 = scmp.eq.s32.totalorder %s40, 0
      %p395 = por %p393, %p394
      %p396 = scmp.ne.s32.totalorder %s382, %s383
      %p397 = scmp.eq.s32.totalorder %s41, 1
      %p398 = por %p396, %p397
      %p400 = scmp.ne.s32.totalorder %s383, %s399
      %p401 = scmp.eq.s32.totalorder %s41, 0
      %p402 = por %p400, %p401
      %s403 = ssub.s32 %s35, %s42
      %p404 = scmp.eq.s32.totalorder %s403, 0
      %s406 = sadd.s32 %s405, 1
      %s407 = scalar_select %p404, %s405, %s406
      %p410 = pneg %p404
      %p411 = scmp.eq.s32.totalorder %s35, 1
      %p412 = por %p410, %p411
      %p413 = scmp.ne.s32.totalorder %s405, %s408
      %p414 = scmp.eq.s32.totalorder %s35, 0
      %p415 = por %p413, %p414
      %p416 = scmp.ne.s32.totalorder %s405, %s408
      %p417 = scmp.eq.s32.totalorder %s40, 1
      %p418 = por %p416, %p417
      %p419 = scmp.ne.s32.totalorder %s408, %s409
      %p420 = scmp.eq.s32.totalorder %s40, 0
      %p421 = por %p419, %p420
      %p422 = scmp.ne.s32.totalorder %s408, %s409
      %p423 = scmp.eq.s32.totalorder %s41, 1
      %p424 = por %p422, %p423
      %p426 = scmp.ne.s32.totalorder %s409, %s425
      %p427 = scmp.eq.s32.totalorder %s41, 0
      %p428 = por %p426, %p427
      %s429 = ssub.s32 %s35, %s42
      %p430 = scmp.eq.s32.totalorder %s429, 0
      %s432 = sadd.s32 %s431, 1
      %s433 = scalar_select %p430, %s431, %s432
      %p436 = pneg %p430
      %p437 = scmp.eq.s32.totalorder %s35, 1
      %p438 = por %p436, %p437
      %p439 = scmp.ne.s32.totalorder %s431, %s434
      %p440 = scmp.eq.s32.totalorder %s35, 0
      %p441 = por %p439, %p440
      %p442 = scmp.ne.s32.totalorder %s431, %s434
      %p443 = scmp.eq.s32.totalorder %s40, 1
      %p444 = por %p442, %p443
      %p445 = scmp.ne.s32.totalorder %s434, %s435
      %p446 = scmp.eq.s32.totalorder %s40, 0
      %p447 = por %p445, %p446
      %p448 = scmp.ne.s32.totalorder %s434, %s435
      %p449 = scmp.eq.s32.totalorder %s41, 1
      %p450 = por %p448, %p449
      %p452 = scmp.ne.s32.totalorder %s435, %s451
      %p453 = scmp.eq.s32.totalorder %s41, 0
      %p454 = por %p452, %p453
      %s455 = ssub.s32 %s35, %s42
      %p456 = scmp.eq.s32.totalorder %s455, 0
      %s458 = sadd.s32 %s457, 1
      %s459 = scalar_select %p456, %s457, %s458
      %p462 = pneg %p456
      %p463 = scmp.eq.s32.totalorder %s35, 1
      %p464 = por %p462, %p463
      %p465 = scmp.ne.s32.totalorder %s457, %s460
      %p466 = scmp.eq.s32.totalorder %s35, 0
      %p467 = por %p465, %p466
      %p468 = scmp.ne.s32.totalorder %s457, %s460
      %p469 = scmp.eq.s32.totalorder %s40, 1
      %p470 = por %p468, %p469
      %p471 = scmp.ne.s32.totalorder %s460, %s461
      %p472 = scmp.eq.s32.totalorder %s40, 0
      %p473 = por %p471, %p472
      %p474 = scmp.ne.s32.totalorder %s460, %s461
      %p475 = scmp.eq.s32.totalorder %s41, 1
      %p476 = por %p474, %p475
      %p478 = scmp.ne.s32.totalorder %s461, %s477
      %p479 = scmp.eq.s32.totalorder %s41, 0
      %p480 = por %p478, %p479
      %s481 = ssub.s32 %s35, %s42
      %p482 = scmp.eq.s32.totalorder %s481, 0
      %s484 = sadd.s32 %s483, 1
      %s485 = scalar_select %p482, %s483, %s484
      %p488 = pneg %p482
      %p489 = scmp.eq.s32.totalorder %s35, 1
      %p490 = por %p488, %p489
      %p491 = scmp.ne.s32.totalorder %s483, %s486
      %p492 = scmp.eq.s32.totalorder %s35, 0
      %p493 = por %p491, %p492
      %p494 = scmp.ne.s32.totalorder %s483, %s486
      %p495 = scmp.eq.s32.totalorder %s40, 1
      %p496 = por %p494, %p495
      %p497 = scmp.ne.s32.totalorder %s486, %s487
      %p498 = scmp.eq.s32.totalorder %s40, 0
      %p499 = por %p497, %p498
      %p500 = scmp.ne.s32.totalorder %s486, %s487
      %p501 = scmp.eq.s32.totalorder %s41, 1
      %p502 = por %p500, %p501
      %p504 = scmp.ne.s32.totalorder %s487, %s503
      %p505 = scmp.eq.s32.totalorder %s41, 0
      %p506 = por %p504, %p505
      %s507 = ssub.s32 %s35, %s42
      %p508 = scmp.eq.s32.totalorder %s507, 0
      %s510 = sadd.s32 %s509, 1
      %s511 = scalar_select %p508, %s509, %s510
      %p514 = pneg %p508
      %p515 = scmp.eq.s32.totalorder %s35, 1
      %p516 = por %p514, %p515
      %p517 = scmp.ne.s32.totalorder %s509, %s512
      %p518 = scmp.eq.s32.totalorder %s35, 0
      %p519 = por %p517, %p518
      %p520 = scmp.ne.s32.totalorder %s509, %s512
      %p521 = scmp.eq.s32.totalorder %s40, 1
      %p522 = por %p520, %p521
      %p523 = scmp.ne.s32.totalorder %s512, %s513
      %p524 = scmp.eq.s32.totalorder %s40, 0
      %p525 = por %p523, %p524
      %p526 = scmp.ne.s32.totalorder %s512, %s513
      %p527 = scmp.eq.s32.totalorder %s41, 1
      %p528 = por %p526, %p527
      %p530 = scmp.ne.s32.totalorder %s513, %s529
      %p531 = scmp.eq.s32.totalorder %s41, 0
      %p532 = por %p530, %p531
      %s533 = ssub.s32 %s35, %s42
      %p534 = scmp.eq.s32.totalorder %s533, 0
      %s536 = sadd.s32 %s535, 1
      %s537 = scalar_select %p534, %s535, %s536
      %p540 = pneg %p534
      %p541 = scmp.eq.s32.totalorder %s35, 1
      %p542 = por %p540, %p541
      %p543 = scmp.ne.s32.totalorder %s535, %s538
      %p544 = scmp.eq.s32.totalorder %s35, 0
      %p545 = por %p543, %p544
      %p546 = scmp.ne.s32.totalorder %s535, %s538
      %p547 = scmp.eq.s32.totalorder %s40, 1
      %p548 = por %p546, %p547
      %p549 = scmp.ne.s32.totalorder %s538, %s539
      %p550 = scmp.eq.s32.totalorder %s40, 0
      %p551 = por %p549, %p550
      %p552 = scmp.ne.s32.totalorder %s538, %s539
      %p553 = scmp.eq.s32.totalorder %s41, 1
      %p554 = por %p552, %p553
      %p556 = scmp.ne.s32.totalorder %s539, %s555
      %p557 = scmp.eq.s32.totalorder %s41, 0
      %p558 = por %p556, %p557
      %s559 = ssub.s32 %s35, %s42
      %p560 = scmp.eq.s32.totalorder %s559, 0
      %s562 = sadd.s32 %s561, 1
      %s563 = scalar_select %p560, %s561, %s562
      %p566 = pneg %p560
      %p567 = scmp.eq.s32.totalorder %s35, 1
      %p568 = por %p566, %p567
      %p569 = scmp.ne.s32.totalorder %s561, %s564
      %p570 = scmp.eq.s32.totalorder %s35, 0
      %p571 = por %p569, %p570
      %p572 = scmp.ne.s32.totalorder %s561, %s564
      %p573 = scmp.eq.s32.totalorder %s40, 1
      %p574 = por %p572, %p573
      %p575 = scmp.ne.s32.totalorder %s564, %s565
      %p576 = scmp.eq.s32.totalorder %s40, 0
      %p577 = por %p575, %p576
      %p578 = scmp.ne.s32.totalorder %s564, %s565
      %p579 = scmp.eq.s32.totalorder %s41, 1
      %p580 = por %p578, %p579
      %p582 = scmp.ne.s32.totalorder %s565, %s581
      %p583 = scmp.eq.s32.totalorder %s41, 0
      %p584 = por %p582, %p583
      %s585 = ssub.s32 %s35, %s42
      %p586 = scmp.eq.s32.totalorder %s585, 0
      %s588 = sadd.s32 %s587, 1
      %s589 = scalar_select %p586, %s587, %s588
      %p592 = pneg %p586
      %p593 = scmp.eq.s32.totalorder %s35, 1
      %p594 = por %p592, %p593
      %p595 = scmp.ne.s32.totalorder %s587, %s590
      %p596 = scmp.eq.s32.totalorder %s35, 0
      %p597 = por %p595, %p596
      %p598 = scmp.ne.s32.totalorder %s587, %s590
      %p599 = scmp.eq.s32.totalorder %s40, 1
      %p600 = por %p598, %p599
      %p601 = scmp.ne.s32.totalorder %s590, %s591
      %p602 = scmp.eq.s32.totalorder %s40, 0
      %p603 = por %p601, %p602
      %p604 = scmp.ne.s32.totalorder %s590, %s591
      %p605 = scmp.eq.s32.totalorder %s41, 1
      %p606 = por %p604, %p605
      %p608 = scmp.ne.s32.totalorder %s591, %s607
      %p609 = scmp.eq.s32.totalorder %s41, 0
      %p610 = por %p608, %p609
      %s611 = ssub.s32 %s35, %s42
      %p612 = scmp.eq.s32.totalorder %s611, 0
      %s614 = sadd.s32 %s613, 1
      %s615 = scalar_select %p612, %s613, %s614
      %p618 = pneg %p612
      %p619 = scmp.eq.s32.totalorder %s35, 1
      %p620 = por %p618, %p619
      %p621 = scmp.ne.s32.totalorder %s613, %s616
      %p622 = scmp.eq.s32.totalorder %s35, 0
      %p623 = por %p621, %p622
      %p624 = scmp.ne.s32.totalorder %s613, %s616
      %p625 = scmp.eq.s32.totalorder %s40, 1
      %p626 = por %p624, %p625
      %p627 = scmp.ne.s32.totalorder %s616, %s617
      %p628 = scmp.eq.s32.totalorder %s40, 0
      %p629 = por %p627, %p628
      %p630 = scmp.ne.s32.totalorder %s616, %s617
      %p631 = scmp.eq.s32.totalorder %s41, 1
      %p632 = por %p630, %p631
      %p634 = scmp.ne.s32.totalorder %s617, %s633
      %p635 = scmp.eq.s32.totalorder %s41, 0
      %p636 = por %p634, %p635
      %s637 = ssub.s32 %s35, %s42
      %p638 = scmp.eq.s32.totalorder %s637, 0
      %s640 = sadd.s32 %s639, 1
      %s641 = scalar_select %p638, %s639, %s640
      %p644 = pneg %p638
      %p645 = scmp.eq.s32.totalorder %s35, 1
      %p646 = por %p644, %p645
      %p647 = scmp.ne.s32.totalorder %s639, %s642
      %p648 = scmp.eq.s32.totalorder %s35, 0
      %p649 = por %p647, %p648
      %p650 = scmp.ne.s32.totalorder %s639, %s642
      %p651 = scmp.eq.s32.totalorder %s40, 1
      %p652 = por %p650, %p651
      %p653 = scmp.ne.s32.totalorder %s642, %s643
      %p654 = scmp.eq.s32.totalorder %s40, 0
      %p655 = por %p653, %p654
      %p656 = scmp.ne.s32.totalorder %s642, %s643
      %p657 = scmp.eq.s32.totalorder %s41, 1
      %p658 = por %p656, %p657
      %p660 = scmp.ne.s32.totalorder %s643, %s659
      %p661 = scmp.eq.s32.totalorder %s41, 0
      %p662 = por %p660, %p661
      %s663 = ssub.s32 %s35, %s42
      %p664 = scmp.eq.s32.totalorder %s663, 0
      %s666 = sadd.s32 %s665, 1
      %s667 = scalar_select %p664, %s665, %s666
      %p670 = pneg %p664
      %p671 = scmp.eq.s32.totalorder %s35, 1
      %p672 = por %p670, %p671
      %p673 = scmp.ne.s32.totalorder %s665, %s668
      %p674 = scmp.eq.s32.totalorder %s35, 0
      %p675 = por %p673, %p674
      %p676 = scmp.ne.s32.totalorder %s665, %s668
      %p677 = scmp.eq.s32.totalorder %s40, 1
      %p678 = por %p676, %p677
      %p679 = scmp.ne.s32.totalorder %s668, %s669
      %p680 = scmp.eq.s32.totalorder %s40, 0
      %p681 = por %p679, %p680
      %p682 = scmp.ne.s32.totalorder %s668, %s669
      %p683 = scmp.eq.s32.totalorder %s41, 1
      %p684 = por %p682, %p683
      %p686 = scmp.ne.s32.totalorder %s669, %s685
      %p687 = scmp.eq.s32.totalorder %s41, 0
      %p688 = por %p686, %p687
      %s689 = ssub.s32 %s35, %s42
      %p690 = scmp.eq.s32.totalorder %s689, 0
      %s692 = sadd.s32 %s691, 1
      %s693 = scalar_select %p690, %s691, %s692
      %p696 = pneg %p690
      %p697 = scmp.eq.s32.totalorder %s35, 1
      %p698 = por %p696, %p697
      %p699 = scmp.ne.s32.totalorder %s691, %s694
      %p700 = scmp.eq.s32.totalorder %s35, 0
      %p701 = por %p699, %p700
      %p702 = scmp.ne.s32.totalorder %s691, %s694
      %p703 = scmp.eq.s32.totalorder %s40, 1
      %p704 = por %p702, %p703
      %p705 = scmp.ne.s32.totalorder %s694, %s695
      %p706 = scmp.eq.s32.totalorder %s40, 0
      %p707 = por %p705, %p706
      %p708 = scmp.ne.s32.totalorder %s694, %s695
      %p709 = scmp.eq.s32.totalorder %s41, 1
      %p710 = por %p708, %p709
      %p712 = scmp.ne.s32.totalorder %s695, %s711
      %p713 = scmp.eq.s32.totalorder %s41, 0
      %p714 = por %p712, %p713
      %s715 = ssub.s32 %s35, %s42
      %p716 = scmp.eq.s32.totalorder %s715, 0
      %s718 = sadd.s32 %s717, 1
      %s719 = scalar_select %p716, %s717, %s718
      %p722 = pneg %p716
      %p723 = scmp.eq.s32.totalorder %s35, 1
      %p724 = por %p722, %p723
      %p725 = scmp.ne.s32.totalorder %s717, %s720
      %p726 = scmp.eq.s32.totalorder %s35, 0
      %p727 = por %p725, %p726
      %p728 = scmp.ne.s32.totalorder %s717, %s720
      %p729 = scmp.eq.s32.totalorder %s40, 1
      %p730 = por %p728, %p729
      %p731 = scmp.ne.s32.totalorder %s720, %s721
      %p732 = scmp.eq.s32.totalorder %s40, 0
      %p733 = por %p731, %p732
      %p734 = scmp.ne.s32.totalorder %s720, %s721
      %p735 = scmp.eq.s32.totalorder %s41, 1
      %p736 = por %p734, %p735
      %p738 = scmp.ne.s32.totalorder %s721, %s737
      %p739 = scmp.eq.s32.totalorder %s41, 0
      %p740 = por %p738, %p739
      %s742 = sadd.s32 %s741, 1
      %p745 = scmp.eq.s32.totalorder %s35, 1
      %p746 = scmp.ne.s32.totalorder %s741, %s743
      %p747 = scmp.eq.s32.totalorder %s35, 0
      %p748 = por %p746, %p747
      %p749 = scmp.ne.s32.totalorder %s741, %s743
      %p750 = scmp.eq.s32.totalorder %s40, 1
      %p751 = por %p749, %p750
      %p752 = scmp.ne.s32.totalorder %s743, %s744
      %p753 = scmp.eq.s32.totalorder %s40, 0
      %p754 = por %p752, %p753
      %p755 = scmp.ne.s32.totalorder %s743, %s744
      %p756 = scmp.eq.s32.totalorder %s41, 1
      %p757 = por %p755, %p756
      %p759 = scmp.ne.s32.totalorder %s744, %s758
      %p760 = scmp.eq.s32.totalorder %s41, 0
      %p761 = por %p759, %p760
      %p762 = scmp.le.s32.totalorder 1, %s35
      %p763 = scmp.lt.s32.totalorder %s35, 3
      %p764 = pnand %p762, %p763
      %p765 = pneg %p764
      // Predicated region
      $region9: #{decoder_forward.1} parent=5 // pred_check
        _
      $region10: #{decoder_forward.1} parent=5 // pred_check_branch
        %767 = sbr.rel (%p764) target = $region12
      $region11: #{decoder_forward.1} parent=5 // pred_region
        %s768 = ssub.s32 %s35, 1
        // Predicated region
        $region13: #{decoder_forward.1} parent=11 // pred_check
          %p769 = pneg %p56
        $region14: #{decoder_forward.1} parent=11 // pred_check_branch
          %771 = sbr.rel (%p769) target = $region16
        $region15: #{decoder_forward.1} parent=11 // pred_region
          _
        $region16: #{decoder_forward.1} parent=11 // pred_fallthru
          _
        // Predicated region
        $region17: #{decoder_forward.1} parent=11 // pred_check
          %p772 = pneg %p77
        $region18: #{decoder_forward.1} parent=11 // pred_check_branch
          %774 = sbr.rel (%p772) target = $region20
        $region19: #{decoder_forward.1} parent=11 // pred_region
          _
        $region20: #{decoder_forward.1} parent=11 // pred_fallthru
          _
        // Predicated region
        $region21: #{decoder_forward.1} parent=11 // pred_check
          %p775 = pneg %p98
        $region22: #{decoder_forward.1} parent=11 // pred_check_branch
          %777 = sbr.rel (%p775) target = $region24
        $region23: #{decoder_forward.1} parent=11 // pred_region
          _
        $region24: #{decoder_forward.1} parent=11 // pred_fallthru
          _
        // Predicated region
        $region25: #{decoder_forward.1} parent=11 // pred_check
          %p778 = pneg %p119
        $region26: #{decoder_forward.1} parent=11 // pred_check_branch
          %780 = sbr.rel (%p778) target = $region28
        $region27: #{decoder_forward.1} parent=11 // pred_region
          _
        $region28: #{decoder_forward.1} parent=11 // pred_fallthru
          _
        // Predicated region
        $region29: #{decoder_forward.1} parent=11 // pred_check
          %p781 = pneg %p140
        $region30: #{decoder_forward.1} parent=11 // pred_check_branch
          %783 = sbr.rel (%p781) target = $region32
        $region31: #{decoder_forward.1} parent=11 // pred_region
          _
        $region32: #{decoder_forward.1} parent=11 // pred_fallthru
          _
        // Predicated region
        $region33: #{decoder_forward.1} parent=11 // pred_check
          %p784 = pneg %p161
        $region34: #{decoder_forward.1} parent=11 // pred_check_branch
          %786 = sbr.rel (%p784) target = $region36
        $region35: #{decoder_forward.1} parent=11 // pred_region
          _
        $region36: #{decoder_forward.1} parent=11 // pred_fallthru
          _
      $region12: #{decoder_forward.1} parent=5 // pred_fallthru
        _
      %p787 = scmp.lt.s32.totalorder %s35, 2
      // Predicated region
      $region37: #{decoder_forward.1} parent=5 // pred_check
        %p788 = pneg %p787
      $region38: #{decoder_forward.1} parent=5 // pred_check_branch
        %790 = sbr.rel (%p788) target = $region40
      $region39: #{decoder_forward.1} parent=5 // pred_region
        // Predicated region
        $region41: #{decoder_forward.1} parent=39 // pred_check
          %p791 = pneg %p181
        $region42: #{decoder_forward.1} parent=39 // pred_check_branch
          %793 = sbr.rel (%p791) target = $region44
        $region43: #{decoder_forward.1} parent=39 // pred_region
          %p794 = scmp.lt.s32.totalorder %s35, 1
          %s795 = scalar_select %p794, %s35, 1
          %s796 = scalar_lea.vmem %s6, %s795
        $region44: #{decoder_forward.1} parent=39 // pred_fallthru
          _
        // Predicated region
        $region45: #{decoder_forward.1} parent=39 // pred_check
          %p797 = pneg %p207
        $region46: #{decoder_forward.1} parent=39 // pred_check_branch
          %799 = sbr.rel (%p797) target = $region48
        $region47: #{decoder_forward.1} parent=39 // pred_region
          %p800 = scmp.lt.s32.totalorder %s35, 1
          %s801 = scalar_select %p800, %s35, 1
          %s802 = scalar_lea.vmem %s7, %s801
        $region48: #{decoder_forward.1} parent=39 // pred_fallthru
          _
        // Predicated region
        $region49: #{decoder_forward.1} parent=39 // pred_check
          %p803 = pneg %p233
        $region50: #{decoder_forward.1} parent=39 // pred_check_branch
          %805 = sbr.rel (%p803) target = $region52
        $region51: #{decoder_forward.1} parent=39 // pred_region
          %p806 = scmp.lt.s32.totalorder %s35, 1
          %s807 = scalar_select %p806, %s35, 1
          %s808 = smul.addr %s807, 4
          %s809 = smul.addr %s808, 4
          %s810 = scalar_lea.vmem %s8, %s809
        $region52: #{decoder_forward.1} parent=39 // pred_fallthru
          _
        // Predicated region
        $region53: #{decoder_forward.1} parent=39 // pred_check
          %p811 = pneg %p259
        $region54: #{decoder_forward.1} parent=39 // pred_check_branch
          %813 = sbr.rel (%p811) target = $region56
        $region55: #{decoder_forward.1} parent=39 // pred_region
          %p814 = scmp.lt.s32.totalorder %s35, 1
          %s815 = scalar_select %p814, %s35, 1
          %s816 = scalar_lea.vmem %s9, %s815
        $region56: #{decoder_forward.1} parent=39 // pred_fallthru
          _
        // Predicated region
        $region57: #{decoder_forward.1} parent=39 // pred_check
          %p817 = pneg %p285
        $region58: #{decoder_forward.1} parent=39 // pred_check_branch
          %819 = sbr.rel (%p817) target = $region60
        $region59: #{decoder_forward.1} parent=39 // pred_region
          %p820 = scmp.lt.s32.totalorder %s35, 1
          %s821 = scalar_select %p820, %s35, 1
          %s822 = smul.addr %s821, 4
          %s823 = smul.addr %s822, 4
          %s824 = scalar_lea.vmem %s10, %s823
        $region60: #{decoder_forward.1} parent=39 // pred_fallthru
          _
        // Predicated region
        $region61: #{decoder_forward.1} parent=39 // pred_check
          %p825 = pneg %p311
        $region62: #{decoder_forward.1} parent=39 // pred_check_branch
          %827 = sbr.rel (%p825) target = $region64
        $region63: #{decoder_forward.1} parent=39 // pred_region
          %p828 = scmp.lt.s32.totalorder %s35, 1
          %s829 = scalar_select %p828, %s35, 1
          %s830 = scalar_lea.vmem %s11, %s829
        $region64: #{decoder_forward.1} parent=39 // pred_fallthru
          _
        // Predicated region
        $region65: #{decoder_forward.1} parent=39 // pred_check
          %p831 = pneg %p337
        $region66: #{decoder_forward.1} parent=39 // pred_check_branch
          %833 = sbr.rel (%p831) target = $region68
        $region67: #{decoder_forward.1} parent=39 // pred_region
          %p834 = scmp.lt.s32.totalorder %s35, 1
          %s835 = scalar_select %p834, %s35, 1
          %s836 = smul.addr %s835, 4
          %s837 = smul.addr %s836, 4
          %s838 = scalar_lea.vmem %s12, %s837
        $region68: #{decoder_forward.1} parent=39 // pred_fallthru
          _
        // Predicated region
        $region69: #{decoder_forward.1} parent=39 // pred_check
          %p839 = pneg %p363
        $region70: #{decoder_forward.1} parent=39 // pred_check_branch
          %841 = sbr.rel (%p839) target = $region72
        $region71: #{decoder_forward.1} parent=39 // pred_region
          %p842 = scmp.lt.s32.totalorder %s35, 1
          %s843 = scalar_select %p842, %s35, 1
          %s844 = scalar_lea.vmem %s13, %s843
        $region72: #{decoder_forward.1} parent=39 // pred_fallthru
          _
        // Predicated region
        $region73: #{decoder_forward.1} parent=39 // pred_check
          %p845 = pneg %p389
        $region74: #{decoder_forward.1} parent=39 // pred_check_branch
          %847 = sbr.rel (%p845) target = $region76
        $region75: #{decoder_forward.1} parent=39 // pred_region
          %p848 = scmp.lt.s32.totalorder %s35, 1
          %s849 = scalar_select %p848, %s35, 1
          %s850 = scalar_lea.vmem %s14, %s849
        $region76: #{decoder_forward.1} parent=39 // pred_fallthru
          _
        // Predicated region
        $region77: #{decoder_forward.1} parent=39 // pred_check
          %p851 = pneg %p415
        $region78: #{decoder_forward.1} parent=39 // pred_check_branch
          %853 = sbr.rel (%p851) target = $region80
        $region79: #{decoder_forward.1} parent=39 // pred_region
          %p854 = scmp.lt.s32.totalorder %s35, 1
          %s855 = scalar_select %p854, %s35, 1
          %s856 = scalar_lea.vmem %s15, %s855
        $region80: #{decoder_forward.1} parent=39 // pred_fallthru
          _
        // Predicated region
        $region81: #{decoder_forward.1} parent=39 // pred_check
          %p857 = pneg %p441
        $region82: #{decoder_forward.1} parent=39 // pred_check_branch
          %859 = sbr.rel (%p857) target = $region84
        $region83: #{decoder_forward.1} parent=39 // pred_region
          %p860 = scmp.lt.s32.totalorder %s35, 1
          %s861 = scalar_select %p860, %s35, 1
          %s862 = smul.addr %s861, 4
          %s863 = smul.addr %s862, 4
          %s864 = scalar_lea.vmem %s16, %s863
        $region84: #{decoder_forward.1} parent=39 // pred_fallthru
          _
        // Predicated region
        $region85: #{decoder_forward.1} parent=39 // pred_check
          %p865 = pneg %p467
        $region86: #{decoder_forward.1} parent=39 // pred_check_branch
          %867 = sbr.rel (%p865) target = $region88
        $region87: #{decoder_forward.1} parent=39 // pred_region
          %p868 = scmp.lt.s32.totalorder %s35, 1
          %s869 = scalar_select %p868, %s35, 1
          %s870 = scalar_lea.vmem %s17, %s869
        $region88: #{decoder_forward.1} parent=39 // pred_fallthru
          _
        // Predicated region
        $region89: #{decoder_forward.1} parent=39 // pred_check
          %p871 = pneg %p493
        $region90: #{decoder_forward.1} parent=39 // pred_check_branch
          %873 = sbr.rel (%p871) target = $region92
        $region91: #{decoder_forward.1} parent=39 // pred_region
          %p874 = scmp.lt.s32.totalorder %s35, 1
          %s875 = scalar_select %p874, %s35, 1
          %s876 = smul.addr %s875, 4
          %s877 = smul.addr %s876, 4
          %s878 = scalar_lea.vmem %s18, %s877
        $region92: #{decoder_forward.1} parent=39 // pred_fallthru
          _
        // Predicated region
        $region93: #{decoder_forward.1} parent=39 // pred_check
          %p879 = pneg %p519
        $region94: #{decoder_forward.1} parent=39 // pred_check_branch
          %881 = sbr.rel (%p879) target = $region96
        $region95: #{decoder_forward.1} parent=39 // pred_region
          %p882 = scmp.lt.s32.totalorder %s35, 1
          %s883 = scalar_select %p882, %s35, 1
          %s884 = scalar_lea.vmem %s19, %s883
        $region96: #{decoder_forward.1} parent=39 // pred_fallthru
          _
        // Predicated region
        $region97: #{decoder_forward.1} parent=39 // pred_check
          %p885 = pneg %p545
        $region98: #{decoder_forward.1} parent=39 // pred_check_branch
          %887 = sbr.rel (%p885) target = $region100
        $region99: #{decoder_forward.1} parent=39 // pred_region
          %p888 = scmp.lt.s32.totalorder %s35, 1
          %s889 = scalar_select %p888, %s35, 1
          %s890 = smul.addr %s889, 4
          %s891 = smul.addr %s890, 4
          %s892 = scalar_lea.vmem %s20, %s891
        $region100: #{decoder_forward.1} parent=39 // pred_fallthru
          _
        // Predicated region
        $region101: #{decoder_forward.1} parent=39 // pred_check
          %p893 = pneg %p571
        $region102: #{decoder_forward.1} parent=39 // pred_check_branch
          %895 = sbr.rel (%p893) target = $region104
        $region103: #{decoder_forward.1} parent=39 // pred_region
          %p896 = scmp.lt.s32.totalorder %s35, 1
          %s897 = scalar_select %p896, %s35, 1
          %s898 = scalar_lea.vmem %s21, %s897
        $region104: #{decoder_forward.1} parent=39 // pred_fallthru
          _
        // Predicated region
        $region105: #{decoder_forward.1} parent=39 // pred_check
          %p899 = pneg %p597
        $region106: #{decoder_forward.1} parent=39 // pred_check_branch
          %901 = sbr.rel (%p899) target = $region108
        $region107: #{decoder_forward.1} parent=39 // pred_region
          %p902 = scmp.lt.s32.totalorder %s35, 1
          %s903 = scalar_select %p902, %s35, 1
          %s904 = scalar_lea.vmem %s22, %s903
        $region108: #{decoder_forward.1} parent=39 // pred_fallthru
          _
        // Predicated region
        $region109: #{decoder_forward.1} parent=39 // pred_check
          %p905 = pneg %p623
        $region110: #{decoder_forward.1} parent=39 // pred_check_branch
          %907 = sbr.rel (%p905) target = $region112
        $region111: #{decoder_forward.1} parent=39 // pred_region
          %p908 = scmp.lt.s32.totalorder %s35, 1
          %s909 = scalar_select %p908, %s35, 1
          %s910 = scalar_lea.vmem %s23, %s909
        $region112: #{decoder_forward.1} parent=39 // pred_fallthru
          _
        // Predicated region
        $region113: #{decoder_forward.1} parent=39 // pred_check
          %p911 = pneg %p649
        $region114: #{decoder_forward.1} parent=39 // pred_check_branch
          %913 = sbr.rel (%p911) target = $region116
        $region115: #{decoder_forward.1} parent=39 // pred_region
          %p914 = scmp.lt.s32.totalorder %s35, 1
          %s915 = scalar_select %p914, %s35, 1
          %s916 = smul.addr %s915, 4
          %s917 = smul.addr %s916, 4
          %s918 = scalar_lea.vmem %s24, %s917
        $region116: #{decoder_forward.1} parent=39 // pred_fallthru
          _
        // Predicated region
        $region117: #{decoder_forward.1} parent=39 // pred_check
          %p919 = pneg %p675
        $region118: #{decoder_forward.1} parent=39 // pred_check_branch
          %921 = sbr.rel (%p919) target = $region120
        $region119: #{decoder_forward.1} parent=39 // pred_region
          %p922 = scmp.lt.s32.totalorder %s35, 1
          %s923 = scalar_select %p922, %s35, 1
          %s924 = scalar_lea.vmem %s25, %s923
        $region120: #{decoder_forward.1} parent=39 // pred_fallthru
          _
        // Predicated region
        $region121: #{decoder_forward.1} parent=39 // pred_check
          %p925 = pneg %p701
        $region122: #{decoder_forward.1} parent=39 // pred_check_branch
          %927 = sbr.rel (%p925) target = $region124
        $region123: #{decoder_forward.1} parent=39 // pred_region
          %p928 = scmp.lt.s32.totalorder %s35, 1
          %s929 = scalar_select %p928, %s35, 1
          %s930 = smul.addr %s929, 8
          %s931 = smul.addr %s930, 4
          %s932 = scalar_lea.vmem %s26, %s931
        $region124: #{decoder_forward.1} parent=39 // pred_fallthru
          _
        // Predicated region
        $region125: #{decoder_forward.1} parent=39 // pred_check
          %p933 = pneg %p727
        $region126: #{decoder_forward.1} parent=39 // pred_check_branch
          %935 = sbr.rel (%p933) target = $region128
        $region127: #{decoder_forward.1} parent=39 // pred_region
          %p936 = scmp.lt.s32.totalorder %s35, 1
          %s937 = scalar_select %p936, %s35, 1
          %s938 = scalar_lea.vmem %s27, %s937
        $region128: #{decoder_forward.1} parent=39 // pred_fallthru
          _
      $region40: #{decoder_forward.1} parent=5 // pred_fallthru
        _
      %p939 = scmp.le.s32.totalorder 1, %s35
      %p940 = scmp.lt.s32.totalorder %s35, 3
      %p941 = pnand %p939, %p940
      %p942 = pneg %p941
      // Predicated region
      $region129: #{decoder_forward.1} parent=5 // pred_check
        _
      $region130: #{decoder_forward.1} parent=5 // pred_check_branch
        %944 = sbr.rel (%p941) target = $region132
      $region131: #{decoder_forward.1} parent=5 // pred_region
        %s945 = ssub.s32 %s35, 1
        %p946 = pneg %p56
        %p947 = pneg %p53
        %p948 = pneg %p77
        %p949 = pneg %p74
        %p950 = pneg %p98
        %p951 = pneg %p95
        %p952 = pneg %p119
        %p953 = pneg %p116
        %p954 = pneg %p140
        %p955 = pneg %p137
        %p956 = pneg %p161
        %p957 = pneg %p158
        %p958 = scmp.lt.s32.totalorder %s40, 1
        %s959 = scalar_select %p958, %s40, 1
        %s960 = scalar_lea.vmem %s6, %s959
        %p961 = pneg %p187
        %p962 = pneg %p184
        %p963 = scmp.lt.s32.totalorder %s40, 1
        %s964 = scalar_select %p963, %s40, 1
        %s965 = scalar_lea.vmem %s7, %s964
        %p966 = pneg %p213
        %p967 = pneg %p210
        %p968 = scmp.lt.s32.totalorder %s40, 1
        %s969 = scalar_select %p968, %s40, 1
        %s970 = smul.addr %s969, 4
        %s971 = smul.addr %s970, 4
        %s972 = scalar_lea.vmem %s8, %s971
        %p973 = pneg %p239
        %p974 = pneg %p236
        %p975 = scmp.lt.s32.totalorder %s40, 1
        %s976 = scalar_select %p975, %s40, 1
        %s977 = scalar_lea.vmem %s9, %s976
        %p978 = pneg %p265
        %p979 = pneg %p262
        %p980 = scmp.lt.s32.totalorder %s40, 1
        %s981 = scalar_select %p980, %s40, 1
        %s982 = smul.addr %s981, 4
        %s983 = smul.addr %s982, 4
        %s984 = scalar_lea.vmem %s10, %s983
        %p985 = pneg %p291
        %p986 = pneg %p288
        %p987 = scmp.lt.s32.totalorder %s40, 1
        %s988 = scalar_select %p987, %s40, 1
        %s989 = scalar_lea.vmem %s11, %s988
        %p990 = pneg %p317
        %p991 = pneg %p314
        %p992 = scmp.lt.s32.totalorder %s40, 1
        %s993 = scalar_select %p992, %s40, 1
        %s994 = smul.addr %s993, 4
        %s995 = smul.addr %s994, 4
        %s996 = scalar_lea.vmem %s12, %s995
        %p997 = pneg %p343
        %p998 = pneg %p340
        %p999 = scmp.lt.s32.totalorder %s40, 1
        %s1000 = scalar_select %p999, %s40, 1
        %s1001 = scalar_lea.vmem %s13, %s1000
        %p1002 = pneg %p369
        %p1003 = pneg %p366
        %p1004 = scmp.lt.s32.totalorder %s40, 1
        %s1005 = scalar_select %p1004, %s40, 1
        %s1006 = scalar_lea.vmem %s14, %s1005
        %p1007 = pneg %p395
        %p1008 = pneg %p392
        %p1009 = scmp.lt.s32.totalorder %s40, 1
        %s1010 = scalar_select %p1009, %s40, 1
        %s1011 = scalar_lea.vmem %s15, %s1010
        %p1012 = pneg %p421
        %p1013 = pneg %p418
        %p1014 = scmp.lt.s32.totalorder %s40, 1
        %s1015 = scalar_select %p1014, %s40, 1
        %s1016 = smul.addr %s1015, 4
        %s1017 = smul.addr %s1016, 4
        %s1018 = scalar_lea.vmem %s16, %s1017
        %p1019 = pneg %p447
        %p1020 = pneg %p444
        %p1021 = scmp.lt.s32.totalorder %s40, 1
        %s1022 = scalar_select %p1021, %s40, 1
        %s1023 = scalar_lea.vmem %s17, %s1022
        %p1024 = pneg %p473
        %p1025 = pneg %p470
        %p1026 = scmp.lt.s32.totalorder %s40, 1
        %s1027 = scalar_select %p1026, %s40, 1
        %s1028 = smul.addr %s1027, 4
        %s1029 = smul.addr %s1028, 4
        %s1030 = scalar_lea.vmem %s18, %s1029
        %p1031 = pneg %p499
        %p1032 = pneg %p496
        %p1033 = scmp.lt.s32.totalorder %s40, 1
        %s1034 = scalar_select %p1033, %s40, 1
        %s1035 = scalar_lea.vmem %s19, %s1034
        %p1036 = pneg %p525
        %p1037 = pneg %p522
        %p1038 = scmp.lt.s32.totalorder %s40, 1
        %s1039 = scalar_select %p1038, %s40, 1
        %s1040 = smul.addr %s1039, 4
        %s1041 = smul.addr %s1040, 4
        %s1042 = scalar_lea.vmem %s20, %s1041
        %p1043 = pneg %p551
        %p1044 = pneg %p548
        %p1045 = scmp.lt.s32.totalorder %s40, 1
        %s1046 = scalar_select %p1045, %s40, 1
        %s1047 = scalar_lea.vmem %s21, %s1046
        %p1048 = pneg %p577
        %p1049 = pneg %p574
        %p1050 = scmp.lt.s32.totalorder %s40, 1
        %s1051 = scalar_select %p1050, %s40, 1
        %s1052 = scalar_lea.vmem %s22, %s1051
        %p1053 = pneg %p603
        %p1054 = pneg %p600
        %p1055 = scmp.lt.s32.totalorder %s40, 1
        %s1056 = scalar_select %p1055, %s40, 1
        %s1057 = scalar_lea.vmem %s23, %s1056
        %p1058 = pneg %p629
        %p1059 = pneg %p626
        %p1060 = scmp.lt.s32.totalorder %s40, 1
        %s1061 = scalar_select %p1060, %s40, 1
        %s1062 = smul.addr %s1061, 4
        %s1063 = smul.addr %s1062, 4
        %s1064 = scalar_lea.vmem %s24, %s1063
        %p1065 = pneg %p655
        %p1066 = pneg %p652
        %p1067 = scmp.lt.s32.totalorder %s40, 1
        %s1068 = scalar_select %p1067, %s40, 1
        %s1069 = scalar_lea.vmem %s25, %s1068
        %p1070 = pneg %p681
        %p1071 = pneg %p678
        %p1072 = scmp.lt.s32.totalorder %s40, 1
        %s1073 = scalar_select %p1072, %s40, 1
        %s1074 = smul.addr %s1073, 8
        %s1075 = smul.addr %s1074, 4
        %s1076 = scalar_lea.vmem %s26, %s1075
        %p1077 = pneg %p707
        %p1078 = pneg %p704
        %p1079 = scmp.lt.s32.totalorder %s40, 1
        %s1080 = scalar_select %p1079, %s40, 1
        %s1081 = scalar_lea.vmem %s27, %s1080
        %p1082 = pneg %p733
        %p1083 = pneg %p730
        %p1084 = pneg %p754
        %p1085 = pneg %p751
        %p1086 = scmp.lt.s32.totalorder %s40, 1
        %s1087 = scalar_select %p1086, %s40, 1
        %s1088 = scalar_lea.vmem %s6, %s1087
        %p1089 = scmp.lt.s32.totalorder %s40, 1
        %s1090 = scalar_select %p1089, %s40, 1
        %s1091 = scalar_lea.vmem %s7, %s1090
        %p1092 = scmp.lt.s32.totalorder %s40, 1
        %s1093 = scalar_select %p1092, %s40, 1
        %s1094 = smul.addr %s1093, 4
        %s1095 = smul.addr %s1094, 4
        %s1096 = scalar_lea.vmem %s8, %s1095
        %p1097 = scmp.lt.s32.totalorder %s40, 1
        %s1098 = scalar_select %p1097, %s40, 1
        %s1099 = scalar_lea.vmem %s9, %s1098
        %p1100 = scmp.lt.s32.totalorder %s40, 1
        %s1101 = scalar_select %p1100, %s40, 1
        %s1102 = smul.addr %s1101, 4
        %s1103 = smul.addr %s1102, 4
        %s1104 = scalar_lea.vmem %s10, %s1103
        %p1105 = scmp.lt.s32.totalorder %s40, 1
        %s1106 = scalar_select %p1105, %s40, 1
        %s1107 = scalar_lea.vmem %s11, %s1106
        %p1108 = scmp.lt.s32.totalorder %s40, 1
        %s1109 = scalar_select %p1108, %s40, 1
        %s1110 = smul.addr %s1109, 4
        %s1111 = smul.addr %s1110, 4
        %s1112 = scalar_lea.vmem %s12, %s1111
        %p1113 = scmp.lt.s32.totalorder %s40, 1
        %s1114 = scalar_select %p1113, %s40, 1
        %s1115 = scalar_lea.vmem %s13, %s1114
        %p1116 = scmp.lt.s32.totalorder %s40, 1
        %s1117 = scalar_select %p1116, %s40, 1
        %s1118 = scalar_lea.vmem %s14, %s1117
        %p1119 = scmp.lt.s32.totalorder %s40, 1
        %s1120 = scalar_select %p1119, %s40, 1
        %s1121 = scalar_lea.vmem %s15, %s1120
        %p1122 = scmp.lt.s32.totalorder %s40, 1
        %s1123 = scalar_select %p1122, %s40, 1
        %s1124 = smul.addr %s1123, 4
        %s1125 = smul.addr %s1124, 4
        %s1126 = scalar_lea.vmem %s16, %s1125
        %p1127 = scmp.lt.s32.totalorder %s40, 1
        %s1128 = scalar_select %p1127, %s40, 1
        %s1129 = scalar_lea.vmem %s17, %s1128
        %p1130 = scmp.lt.s32.totalorder %s40, 1
        %s1131 = scalar_select %p1130, %s40, 1
        %s1132 = smul.addr %s1131, 4
        %s1133 = smul.addr %s1132, 4
        %s1134 = scalar_lea.vmem %s18, %s1133
        %p1135 = scmp.lt.s32.totalorder %s40, 1
        %s1136 = scalar_select %p1135, %s40, 1
        %s1137 = scalar_lea.vmem %s19, %s1136
        %p1138 = scmp.lt.s32.totalorder %s40, 1
        %s1139 = scalar_select %p1138, %s40, 1
        %s1140 = smul.addr %s1139, 4
        %s1141 = smul.addr %s1140, 4
        %s1142 = scalar_lea.vmem %s20, %s1141
        %p1143 = scmp.lt.s32.totalorder %s40, 1
        %s1144 = scalar_select %p1143, %s40, 1
        %s1145 = scalar_lea.vmem %s21, %s1144
        %p1146 = scmp.lt.s32.totalorder %s40, 1
        %s1147 = scalar_select %p1146, %s40, 1
        %s1148 = scalar_lea.vmem %s22, %s1147
        %p1149 = scmp.lt.s32.totalorder %s40, 1
        %s1150 = scalar_select %p1149, %s40, 1
        %s1151 = scalar_lea.vmem %s23, %s1150
        %p1152 = scmp.lt.s32.totalorder %s40, 1
        %s1153 = scalar_select %p1152, %s40, 1
        %s1154 = smul.addr %s1153, 4
        %s1155 = smul.addr %s1154, 4
        %s1156 = scalar_lea.vmem %s24, %s1155
        %p1157 = scmp.lt.s32.totalorder %s40, 1
        %s1158 = scalar_select %p1157, %s40, 1
        %s1159 = scalar_lea.vmem %s25, %s1158
        %p1160 = scmp.lt.s32.totalorder %s40, 1
        %s1161 = scalar_select %p1160, %s40, 1
        %s1162 = smul.addr %s1161, 8
        %s1163 = smul.addr %s1162, 4
        %s1164 = scalar_lea.vmem %s26, %s1163
        %p1165 = scmp.lt.s32.totalorder %s40, 1
        %s1166 = scalar_select %p1165, %s40, 1
        %s1167 = scalar_lea.vmem %s27, %s1166
        %p1169 = scmp.eq.s32.totalorder %s40, 0
        // Predicated region
        $region133: #{decoder_forward.1} parent=131 // pred_check
          %p1170 = pneg %p1169
        $region134: #{decoder_forward.1} parent=131 // pred_check_branch
          %1172 = sbr.rel (%p1170) target = $region136
        $region135: #{decoder_forward.1} parent=131 // pred_region
          %v1173 = vld [vmem:[%s0] sm:$0xff]
          %v1174 = vld [vmem:[%s0 + $0x8] sm:$0xff]
          %vm1175 = vcmask 261120
          %1176 = vst.msk [vmem:[#allocation2] sm:$0xff] %vm1175, %v1173
          %1177 = vst.msk [vmem:[#allocation2 + $0x8] sm:$0xff] %vm1175, %v1174
        $region136: #{decoder_forward.1} parent=131 // pred_fallthru
          _
        %v1178 = vld [vmem:[#allocation2] sm:$0xff]
        %v1179 = vld [vmem:[#allocation2 + $0x8] sm:$0xff]
        %v1180 = vld [vmem:[%s1088] sm:$0x1]
        %v1181 = vld [vmem:[%s1091] sm:$0x1]
        %vm1182 = vcmask 261120
        %v1183 = vsel %vm1182, %v1178, 0.0
        %1184 = vadd.xlane.f32.xlu0 %v1183
        %v1185 = vpop.xlane.xlu0 %1184
        %v1186 = vsel %vm1182, %v1179, 0.0
        %1187 = vadd.xlane.f32.xlu0 %v1186
        %v1188 = vpop.xlane.xlu0 %1187
        %v1189 = vrcp.pop 32.0
        %v1190 = vmul.f32 %v1185, %v1189
        %v1191 = vmul.f32 %v1188, %v1189
        %v1192 = vsub.f32 %v1178, %v1190
        %v1193 = vsub.f32 %v1179, %v1191
        %v1194 = vmul.f32 %v1192, %v1192
        %v1195 = vmul.f32 %v1193, %v1193
        %v1196 = vsel %vm1182, %v1194, 0.0
        %1197 = vadd.xlane.f32.xlu0 %v1196
        %v1198 = vpop.xlane.xlu0 %1197
        %v1199 = vsel %vm1182, %v1195, 0.0
        %1200 = vadd.xlane.f32.xlu0 %v1199
        %v1201 = vpop.xlane.xlu0 %1200
        %v1202 = vmul.f32 %v1198, 0.032258064
        %v1203 = vmul.f32 %v1201, 0.032258064
        %v1205 = vlaneseq
        %v1206 = vshrl.u32 %v1205, 7
        %v1207 = vsub.s32 0, %v1206
        %v1208 = vrot.slane %v1180, %v1207
        %v1210 = vmul.f32 %v1208, %v1192
        %v1211 = vmul.f32 %v1208, %v1193
        %v1212 = vrsqrt.pop %v1202
        %v1213 = vmul.f32 %v1202, %v1212
        %vm1214 = vcmp.eq.f32.partialorder %v1202, inf
        %v1215 = vsel %vm1214, %v1202, %v1213
        %vm1216 = vcmp.eq.f32.partialorder %v1202, 0.0
        %v1217 = vand.u32 %v1202, 2147483648
        %v1218 = vsel %vm1216, %v1217, %v1215
        %v1219 = vrsqrt.pop %v1203
        %v1220 = vmul.f32 %v1203, %v1219
        %vm1221 = vcmp.eq.f32.partialorder %v1203, inf
        %v1222 = vsel %vm1221, %v1203, %v1220
        %vm1223 = vcmp.eq.f32.partialorder %v1203, 0.0
        %v1224 = vand.u32 %v1203, 2147483648
        %v1225 = vsel %vm1223, %v1224, %v1222
        %v1226 = vadd.f32 %v1218, 1e-06
        %v1227 = vadd.f32 %v1225, 1e-06
        %v1228 = vrcp.pop %v1226
        %v1229 = vmul.f32 %v1210, %v1228
        %v1230 = vrcp.pop %v1227
        %v1231 = vmul.f32 %v1211, %v1230
        %v1233 = vlaneseq
        %v1234 = vshrl.u32 %v1233, 7
        %v1235 = vsub.s32 0, %v1234
        %v1236 = vrot.slane %v1181, %v1235
        %v1238 = vadd.f32 %v1229, %v1236
        %v1239 = vadd.f32 %v1231, %v1236
        %v1240 = vld [vmem:[%s2] sm:$0xff]
        %v1241 = vld [vmem:[%s2 + $0x8] sm:$0xff]
        %v1242 = vld [vmem:[%s1096] sm:$0xf]
        %v1243 = vld [vmem:[%s1096 + $0x4] sm:$0xf]
        %v1244 = vld [vmem:[%s1096 + $0x8] sm:$0xf]
        %v1245 = vld [vmem:[%s1096 + $0xc] sm:$0xf]
        %v1246 = vld [vmem:[%s1099] sm:$0x1]
        %v1247 = vld [vmem:[%s1104] sm:$0xf]
        %v1248 = vld [vmem:[%s1104 + $0x4] sm:$0xf]
        %v1249 = vld [vmem:[%s1104 + $0x8] sm:$0xf]
        %v1250 = vld [vmem:[%s1104 + $0xc] sm:$0xf]
        %v1251 = vld [vmem:[%s1107] sm:$0x1]
        %v1252 = vld [vmem:[%s1112] sm:$0xf]
        %v1253 = vld [vmem:[%s1112 + $0x4] sm:$0xf]
        %v1254 = vld [vmem:[%s1112 + $0x8] sm:$0xf]
        %v1255 = vld [vmem:[%s1112 + $0xc] sm:$0xf]
        %v1256 = vld [vmem:[%s1115] sm:$0x1]
        %v1257 = vpack.c.bf16 %v1239, %v1238
        %v1259 = vlaneseq
        %v1260 = vshrl.u32 %v1259, 7
        %v1261 = vsub.s32 0, %v1260
        %v1262 = vrot.slane %v1246, %v1261
        %v1268 = vunpack.c.l.b16 %v1242
        %v1269 = vunpack.c.l.b16 %v1243
        %v1270 = vunpack.c.l.b16 %v1244
        %v1271 = vunpack.c.l.b16 %v1245
        %v1272 = vpack.c.b16 %v1269, %v1268
        %v1273 = vpack.c.b16 %v1271, %v1270
        %v1277 = vsel %vm1182, %v1257, 0
        %1279 = vmatprep.subr.bf16.mxu0 0
        %1280 = vmatpush1.bf16.msra.mxu0 %v1272
        %1281 = vmatprep.subr.bf16.mxu0 0
        %1282 = vmatpush1.bf16.msra.mxu0 %v1273
        %1283 = vmatprep.subr.bf16.mxu0 0
        %1284 = vmatpush1.bf16.msra.mxu0 0
        %1285 = vmatprep.subr.bf16.mxu0 0
        %1286 = vmatpush1.bf16.msra.mxu0 0
        %1287 = vmatprep.subr.bf16.mxu0 0
        %1288 = vmatpush1.bf16.msra.mxu0 0
        %1289 = vmatprep.subr.bf16.mxu0 0
        %1290 = vmatpush1.bf16.msra.mxu0 0
        %1291 = vmatprep.subr.bf16.mxu0 0
        %1292 = vmatpush1.bf16.msra.mxu0 0
        %1293 = vmatprep.subr.bf16.mxu0 0
        %1294 = vmatpush1.bf16.msra.mxu0 0
        %1295 = vmatprep.subr.bf16.mxu0 0
        %1296 = vmatpush1.bf16.msra.mxu0 0
        %1297 = vmatprep.subr.bf16.mxu0 0
        %1298 = vmatpush1.bf16.msra.mxu0 0
        %1299 = vmatprep.subr.bf16.mxu0 0
        %1300 = vmatpush1.bf16.msra.mxu0 0
        %1301 = vmatprep.subr.bf16.mxu0 0
        %1302 = vmatpush1.bf16.msra.mxu0 0
        %1303 = vmatprep.subr.bf16.mxu0 0
        %1304 = vmatpush1.bf16.msra.mxu0 0
        %1305 = vmatprep.subr.bf16.mxu0 0
        %1306 = vmatpush1.bf16.msra.mxu0 0
        %1307 = vmatprep.subr.bf16.mxu0 0
        %1308 = vmatpush1.bf16.msra.mxu0 0
        %1309 = vmatprep.subr.bf16.mxu0 0
        %1310 = vmatpush1.bf16.msra.mxu0 0
        %1311 = vmatprep.mubr.bf16.mxu0 0
        %1312 = vmatmul.mubr.bf16.gmra.mrb[0].mxu0 %v1277
        %v1313 = vpop.f32.mrb[0].mxu0
        %v1314 = vadd.f32 %v1262, %v1313
        %v1315 = vpop.f32.mrb[0].mxu0
        %v1316 = vpop.f32.mrb[0].mxu0
        %v1317 = vadd.f32 %v1262, %v1316
        %v1318 = vpop.f32.mrb[0].mxu0
        %1319 = vdwg.mxu0
        %v1321 = vlaneseq
        %v1322 = vshrl.u32 %v1321, 7
        %v1323 = vsub.s32 0, %v1322
        %v1324 = vrot.slane %v1251, %v1323
        %v1330 = vunpack.c.l.b16 %v1247
        %v1331 = vunpack.c.l.b16 %v1248
        %v1332 = vunpack.c.l.b16 %v1249
        %v1333 = vunpack.c.l.b16 %v1250
        %v1334 = vpack.c.b16 %v1331, %v1330
        %v1335 = vpack.c.b16 %v1333, %v1332
        %1338 = vmatprep.subr.bf16.mxu0 0
        %1339 = vmatpush1.bf16.msra.mxu0 %v1334
        %1340 = vmatprep.subr.bf16.mxu0 0
        %1341 = vmatpush1.bf16.msra.mxu0 %v1335
        %1342 = vmatprep.subr.bf16.mxu0 0
        %1343 = vmatpush1.bf16.msra.mxu0 0
        %1344 = vmatprep.subr.bf16.mxu0 0
        %1345 = vmatpush1.bf16.msra.mxu0 0
        %1346 = vmatprep.subr.bf16.mxu0 0
        %1347 = vmatpush1.bf16.msra.mxu0 0
        %1348 = vmatprep.subr.bf16.mxu0 0
        %1349 = vmatpush1.bf16.msra.mxu0 0
        %1350 = vmatprep.subr.bf16.mxu0 0
        %1351 = vmatpush1.bf16.msra.mxu0 0
        %1352 = vmatprep.subr.bf16.mxu0 0
        %1353 = vmatpush1.bf16.msra.mxu0 0
        %1354 = vmatprep.subr.bf16.mxu0 0
        %1355 = vmatpush1.bf16.msra.mxu0 0
        %1356 = vmatprep.subr.bf16.mxu0 0
        %1357 = vmatpush1.bf16.msra.mxu0 0
        %1358 = vmatprep.subr.bf16.mxu0 0
        %1359 = vmatpush1.bf16.msra.mxu0 0
        %1360 = vmatprep.subr.bf16.mxu0 0
        %1361 = vmatpush1.bf16.msra.mxu0 0
        %1362 = vmatprep.subr.bf16.mxu0 0
        %1363 = vmatpush1.bf16.msra.mxu0 0
        %1364 = vmatprep.subr.bf16.mxu0 0
        %1365 = vmatpush1.bf16.msra.mxu0 0
        %1366 = vmatprep.subr.bf16.mxu0 0
        %1367 = vmatpush1.bf16.msra.mxu0 0
        %1368 = vmatprep.subr.bf16.mxu0 0
        %1369 = vmatpush1.bf16.msra.mxu0 0
        %1370 = vmatprep.mubr.bf16.mxu0 0
        %1371 = vmatmul.mubr.bf16.gmra.mrb[0].mxu0 %v1277
        %v1372 = vpop.f32.mrb[0].mxu0
        %v1373 = vadd.f32 %v1324, %v1372
        %v1374 = vpop.f32.mrb[0].mxu0
        %v1375 = vpop.f32.mrb[0].mxu0
        %v1376 = vadd.f32 %v1324, %v1375
        %v1377 = vpop.f32.mrb[0].mxu0
        %1378 = vdwg.mxu0
        %1381 = vrot.lane.b32.xlu0 %v1314, 120
        %v1382 = vpop.permute.xlu0 %1381
        %1383 = vrot.lane.b32.xlu0 %v1317, 120
        %v1384 = vpop.permute.xlu0 %1383
        %1387 = vrot.lane.b32.xlu0 %v1314, 112
        %v1388 = vpop.permute.xlu0 %1387
        %1389 = vrot.lane.b32.xlu0 %v1317, 112
        %v1390 = vpop.permute.xlu0 %1389
        %1393 = vrot.lane.b32.xlu0 %v1314, 104
        %v1394 = vpop.permute.xlu0 %1393
        %1395 = vrot.lane.b32.xlu0 %v1317, 104
        %v1396 = vpop.permute.xlu0 %1395
        %v1399 = vpack.c.bf16 %v1317, %v1314
        %v1400 = vpack.c.bf16 %v1384, %v1382
        %v1401 = vpack.c.bf16 %v1390, %v1388
        %v1402 = vpack.c.bf16 %v1396, %v1394
        %1405 = vrot.lane.b32.xlu0 %v1373, 120
        %v1406 = vpop.permute.xlu0 %1405
        %1407 = vrot.lane.b32.xlu0 %v1376, 120
        %v1408 = vpop.permute.xlu0 %1407
        %1411 = vrot.lane.b32.xlu0 %v1373, 112
        %v1412 = vpop.permute.xlu0 %1411
        %1413 = vrot.lane.b32.xlu0 %v1376, 112
        %v1414 = vpop.permute.xlu0 %1413
        %1417 = vrot.lane.b32.xlu0 %v1373, 104
        %v1418 = vpop.permute.xlu0 %1417
        %1419 = vrot.lane.b32.xlu0 %v1376, 104
        %v1420 = vpop.permute.xlu0 %1419
        %v1423 = vpack.c.bf16 %v1376, %v1373
        %v1424 = vpack.c.bf16 %v1408, %v1406
        %v1425 = vpack.c.bf16 %v1414, %v1412
        %v1426 = vpack.c.bf16 %v1420, %v1418
        %vm1427 = vcmask 64512
        %v1429 = vsel %vm1427, %v1399, 0
        %v1432 = vsel %vm1427, %v1423, 0
        %1434 = vmatprep.subr.bf16.mxu0 0
        %1435 = vmatpush1.bf16.xpose.msra.mxu0 %v1432
        %1436 = vmatprep.subr.bf16.mxu0 0
        %1437 = vmatpush1.bf16.xpose.msra.mxu0 0
        %1438 = vmatprep.subr.bf16.mxu0 0
        %1439 = vmatpush1.bf16.xpose.msra.mxu0 0
        %1440 = vmatprep.subr.bf16.mxu0 0
        %1441 = vmatpush1.bf16.xpose.msra.mxu0 0
        %1442 = vmatprep.subr.bf16.mxu0 0
        %1443 = vmatpush1.bf16.xpose.msra.mxu0 0
        %1444 = vmatprep.subr.bf16.mxu0 0
        %1445 = vmatpush1.bf16.xpose.msra.mxu0 0
        %1446 = vmatprep.subr.bf16.mxu0 0
        %1447 = vmatpush1.bf16.xpose.msra.mxu0 0
        %1448 = vmatprep.subr.bf16.mxu0 0
        %1449 = vmatpush1.bf16.xpose.msra.mxu0 0
        %1450 = vmatprep.subr.bf16.mxu0 0
        %1451 = vmatpush1.bf16.xpose.msra.mxu0 0
        %1452 = vmatprep.subr.bf16.mxu0 0
        %1453 = vmatpush1.bf16.xpose.msra.mxu0 0
        %1454 = vmatprep.subr.bf16.mxu0 0
        %1455 = vmatpush1.bf16.xpose.msra.mxu0 0
        %1456 = vmatprep.subr.bf16.mxu0 0
        %1457 = vmatpush1.bf16.xpose.msra.mxu0 0
        %1458 = vmatprep.subr.bf16.mxu0 0
        %1459 = vmatpush1.bf16.xpose.msra.mxu0 0
        %1460 = vmatprep.subr.bf16.mxu0 0
        %1461 = vmatpush1.bf16.xpose.msra.mxu0 0
        %1462 = vmatprep.subr.bf16.mxu0 0
        %1463 = vmatpush1.bf16.xpose.msra.mxu0 0
        %1464 = vmatprep.subr.bf16.mxu0 0
        %1465 = vmatpush1.bf16.xpose.msra.mxu0 0
        %1466 = vmatprep.mubr.bf16.mxu0 0
        %1467 = vmatmul.mubr.bf16.gmra.mrb[0].mxu0 %v1429
        %v1468 = vpop.f32.mrb[0].mxu0
        %v1469 = vadd.f32 0.0, %v1468
        %v1470 = vpop.f32.mrb[0].mxu0
        %v1471 = vpop.f32.mrb[0].mxu0
        %v1472 = vadd.f32 0.0, %v1471
        %v1473 = vpop.f32.mrb[0].mxu0
        %1474 = vdwg.mxu0
        %v1476 = vsel %vm1427, %v1400, 0
        %v1479 = vsel %vm1427, %v1424, 0
        %1481 = vmatprep.subr.bf16.mxu0 0
        %1482 = vmatpush1.bf16.xpose.msra.mxu0 %v1479
        %1483 = vmatprep.subr.bf16.mxu0 0
        %1484 = vmatpush1.bf16.xpose.msra.mxu0 0
        %1485 = vmatprep.subr.bf16.mxu0 0
        %1486 = vmatpush1.bf16.xpose.msra.mxu0 0
        %1487 = vmatprep.subr.bf16.mxu0 0
        %1488 = vmatpush1.bf16.xpose.msra.mxu0 0
        %1489 = vmatprep.subr.bf16.mxu0 0
        %1490 = vmatpush1.bf16.xpose.msra.mxu0 0
        %1491 = vmatprep.subr.bf16.mxu0 0
        %1492 = vmatpush1.bf16.xpose.msra.mxu0 0
        %1493 = vmatprep.subr.bf16.mxu0 0
        %1494 = vmatpush1.bf16.xpose.msra.mxu0 0
        %1495 = vmatprep.subr.bf16.mxu0 0
        %1496 = vmatpush1.bf16.xpose.msra.mxu0 0
        %1497 = vmatprep.subr.bf16.mxu0 0
        %1498 = vmatpush1.bf16.xpose.msra.mxu0 0
        %1499 = vmatprep.subr.bf16.mxu0 0
        %1500 = vmatpush1.bf16.xpose.msra.mxu0 0
        %1501 = vmatprep.subr.bf16.mxu0 0
        %1502 = vmatpush1.bf16.xpose.msra.mxu0 0
        %1503 = vmatprep.subr.bf16.mxu0 0
        %1504 = vmatpush1.bf16.xpose.msra.mxu0 0
        %1505 = vmatprep.subr.bf16.mxu0 0
        %1506 = vmatpush1.bf16.xpose.msra.mxu0 0
        %1507 = vmatprep.subr.bf16.mxu0 0
        %1508 = vmatpush1.bf16.xpose.msra.mxu0 0
        %1509 = vmatprep.subr.bf16.mxu0 0
        %1510 = vmatpush1.bf16.xpose.msra.mxu0 0
        %1511 = vmatprep.subr.bf16.mxu0 0
        %1512 = vmatpush1.bf16.xpose.msra.mxu0 0
        %1513 = vmatprep.mubr.bf16.mxu0 0
        %1514 = vmatmul.mubr.bf16.gmra.mrb[0].mxu0 %v1476
        %v1515 = vpop.f32.mrb[0].mxu0
        %v1516 = vadd.f32 0.0, %v1515
        %v1517 = vpop.f32.mrb[0].mxu0
        %v1518 = vpop.f32.mrb[0].mxu0
        %v1519 = vadd.f32 0.0, %v1518
        %v1520 = vpop.f32.mrb[0].mxu0
        %1521 = vdwg.mxu0
        %v1523 = vsel %vm1427, %v1401, 0
        %v1526 = vsel %vm1427, %v1425, 0
        %1528 = vmatprep.subr.bf16.mxu0 0
        %1529 = vmatpush1.bf16.xpose.msra.mxu0 %v1526
        %1530 = vmatprep.subr.bf16.mxu0 0
        %1531 = vmatpush1.bf16.xpose.msra.mxu0 0
        %1532 = vmatprep.subr.bf16.mxu0 0
        %1533 = vmatpush1.bf16.xpose.msra.mxu0 0
        %1534 = vmatprep.subr.bf16.mxu0 0
        %1535 = vmatpush1.bf16.xpose.msra.mxu0 0
        %1536 = vmatprep.subr.bf16.mxu0 0
        %1537 = vmatpush1.bf16.xpose.msra.mxu0 0
        %1538 = vmatprep.subr.bf16.mxu0 0
        %1539 = vmatpush1.bf16.xpose.msra.mxu0 0
        %1540 = vmatprep.subr.bf16.mxu0 0
        %1541 = vmatpush1.bf16.xpose.msra.mxu0 0
        %1542 = vmatprep.subr.bf16.mxu0 0
        %1543 = vmatpush1.bf16.xpose.msra.mxu0 0
        %1544 = vmatprep.subr.bf16.mxu0 0
        %1545 = vmatpush1.bf16.xpose.msra.mxu0 0
        %1546 = vmatprep.subr.bf16.mxu0 0
        %1547 = vmatpush1.bf16.xpose.msra.mxu0 0
        %1548 = vmatprep.subr.bf16.mxu0 0
        %1549 = vmatpush1.bf16.xpose.msra.mxu0 0
        %1550 = vmatprep.subr.bf16.mxu0 0
        %1551 = vmatpush1.bf16.xpose.msra.mxu0 0
        %1552 = vmatprep.subr.bf16.mxu0 0
        %1553 = vmatpush1.bf16.xpose.msra.mxu0 0
        %1554 = vmatprep.subr.bf16.mxu0 0
        %1555 = vmatpush1.bf16.xpose.msra.mxu0 0
        %1556 = vmatprep.subr.bf16.mxu0 0
        %1557 = vmatpush1.bf16.xpose.msra.mxu0 0
        %1558 = vmatprep.subr.bf16.mxu0 0
        %1559 = vmatpush1.bf16.xpose.msra.mxu0 0
        %1560 = vmatprep.mubr.bf16.mxu0 0
        %1561 = vmatmul.mubr.bf16.gmra.mrb[0].mxu0 %v1523
        %v1562 = vpop.f32.mrb[0].mxu0
        %v1563 = vadd.f32 0.0, %v1562
        %v1564 = vpop.f32.mrb[0].mxu0
        %v1565 = vpop.f32.mrb[0].mxu0
        %v1566 = vadd.f32 0.0, %v1565
        %v1567 = vpop.f32.mrb[0].mxu0
        %1568 = vdwg.mxu0
        %v1570 = vsel %vm1427, %v1402, 0
        %v1573 = vsel %vm1427, %v1426, 0
        %1575 = vmatprep.subr.bf16.mxu0 0
        %1576 = vmatpush1.bf16.xpose.msra.mxu0 %v1573
        %1577 = vmatprep.subr.bf16.mxu0 0
        %1578 = vmatpush1.bf16.xpose.msra.mxu0 0
        %1579 = vmatprep.subr.bf16.mxu0 0
        %1580 = vmatpush1.bf16.xpose.msra.mxu0 0
        %1581 = vmatprep.subr.bf16.mxu0 0
        %1582 = vmatpush1.bf16.xpose.msra.mxu0 0
        %1583 = vmatprep.subr.bf16.mxu0 0
        %1584 = vmatpush1.bf16.xpose.msra.mxu0 0
        %1585 = vmatprep.subr.bf16.mxu0 0
        %1586 = vmatpush1.bf16.xpose.msra.mxu0 0
        %1587 = vmatprep.subr.bf16.mxu0 0
        %1588 = vmatpush1.bf16.xpose.msra.mxu0 0
        %1589 = vmatprep.subr.bf16.mxu0 0
        %1590 = vmatpush1.bf16.xpose.msra.mxu0 0
        %1591 = vmatprep.subr.bf16.mxu0 0
        %1592 = vmatpush1.bf16.xpose.msra.mxu0 0
        %1593 = vmatprep.subr.bf16.mxu0 0
        %1594 = vmatpush1.bf16.xpose.msra.mxu0 0
        %1595 = vmatprep.subr.bf16.mxu0 0
        %1596 = vmatpush1.bf16.xpose.msra.mxu0 0
        %1597 = vmatprep.subr.bf16.mxu0 0
        %1598 = vmatpush1.bf16.xpose.msra.mxu0 0
        %1599 = vmatprep.subr.bf16.mxu0 0
        %1600 = vmatpush1.bf16.xpose.msra.mxu0 0
        %1601 = vmatprep.subr.bf16.mxu0 0
        %1602 = vmatpush1.bf16.xpose.msra.mxu0 0
        %1603 = vmatprep.subr.bf16.mxu0 0
        %1604 = vmatpush1.bf16.xpose.msra.mxu0 0
        %1605 = vmatprep.subr.bf16.mxu0 0
        %1606 = vmatpush1.bf16.xpose.msra.mxu0 0
        %1607 = vmatprep.mubr.bf16.mxu0 0
        %1608 = vmatmul.mubr.bf16.gmra.mrb[0].mxu0 %v1570
        %v1609 = vpop.f32.mrb[0].mxu0
        %v1610 = vadd.f32 0.0, %v1609
        %v1611 = vpop.f32.mrb[0].mxu0
        %v1612 = vpop.f32.mrb[0].mxu0
        %v1613 = vadd.f32 0.0, %v1612
        %v1614 = vpop.f32.mrb[0].mxu0
        %1615 = vdwg.mxu0
        %v1616 = vmul.f32 %v1469, 0.35355338
        %v1617 = vmul.f32 %v1472, 0.35355338
        %v1618 = vmul.f32 %v1516, 0.35355338
        %v1619 = vmul.f32 %v1519, 0.35355338
        %v1620 = vmul.f32 %v1563, 0.35355338
        %v1621 = vmul.f32 %v1566, 0.35355338
        %v1622 = vmul.f32 %v1610, 0.35355338
        %v1623 = vmul.f32 %v1613, 0.35355338
        %v1624 = vadd.f32 %v1616, %v1240
        %v1625 = vadd.f32 %v1617, %v1241
        %v1626 = vadd.f32 %v1618, %v1240
        %v1627 = vadd.f32 %v1619, %v1241
        %v1628 = vadd.f32 %v1620, %v1240
        %v1629 = vadd.f32 %v1621, %v1241
        %v1630 = vadd.f32 %v1622, %v1240
        %v1631 = vadd.f32 %v1623, %v1241
        %vm1632 = vcmask 130048
        %v1633 = vsel %vm1632, %v1624, -inf
        %1634 = vmax.xlane.f32.xlu0 %v1633
        %v1635 = vpop.xlane.xlu0 %1634
        %v1636 = vsel %vm1632, %v1625, -inf
        %1637 = vmax.xlane.f32.xlu0 %v1636
        %v1638 = vpop.xlane.xlu0 %1637
        %v1639 = vsel %vm1632, %v1626, -inf
        %1640 = vmax.xlane.f32.xlu0 %v1639
        %v1641 = vpop.xlane.xlu0 %1640
        %v1642 = vsel %vm1632, %v1627, -inf
        %1643 = vmax.xlane.f32.xlu0 %v1642
        %v1644 = vpop.xlane.xlu0 %1643
        %v1645 = vsel %vm1632, %v1628, -inf
        %1646 = vmax.xlane.f32.xlu0 %v1645
        %v1647 = vpop.xlane.xlu0 %1646
        %v1648 = vsel %vm1632, %v1629, -inf
        %1649 = vmax.xlane.f32.xlu0 %v1648
        %v1650 = vpop.xlane.xlu0 %1649
        %v1651 = vsel %vm1632, %v1630, -inf
        %1652 = vmax.xlane.f32.xlu0 %v1651
        %v1653 = vpop.xlane.xlu0 %1652
        %v1654 = vsel %vm1632, %v1631, -inf
        %1655 = vmax.xlane.f32.xlu0 %v1654
        %v1656 = vpop.xlane.xlu0 %1655
        %v1657 = vsub.f32 %v1624, %v1635
        %v1658 = vsub.f32 %v1625, %v1638
        %v1659 = vsub.f32 %v1626, %v1641
        %v1660 = vsub.f32 %v1627, %v1644
        %v1661 = vsub.f32 %v1628, %v1647
        %v1662 = vsub.f32 %v1629, %v1650
        %v1663 = vsub.f32 %v1630, %v1653
        %v1664 = vsub.f32 %v1631, %v1656
        %v1665 = vmul.f32 %v1657, 1.442695
        %v1666 = vpow.pop %v1665
        %v1667 = vmul.f32 %v1658, 1.442695
        %v1668 = vpow.pop %v1667
        %v1669 = vmul.f32 %v1659, 1.442695
        %v1670 = vpow.pop %v1669
        %v1671 = vmul.f32 %v1660, 1.442695
        %v1672 = vpow.pop %v1671
        %v1673 = vmul.f32 %v1661, 1.442695
        %v1674 = vpow.pop %v1673
        %v1675 = vmul.f32 %v1662, 1.442695
        %v1676 = vpow.pop %v1675
        %v1677 = vmul.f32 %v1663, 1.442695
        %v1678 = vpow.pop %v1677
        %v1679 = vmul.f32 %v1664, 1.442695
        %v1680 = vpow.pop %v1679
        %v1681 = vsel %vm1632, %v1666, 0.0
        %1682 = vadd.xlane.f32.xlu0 %v1681
        %v1683 = vpop.xlane.xlu0 %1682
        %v1684 = vsel %vm1632, %v1668, 0.0
        %1685 = vadd.xlane.f32.xlu0 %v1684
        %v1686 = vpop.xlane.xlu0 %1685
        %v1687 = vsel %vm1632, %v1670, 0.0
        %1688 = vadd.xlane.f32.xlu0 %v1687
        %v1689 = vpop.xlane.xlu0 %1688
        %v1690 = vsel %vm1632, %v1672, 0.0
        %1691 = vadd.xlane.f32.xlu0 %v1690
        %v1692 = vpop.xlane.xlu0 %1691
        %v1693 = vsel %vm1632, %v1674, 0.0
        %1694 = vadd.xlane.f32.xlu0 %v1693
        %v1695 = vpop.xlane.xlu0 %1694
        %v1696 = vsel %vm1632, %v1676, 0.0
        %1697 = vadd.xlane.f32.xlu0 %v1696
        %v1698 = vpop.xlane.xlu0 %1697
        %v1699 = vsel %vm1632, %v1678, 0.0
        %1700 = vadd.xlane.f32.xlu0 %v1699
        %v1701 = vpop.xlane.xlu0 %1700
        %v1702 = vsel %vm1632, %v1680, 0.0
        %1703 = vadd.xlane.f32.xlu0 %v1702
        %v1704 = vpop.xlane.xlu0 %1703
        %v1705 = vrcp.pop %v1683
        %v1706 = vmul.f32 %v1666, %v1705
        %v1707 = vrcp.pop %v1686
        %v1708 = vmul.f32 %v1668, %v1707
        %v1709 = vrcp.pop %v1689
        %v1710 = vmul.f32 %v1670, %v1709
        %v1711 = vrcp.pop %v1692
        %v1712 = vmul.f32 %v1672, %v1711
        %v1713 = vrcp.pop %v1695
        %v1714 = vmul.f32 %v1674, %v1713
        %v1715 = vrcp.pop %v1698
        %v1716 = vmul.f32 %v1676, %v1715
        %v1717 = vrcp.pop %v1701
        %v1718 = vmul.f32 %v1678, %v1717
        %v1719 = vrcp.pop %v1704
        %v1720 = vmul.f32 %v1680, %v1719
        %v1721 = vpack.c.bf16 %v1708, %v1706
        %v1722 = vpack.c.bf16 %v1712, %v1710
        %v1723 = vpack.c.bf16 %v1716, %v1714
        %v1724 = vpack.c.bf16 %v1720, %v1718
        %1726 = vrot.lane.b32.xlu0 %v1423, 96
        %v1727 = vpop.permute.xlu0 %1726
        %v1730 = vsel %vm1632, %v1721, 0
        %1732 = vmatprep.subr.bf16.mxu0 0
        %1733 = vmatpush1.bf16.msra.mxu0 %v1727
        %1734 = vmatprep.subr.bf16.mxu0 0
        %1735 = vmatpush1.bf16.msra.mxu0 0
        %1736 = vmatprep.subr.bf16.mxu0 0
        %1737 = vmatpush1.bf16.msra.mxu0 0
        %1738 = vmatprep.subr.bf16.mxu0 0
        %1739 = vmatpush1.bf16.msra.mxu0 0
        %1740 = vmatprep.subr.bf16.mxu0 0
        %1741 = vmatpush1.bf16.msra.mxu0 0
        %1742 = vmatprep.subr.bf16.mxu0 0
        %1743 = vmatpush1.bf16.msra.mxu0 0
        %1744 = vmatprep.subr.bf16.mxu0 0
        %1745 = vmatpush1.bf16.msra.mxu0 0
        %1746 = vmatprep.subr.bf16.mxu0 0
        %1747 = vmatpush1.bf16.msra.mxu0 0
        %1748 = vmatprep.subr.bf16.mxu0 0
        %1749 = vmatpush1.bf16.msra.mxu0 0
        %1750 = vmatprep.subr.bf16.mxu0 0
        %1751 = vmatpush1.bf16.msra.mxu0 0
        %1752 = vmatprep.subr.bf16.mxu0 0
        %1753 = vmatpush1.bf16.msra.mxu0 0
        %1754 = vmatprep.subr.bf16.mxu0 0
        %1755 = vmatpush1.bf16.msra.mxu0 0
        %1756 = vmatprep.subr.bf16.mxu0 0
        %1757 = vmatpush1.bf16.msra.mxu0 0
        %1758 = vmatprep.subr.bf16.mxu0 0
        %1759 = vmatpush1.bf16.msra.mxu0 0
        %1760 = vmatprep.subr.bf16.mxu0 0
        %1761 = vmatpush1.bf16.msra.mxu0 0
        %1762 = vmatprep.subr.bf16.mxu0 0
        %1763 = vmatpush1.bf16.msra.mxu0 0
        %1764 = vmatprep.mubr.bf16.mxu0 0
        %1765 = vmatmul.mubr.bf16.gmra.mrb[0].mxu0 %v1730
        %v1766 = vpop.f32.mrb[0].mxu0
        %v1767 = vadd.f32 0.0, %v1766
        %v1768 = vpop.f32.mrb[0].mxu0
        %v1769 = vpop.f32.mrb[0].mxu0
        %v1770 = vadd.f32 0.0, %v1769
        %v1771 = vpop.f32.mrb[0].mxu0
        %1772 = vdwg.mxu0
        %1774 = vrot.lane.b32.xlu0 %v1424, 96
        %v1775 = vpop.permute.xlu0 %1774
        %v1778 = vsel %vm1632, %v1722, 0
        %1780 = vmatprep.subr.bf16.mxu0 0
        %1781 = vmatpush1.bf16.msra.mxu0 %v1775
        %1782 = vmatprep.subr.bf16.mxu0 0
        %1783 = vmatpush1.bf16.msra.mxu0 0
        %1784 = vmatprep.subr.bf16.mxu0 0
        %1785 = vmatpush1.bf16.msra.mxu0 0
        %1786 = vmatprep.subr.bf16.mxu0 0
        %1787 = vmatpush1.bf16.msra.mxu0 0
        %1788 = vmatprep.subr.bf16.mxu0 0
        %1789 = vmatpush1.bf16.msra.mxu0 0
        %1790 = vmatprep.subr.bf16.mxu0 0
        %1791 = vmatpush1.bf16.msra.mxu0 0
        %1792 = vmatprep.subr.bf16.mxu0 0
        %1793 = vmatpush1.bf16.msra.mxu0 0
        %1794 = vmatprep.subr.bf16.mxu0 0
        %1795 = vmatpush1.bf16.msra.mxu0 0
        %1796 = vmatprep.subr.bf16.mxu0 0
        %1797 = vmatpush1.bf16.msra.mxu0 0
        %1798 = vmatprep.subr.bf16.mxu0 0
        %1799 = vmatpush1.bf16.msra.mxu0 0
        %1800 = vmatprep.subr.bf16.mxu0 0
        %1801 = vmatpush1.bf16.msra.mxu0 0
        %1802 = vmatprep.subr.bf16.mxu0 0
        %1803 = vmatpush1.bf16.msra.mxu0 0
        %1804 = vmatprep.subr.bf16.mxu0 0
        %1805 = vmatpush1.bf16.msra.mxu0 0
        %1806 = vmatprep.subr.bf16.mxu0 0
        %1807 = vmatpush1.bf16.msra.mxu0 0
        %1808 = vmatprep.subr.bf16.mxu0 0
        %1809 = vmatpush1.bf16.msra.mxu0 0
        %1810 = vmatprep.subr.bf16.mxu0 0
        %1811 = vmatpush1.bf16.msra.mxu0 0
        %1812 = vmatprep.mubr.bf16.mxu0 0
        %1813 = vmatmul.mubr.bf16.gmra.mrb[0].mxu0 %v1778
        %v1814 = vpop.f32.mrb[0].mxu0
        %v1815 = vadd.f32 0.0, %v1814
        %v1816 = vpop.f32.mrb[0].mxu0
        %v1817 = vpop.f32.mrb[0].mxu0
        %v1818 = vadd.f32 0.0, %v1817
        %v1819 = vpop.f32.mrb[0].mxu0
        %1820 = vdwg.mxu0
        %1822 = vrot.lane.b32.xlu0 %v1425, 96
        %v1823 = vpop.permute.xlu0 %1822
        %v1826 = vsel %vm1632, %v1723, 0
        %1828 = vmatprep.subr.bf16.mxu0 0
        %1829 = vmatpush1.bf16.msra.mxu0 %v1823
        %1830 = vmatprep.subr.bf16.mxu0 0
        %1831 = vmatpush1.bf16.msra.mxu0 0
        %1832 = vmatprep.subr.bf16.mxu0 0
        %1833 = vmatpush1.bf16.msra.mxu0 0
        %1834 = vmatprep.subr.bf16.mxu0 0
        %1835 = vmatpush1.bf16.msra.mxu0 0
        %1836 = vmatprep.subr.bf16.mxu0 0
        %1837 = vmatpush1.bf16.msra.mxu0 0
        %1838 = vmatprep.subr.bf16.mxu0 0
        %1839 = vmatpush1.bf16.msra.mxu0 0
        %1840 = vmatprep.subr.bf16.mxu0 0
        %1841 = vmatpush1.bf16.msra.mxu0 0
        %1842 = vmatprep.subr.bf16.mxu0 0
        %1843 = vmatpush1.bf16.msra.mxu0 0
        %1844 = vmatprep.subr.bf16.mxu0 0
        %1845 = vmatpush1.bf16.msra.mxu0 0
        %1846 = vmatprep.subr.bf16.mxu0 0
        %1847 = vmatpush1.bf16.msra.mxu0 0
        %1848 = vmatprep.subr.bf16.mxu0 0
        %1849 = vmatpush1.bf16.msra.mxu0 0
        %1850 = vmatprep.subr.bf16.mxu0 0
        %1851 = vmatpush1.bf16.msra.mxu0 0
        %1852 = vmatprep.subr.bf16.mxu0 0
        %1853 = vmatpush1.bf16.msra.mxu0 0
        %1854 = vmatprep.subr.bf16.mxu0 0
        %1855 = vmatpush1.bf16.msra.mxu0 0
        %1856 = vmatprep.subr.bf16.mxu0 0
        %1857 = vmatpush1.bf16.msra.mxu0 0
        %1858 = vmatprep.subr.bf16.mxu0 0
        %1859 = vmatpush1.bf16.msra.mxu0 0
        %1860 = vmatprep.mubr.bf16.mxu0 0
        %1861 = vmatmul.mubr.bf16.gmra.mrb[0].mxu0 %v1826
        %v1862 = vpop.f32.mrb[0].mxu0
        %v1863 = vadd.f32 0.0, %v1862
        %v1864 = vpop.f32.mrb[0].mxu0
        %v1865 = vpop.f32.mrb[0].mxu0
        %v1866 = vadd.f32 0.0, %v1865
        %v1867 = vpop.f32.mrb[0].mxu0
        %1868 = vdwg.mxu0
        %1870 = vrot.lane.b32.xlu0 %v1426, 96
        %v1871 = vpop.permute.xlu0 %1870
        %v1874 = vsel %vm1632, %v1724, 0
        %1876 = vmatprep.subr.bf16.mxu0 0
        %1877 = vmatpush1.bf16.msra.mxu0 %v1871
        %1878 = vmatprep.subr.bf16.mxu0 0
        %1879 = vmatpush1.bf16.msra.mxu0 0
        %1880 = vmatprep.subr.bf16.mxu0 0
        %1881 = vmatpush1.bf16.msra.mxu0 0
        %1882 = vmatprep.subr.bf16.mxu0 0
        %1883 = vmatpush1.bf16.msra.mxu0 0
        %1884 = vmatprep.subr.bf16.mxu0 0
        %1885 = vmatpush1.bf16.msra.mxu0 0
        %1886 = vmatprep.subr.bf16.mxu0 0
        %1887 = vmatpush1.bf16.msra.mxu0 0
        %1888 = vmatprep.subr.bf16.mxu0 0
        %1889 = vmatpush1.bf16.msra.mxu0 0
        %1890 = vmatprep.subr.bf16.mxu0 0
        %1891 = vmatpush1.bf16.msra.mxu0 0
        %1892 = vmatprep.subr.bf16.mxu0 0
        %1893 = vmatpush1.bf16.msra.mxu0 0
        %1894 = vmatprep.subr.bf16.mxu0 0
        %1895 = vmatpush1.bf16.msra.mxu0 0
        %1896 = vmatprep.subr.bf16.mxu0 0
        %1897 = vmatpush1.bf16.msra.mxu0 0
        %1898 = vmatprep.subr.bf16.mxu0 0
        %1899 = vmatpush1.bf16.msra.mxu0 0
        %1900 = vmatprep.subr.bf16.mxu0 0
        %1901 = vmatpush1.bf16.msra.mxu0 0
        %1902 = vmatprep.subr.bf16.mxu0 0
        %1903 = vmatpush1.bf16.msra.mxu0 0
        %1904 = vmatprep.subr.bf16.mxu0 0
        %1905 = vmatpush1.bf16.msra.mxu0 0
        %1906 = vmatprep.subr.bf16.mxu0 0
        %1907 = vmatpush1.bf16.msra.mxu0 0
        %1908 = vmatprep.mubr.bf16.mxu0 0
        %1909 = vmatmul.mubr.bf16.gmra.mrb[0].mxu0 %v1874
        %v1910 = vpop.f32.mrb[0].mxu0
        %v1911 = vadd.f32 0.0, %v1910
        %v1912 = vpop.f32.mrb[0].mxu0
        %v1913 = vpop.f32.mrb[0].mxu0
        %v1914 = vadd.f32 0.0, %v1913
        %v1915 = vpop.f32.mrb[0].mxu0
        %1916 = vdwg.mxu0
        %1919 = vrot.lane.b32.xlu0 %v1815, 8
        %v1920 = vpop.permute.xlu0 %1919
        %1921 = vrot.lane.b32.xlu0 %v1818, 8
        %v1922 = vpop.permute.xlu0 %1921
        %1927 = vrot.lane.b32.xlu0 %v1863, 16
        %v1928 = vpop.permute.xlu0 %1927
        %1929 = vrot.lane.b32.xlu0 %v1866, 16
        %v1930 = vpop.permute.xlu0 %1929
        %1935 = vrot.lane.b32.xlu0 %v1911, 24
        %v1936 = vpop.permute.xlu0 %1935
        %1937 = vrot.lane.b32.xlu0 %v1914, 24
        %v1938 = vpop.permute.xlu0 %1937
        %v1941 = vsel %vm1427, %v1767, %v1920
        %v1942 = vsel %vm1427, %v1770, %v1922
        %v1943 = vsel %vm1632, %v1941, %v1928
        %v1944 = vsel %vm1632, %v1942, %v1930
        %vm1945 = vcmask 195584
        %v1946 = vsel %vm1945, %v1943, %v1936
        %v1947 = vsel %vm1945, %v1944, %v1938
        %v1948 = vpack.c.bf16 %v1947, %v1946
        %v1950 = vlaneseq
        %v1951 = vshrl.u32 %v1950, 7
        %v1952 = vsub.s32 0, %v1951
        %v1953 = vrot.slane %v1256, %v1952
        %v1959 = vunpack.c.l.b16 %v1252
        %v1960 = vunpack.c.l.b16 %v1253
        %v1961 = vunpack.c.l.b16 %v1254
        %v1962 = vunpack.c.l.b16 %v1255
        %v1963 = vpack.c.b16 %v1960, %v1959
        %v1964 = vpack.c.b16 %v1962, %v1961
        %v1968 = vsel %vm1182, %v1948, 0
        %1970 = vmatprep.subr.bf16.mxu0 0
        %1971 = vmatpush1.bf16.msra.mxu0 %v1963
        %1972 = vmatprep.subr.bf16.mxu0 0
        %1973 = vmatpush1.bf16.msra.mxu0 %v1964
        %1974 = vmatprep.subr.bf16.mxu0 0
        %1975 = vmatpush1.bf16.msra.mxu0 0
        %1976 = vmatprep.subr.bf16.mxu0 0
        %1977 = vmatpush1.bf16.msra.mxu0 0
        %1978 = vmatprep.subr.bf16.mxu0 0
        %1979 = vmatpush1.bf16.msra.mxu0 0
        %1980 = vmatprep.subr.bf16.mxu0 0
        %1981 = vmatpush1.bf16.msra.mxu0 0
        %1982 = vmatprep.subr.bf16.mxu0 0
        %1983 = vmatpush1.bf16.msra.mxu0 0
        %1984 = vmatprep.subr.bf16.mxu0 0
        %1985 = vmatpush1.bf16.msra.mxu0 0
        %1986 = vmatprep.subr.bf16.mxu0 0
        %1987 = vmatpush1.bf16.msra.mxu0 0
        %1988 = vmatprep.subr.bf16.mxu0 0
        %1989 = vmatpush1.bf16.msra.mxu0 0
        %1990 = vmatprep.subr.bf16.mxu0 0
        %1991 = vmatpush1.bf16.msra.mxu0 0
        %1992 = vmatprep.subr.bf16.mxu0 0
        %1993 = vmatpush1.bf16.msra.mxu0 0
        %1994 = vmatprep.subr.bf16.mxu0 0
        %1995 = vmatpush1.bf16.msra.mxu0 0
        %1996 = vmatprep.subr.bf16.mxu0 0
        %1997 = vmatpush1.bf16.msra.mxu0 0
        %1998 = vmatprep.subr.bf16.mxu0 0
        %1999 = vmatpush1.bf16.msra.mxu0 0
        %2000 = vmatprep.subr.bf16.mxu0 0
        %2001 = vmatpush1.bf16.msra.mxu0 0
        %2002 = vmatprep.mubr.bf16.mxu0 0
        %2003 = vmatmul.mubr.bf16.gmra.mrb[0].mxu0 %v1968
        %v2004 = vpop.f32.mrb[0].mxu0
        %v2005 = vadd.f32 %v1953, %v2004
        %v2006 = vpop.f32.mrb[0].mxu0
        %v2007 = vpop.f32.mrb[0].mxu0
        %v2008 = vadd.f32 %v1953, %v2007
        %v2009 = vpop.f32.mrb[0].mxu0
        %2010 = vdwg.mxu0
        %v2011 = vadd.f32 %v1178, %v2005
        %v2012 = vadd.f32 %v1179, %v2008
        %v2013 = vld [vmem:[%s1118] sm:$0x1]
        %v2014 = vld [vmem:[%s1121] sm:$0x1]
        %v2015 = vsel %vm1182, %v2011, 0.0
        %2016 = vadd.xlane.f32.xlu0 %v2015
        %v2017 = vpop.xlane.xlu0 %2016
        %v2018 = vsel %vm1182, %v2012, 0.0
        %2019 = vadd.xlane.f32.xlu0 %v2018
        %v2020 = vpop.xlane.xlu0 %2019
        %v2021 = vmul.f32 %v2017, %v1189
        %v2022 = vmul.f32 %v2020, %v1189
        %v2023 = vsub.f32 %v2011, %v2021
        %v2024 = vsub.f32 %v2012, %v2022
        %v2025 = vmul.f32 %v2023, %v2023
        %v2026 = vmul.f32 %v2024, %v2024
        %v2027 = vsel %vm1182, %v2025, 0.0
        %2028 = vadd.xlane.f32.xlu0 %v2027
        %v2029 = vpop.xlane.xlu0 %2028
        %v2030 = vsel %vm1182, %v2026, 0.0
        %2031 = vadd.xlane.f32.xlu0 %v2030
        %v2032 = vpop.xlane.xlu0 %2031
        %v2033 = vmul.f32 %v2029, 0.032258064
        %v2034 = vmul.f32 %v2032, 0.032258064
        %v2036 = vlaneseq
        %v2037 = vshrl.u32 %v2036, 7
        %v2038 = vsub.s32 0, %v2037
        %v2039 = vrot.slane %v2013, %v2038
        %v2041 = vmul.f32 %v2039, %v2023
        %v2042 = vmul.f32 %v2039, %v2024
        %v2043 = vrsqrt.pop %v2033
        %v2044 = vmul.f32 %v2033, %v2043
        %vm2045 = vcmp.eq.f32.partialorder %v2033, inf
        %v2046 = vsel %vm2045, %v2033, %v2044
        %vm2047 = vcmp.eq.f32.partialorder %v2033, 0.0
        %v2048 = vand.u32 %v2033, 2147483648
        %v2049 = vsel %vm2047, %v2048, %v2046
        %v2050 = vrsqrt.pop %v2034
        %v2051 = vmul.f32 %v2034, %v2050
        %vm2052 = vcmp.eq.f32.partialorder %v2034, inf
        %v2053 = vsel %vm2052, %v2034, %v2051
        %vm2054 = vcmp.eq.f32.partialorder %v2034, 0.0
        %v2055 = vand.u32 %v2034, 2147483648
        %v2056 = vsel %vm2054, %v2055, %v2053
        %v2057 = vadd.f32 %v2049, 1e-06
        %v2058 = vadd.f32 %v2056, 1e-06
        %v2059 = vrcp.pop %v2057
        %v2060 = vmul.f32 %v2041, %v2059
        %v2061 = vrcp.pop %v2058
        %v2062 = vmul.f32 %v2042, %v2061
        %v2064 = vlaneseq
        %v2065 = vshrl.u32 %v2064, 7
        %v2066 = vsub.s32 0, %v2065
        %v2067 = vrot.slane %v2014, %v2066
        %v2069 = vadd.f32 %v2060, %v2067
        %v2070 = vadd.f32 %v2062, %v2067
        %v2071 = vld [vmem:[%s1] sm:$0xff]
        %v2072 = vld [vmem:[%s1 + $0x8] sm:$0xff]
        %v2073 = vld [vmem:[%s3] sm:$0xff]
        %v2074 = vld [vmem:[%s3 + $0x8] sm:$0xff]
        %v2075 = vld [vmem:[%s1126] sm:$0xf]
        %v2076 = vld [vmem:[%s1126 + $0x4] sm:$0xf]
        %v2077 = vld [vmem:[%s1126 + $0x8] sm:$0xf]
        %v2078 = vld [vmem:[%s1126 + $0xc] sm:$0xf]
        %v2079 = vld [vmem:[%s1129] sm:$0x1]
        %v2080 = vld [vmem:[%s1134] sm:$0xf]
        %v2081 = vld [vmem:[%s1134 + $0x4] sm:$0xf]
        %v2082 = vld [vmem:[%s1134 + $0x8] sm:$0xf]
        %v2083 = vld [vmem:[%s1134 + $0xc] sm:$0xf]
        %v2084 = vld [vmem:[%s1137] sm:$0x1]
        %v2085 = vld [vmem:[%s1142] sm:$0xf]
        %v2086 = vld [vmem:[%s1142 + $0x4] sm:$0xf]
        %v2087 = vld [vmem:[%s1142 + $0x8] sm:$0xf]
        %v2088 = vld [vmem:[%s1142 + $0xc] sm:$0xf]
        %v2089 = vld [vmem:[%s1145] sm:$0x1]
        %v2090 = vpack.c.bf16 %v2070, %v2069
        %v2092 = vlaneseq
        %v2093 = vshrl.u32 %v2092, 7
        %v2094 = vsub.s32 0, %v2093
        %v2095 = vrot.slane %v2079, %v2094
        %v2101 = vunpack.c.l.b16 %v2075
        %v2102 = vunpack.c.l.b16 %v2076
        %v2103 = vunpack.c.l.b16 %v2077
        %v2104 = vunpack.c.l.b16 %v2078
        %v2105 = vpack.c.b16 %v2102, %v2101
        %v2106 = vpack.c.b16 %v2104, %v2103
        %v2110 = vsel %vm1182, %v2090, 0
        %2112 = vmatprep.subr.bf16.mxu0 0
        %2113 = vmatpush1.bf16.msra.mxu0 %v2105
        %2114 = vmatprep.subr.bf16.mxu0 0
        %2115 = vmatpush1.bf16.msra.mxu0 %v2106
        %2116 = vmatprep.subr.bf16.mxu0 0
        %2117 = vmatpush1.bf16.msra.mxu0 0
        %2118 = vmatprep.subr.bf16.mxu0 0
        %2119 = vmatpush1.bf16.msra.mxu0 0
        %2120 = vmatprep.subr.bf16.mxu0 0
        %2121 = vmatpush1.bf16.msra.mxu0 0
        %2122 = vmatprep.subr.bf16.mxu0 0
        %2123 = vmatpush1.bf16.msra.mxu0 0
        %2124 = vmatprep.subr.bf16.mxu0 0
        %2125 = vmatpush1.bf16.msra.mxu0 0
        %2126 = vmatprep.subr.bf16.mxu0 0
        %2127 = vmatpush1.bf16.msra.mxu0 0
        %2128 = vmatprep.subr.bf16.mxu0 0
        %2129 = vmatpush1.bf16.msra.mxu0 0
        %2130 = vmatprep.subr.bf16.mxu0 0
        %2131 = vmatpush1.bf16.msra.mxu0 0
        %2132 = vmatprep.subr.bf16.mxu0 0
        %2133 = vmatpush1.bf16.msra.mxu0 0
        %2134 = vmatprep.subr.bf16.mxu0 0
        %2135 = vmatpush1.bf16.msra.mxu0 0
        %2136 = vmatprep.subr.bf16.mxu0 0
        %2137 = vmatpush1.bf16.msra.mxu0 0
        %2138 = vmatprep.subr.bf16.mxu0 0
        %2139 = vmatpush1.bf16.msra.mxu0 0
        %2140 = vmatprep.subr.bf16.mxu0 0
        %2141 = vmatpush1.bf16.msra.mxu0 0
        %2142 = vmatprep.subr.bf16.mxu0 0
        %2143 = vmatpush1.bf16.msra.mxu0 0
        %2144 = vmatprep.mubr.bf16.mxu0 0
        %2145 = vmatmul.mubr.bf16.gmra.mrb[0].mxu0 %v2110
        %v2146 = vpop.f32.mrb[0].mxu0
        %v2147 = vadd.f32 %v2095, %v2146
        %v2148 = vpop.f32.mrb[0].mxu0
        %v2149 = vpop.f32.mrb[0].mxu0
        %v2150 = vadd.f32 %v2095, %v2149
        %v2151 = vpop.f32.mrb[0].mxu0
        %2152 = vdwg.mxu0
        %v2153 = vpack.c.bf16 %v2072, %v2071
        %v2155 = vlaneseq
        %v2156 = vshrl.u32 %v2155, 7
        %v2157 = vsub.s32 0, %v2156
        %v2158 = vrot.slane %v2084, %v2157
        %v2164 = vunpack.c.l.b16 %v2080
        %v2165 = vunpack.c.l.b16 %v2081
        %v2166 = vunpack.c.l.b16 %v2082
        %v2167 = vunpack.c.l.b16 %v2083
        %v2168 = vpack.c.b16 %v2165, %v2164
        %v2169 = vpack.c.b16 %v2167, %v2166
        %v2173 = vsel %vm1182, %v2153, 0
        %2175 = vmatprep.subr.bf16.mxu0 0
        %2176 = vmatpush1.bf16.msra.mxu0 %v2168
        %2177 = vmatprep.subr.bf16.mxu0 0
        %2178 = vmatpush1.bf16.msra.mxu0 %v2169
        %2179 = vmatprep.subr.bf16.mxu0 0
        %2180 = vmatpush1.bf16.msra.mxu0 0
        %2181 = vmatprep.subr.bf16.mxu0 0
        %2182 = vmatpush1.bf16.msra.mxu0 0
        %2183 = vmatprep.subr.bf16.mxu0 0
        %2184 = vmatpush1.bf16.msra.mxu0 0
        %2185 = vmatprep.subr.bf16.mxu0 0
        %2186 = vmatpush1.bf16.msra.mxu0 0
        %2187 = vmatprep.subr.bf16.mxu0 0
        %2188 = vmatpush1.bf16.msra.mxu0 0
        %2189 = vmatprep.subr.bf16.mxu0 0
        %2190 = vmatpush1.bf16.msra.mxu0 0
        %2191 = vmatprep.subr.bf16.mxu0 0
        %2192 = vmatpush1.bf16.msra.mxu0 0
        %2193 = vmatprep.subr.bf16.mxu0 0
        %2194 = vmatpush1.bf16.msra.mxu0 0
        %2195 = vmatprep.subr.bf16.mxu0 0
        %2196 = vmatpush1.bf16.msra.mxu0 0
        %2197 = vmatprep.subr.bf16.mxu0 0
        %2198 = vmatpush1.bf16.msra.mxu0 0
        %2199 = vmatprep.subr.bf16.mxu0 0
        %2200 = vmatpush1.bf16.msra.mxu0 0
        %2201 = vmatprep.subr.bf16.mxu0 0
        %2202 = vmatpush1.bf16.msra.mxu0 0
        %2203 = vmatprep.subr.bf16.mxu0 0
        %2204 = vmatpush1.bf16.msra.mxu0 0
        %2205 = vmatprep.subr.bf16.mxu0 0
        %2206 = vmatpush1.bf16.msra.mxu0 0
        %2207 = vmatprep.mubr.bf16.mxu0 0
        %2208 = vmatmul.mubr.bf16.gmra.mrb[0].mxu0 %v2173
        %v2209 = vpop.f32.mrb[0].mxu0
        %v2210 = vadd.f32 %v2158, %v2209
        %v2211 = vpop.f32.mrb[0].mxu0
        %v2212 = vpop.f32.mrb[0].mxu0
        %v2213 = vadd.f32 %v2158, %v2212
        %v2214 = vpop.f32.mrb[0].mxu0
        %2215 = vdwg.mxu0
        %2218 = vrot.lane.b32.xlu0 %v2147, 120
        %v2219 = vpop.permute.xlu0 %2218
        %2220 = vrot.lane.b32.xlu0 %v2150, 120
        %v2221 = vpop.permute.xlu0 %2220
        %2224 = vrot.lane.b32.xlu0 %v2147, 112
        %v2225 = vpop.permute.xlu0 %2224
        %2226 = vrot.lane.b32.xlu0 %v2150, 112
        %v2227 = vpop.permute.xlu0 %2226
        %2230 = vrot.lane.b32.xlu0 %v2147, 104
        %v2231 = vpop.permute.xlu0 %2230
        %2232 = vrot.lane.b32.xlu0 %v2150, 104
        %v2233 = vpop.permute.xlu0 %2232
        %v2236 = vpack.c.bf16 %v2150, %v2147
        %v2237 = vpack.c.bf16 %v2221, %v2219
        %v2238 = vpack.c.bf16 %v2227, %v2225
        %v2239 = vpack.c.bf16 %v2233, %v2231
        %2242 = vrot.lane.b32.xlu0 %v2210, 120
        %v2243 = vpop.permute.xlu0 %2242
        %2244 = vrot.lane.b32.xlu0 %v2213, 120
        %v2245 = vpop.permute.xlu0 %2244
        %2248 = vrot.lane.b32.xlu0 %v2210, 112
        %v2249 = vpop.permute.xlu0 %2248
        %2250 = vrot.lane.b32.xlu0 %v2213, 112
        %v2251 = vpop.permute.xlu0 %2250
        %2254 = vrot.lane.b32.xlu0 %v2210, 104
        %v2255 = vpop.permute.xlu0 %2254
        %2256 = vrot.lane.b32.xlu0 %v2213, 104
        %v2257 = vpop.permute.xlu0 %2256
        %v2260 = vpack.c.bf16 %v2213, %v2210
        %v2261 = vpack.c.bf16 %v2245, %v2243
        %v2262 = vpack.c.bf16 %v2251, %v2249
        %v2263 = vpack.c.bf16 %v2257, %v2255
        %v2265 = vsel %vm1427, %v2236, 0
        %v2268 = vsel %vm1427, %v2260, 0
        %2270 = vmatprep.subr.bf16.mxu0 0
        %2271 = vmatpush1.bf16.xpose.msra.mxu0 %v2268
        %2272 = vmatprep.subr.bf16.mxu0 0
        %2273 = vmatpush1.bf16.xpose.msra.mxu0 0
        %2274 = vmatprep.subr.bf16.mxu0 0
        %2275 = vmatpush1.bf16.xpose.msra.mxu0 0
        %2276 = vmatprep.subr.bf16.mxu0 0
        %2277 = vmatpush1.bf16.xpose.msra.mxu0 0
        %2278 = vmatprep.subr.bf16.mxu0 0
        %2279 = vmatpush1.bf16.xpose.msra.mxu0 0
        %2280 = vmatprep.subr.bf16.mxu0 0
        %2281 = vmatpush1.bf16.xpose.msra.mxu0 0
        %2282 = vmatprep.subr.bf16.mxu0 0
        %2283 = vmatpush1.bf16.xpose.msra.mxu0 0
        %2284 = vmatprep.subr.bf16.mxu0 0
        %2285 = vmatpush1.bf16.xpose.msra.mxu0 0
        %2286 = vmatprep.subr.bf16.mxu0 0
        %2287 = vmatpush1.bf16.xpose.msra.mxu0 0
        %2288 = vmatprep.subr.bf16.mxu0 0
        %2289 = vmatpush1.bf16.xpose.msra.mxu0 0
        %2290 = vmatprep.subr.bf16.mxu0 0
        %2291 = vmatpush1.bf16.xpose.msra.mxu0 0
        %2292 = vmatprep.subr.bf16.mxu0 0
        %2293 = vmatpush1.bf16.xpose.msra.mxu0 0
        %2294 = vmatprep.subr.bf16.mxu0 0
        %2295 = vmatpush1.bf16.xpose.msra.mxu0 0
        %2296 = vmatprep.subr.bf16.mxu0 0
        %2297 = vmatpush1.bf16.xpose.msra.mxu0 0
        %2298 = vmatprep.subr.bf16.mxu0 0
        %2299 = vmatpush1.bf16.xpose.msra.mxu0 0
        %2300 = vmatprep.subr.bf16.mxu0 0
        %2301 = vmatpush1.bf16.xpose.msra.mxu0 0
        %2302 = vmatprep.mubr.bf16.mxu0 0
        %2303 = vmatmul.mubr.bf16.gmra.mrb[0].mxu0 %v2265
        %v2304 = vpop.f32.mrb[0].mxu0
        %v2305 = vadd.f32 0.0, %v2304
        %v2306 = vpop.f32.mrb[0].mxu0
        %v2307 = vpop.f32.mrb[0].mxu0
        %v2308 = vadd.f32 0.0, %v2307
        %v2309 = vpop.f32.mrb[0].mxu0
        %2310 = vdwg.mxu0
        %v2312 = vsel %vm1427, %v2237, 0
        %v2315 = vsel %vm1427, %v2261, 0
        %2317 = vmatprep.subr.bf16.mxu0 0
        %2318 = vmatpush1.bf16.xpose.msra.mxu0 %v2315
        %2319 = vmatprep.subr.bf16.mxu0 0
        %2320 = vmatpush1.bf16.xpose.msra.mxu0 0
        %2321 = vmatprep.subr.bf16.mxu0 0
        %2322 = vmatpush1.bf16.xpose.msra.mxu0 0
        %2323 = vmatprep.subr.bf16.mxu0 0
        %2324 = vmatpush1.bf16.xpose.msra.mxu0 0
        %2325 = vmatprep.subr.bf16.mxu0 0
        %2326 = vmatpush1.bf16.xpose.msra.mxu0 0
        %2327 = vmatprep.subr.bf16.mxu0 0
        %2328 = vmatpush1.bf16.xpose.msra.mxu0 0
        %2329 = vmatprep.subr.bf16.mxu0 0
        %2330 = vmatpush1.bf16.xpose.msra.mxu0 0
        %2331 = vmatprep.subr.bf16.mxu0 0
        %2332 = vmatpush1.bf16.xpose.msra.mxu0 0
        %2333 = vmatprep.subr.bf16.mxu0 0
        %2334 = vmatpush1.bf16.xpose.msra.mxu0 0
        %2335 = vmatprep.subr.bf16.mxu0 0
        %2336 = vmatpush1.bf16.xpose.msra.mxu0 0
        %2337 = vmatprep.subr.bf16.mxu0 0
        %2338 = vmatpush1.bf16.xpose.msra.mxu0 0
        %2339 = vmatprep.subr.bf16.mxu0 0
        %2340 = vmatpush1.bf16.xpose.msra.mxu0 0
        %2341 = vmatprep.subr.bf16.mxu0 0
        %2342 = vmatpush1.bf16.xpose.msra.mxu0 0
        %2343 = vmatprep.subr.bf16.mxu0 0
        %2344 = vmatpush1.bf16.xpose.msra.mxu0 0
        %2345 = vmatprep.subr.bf16.mxu0 0
        %2346 = vmatpush1.bf16.xpose.msra.mxu0 0
        %2347 = vmatprep.subr.bf16.mxu0 0
        %2348 = vmatpush1.bf16.xpose.msra.mxu0 0
        %2349 = vmatprep.mubr.bf16.mxu0 0
        %2350 = vmatmul.mubr.bf16.gmra.mrb[0].mxu0 %v2312
        %v2351 = vpop.f32.mrb[0].mxu0
        %v2352 = vadd.f32 0.0, %v2351
        %v2353 = vpop.f32.mrb[0].mxu0
        %v2354 = vpop.f32.mrb[0].mxu0
        %v2355 = vadd.f32 0.0, %v2354
        %v2356 = vpop.f32.mrb[0].mxu0
        %2357 = vdwg.mxu0
        %v2359 = vsel %vm1427, %v2238, 0
        %v2362 = vsel %vm1427, %v2262, 0
        %2364 = vmatprep.subr.bf16.mxu0 0
        %2365 = vmatpush1.bf16.xpose.msra.mxu0 %v2362
        %2366 = vmatprep.subr.bf16.mxu0 0
        %2367 = vmatpush1.bf16.xpose.msra.mxu0 0
        %2368 = vmatprep.subr.bf16.mxu0 0
        %2369 = vmatpush1.bf16.xpose.msra.mxu0 0
        %2370 = vmatprep.subr.bf16.mxu0 0
        %2371 = vmatpush1.bf16.xpose.msra.mxu0 0
        %2372 = vmatprep.subr.bf16.mxu0 0
        %2373 = vmatpush1.bf16.xpose.msra.mxu0 0
        %2374 = vmatprep.subr.bf16.mxu0 0
        %2375 = vmatpush1.bf16.xpose.msra.mxu0 0
        %2376 = vmatprep.subr.bf16.mxu0 0
        %2377 = vmatpush1.bf16.xpose.msra.mxu0 0
        %2378 = vmatprep.subr.bf16.mxu0 0
        %2379 = vmatpush1.bf16.xpose.msra.mxu0 0
        %2380 = vmatprep.subr.bf16.mxu0 0
        %2381 = vmatpush1.bf16.xpose.msra.mxu0 0
        %2382 = vmatprep.subr.bf16.mxu0 0
        %2383 = vmatpush1.bf16.xpose.msra.mxu0 0
        %2384 = vmatprep.subr.bf16.mxu0 0
        %2385 = vmatpush1.bf16.xpose.msra.mxu0 0
        %2386 = vmatprep.subr.bf16.mxu0 0
        %2387 = vmatpush1.bf16.xpose.msra.mxu0 0
        %2388 = vmatprep.subr.bf16.mxu0 0
        %2389 = vmatpush1.bf16.xpose.msra.mxu0 0
        %2390 = vmatprep.subr.bf16.mxu0 0
        %2391 = vmatpush1.bf16.xpose.msra.mxu0 0
        %2392 = vmatprep.subr.bf16.mxu0 0
        %2393 = vmatpush1.bf16.xpose.msra.mxu0 0
        %2394 = vmatprep.subr.bf16.mxu0 0
        %2395 = vmatpush1.bf16.xpose.msra.mxu0 0
        %2396 = vmatprep.mubr.bf16.mxu0 0
        %2397 = vmatmul.mubr.bf16.gmra.mrb[0].mxu0 %v2359
        %v2398 = vpop.f32.mrb[0].mxu0
        %v2399 = vadd.f32 0.0, %v2398
        %v2400 = vpop.f32.mrb[0].mxu0
        %v2401 = vpop.f32.mrb[0].mxu0
        %v2402 = vadd.f32 0.0, %v2401
        %v2403 = vpop.f32.mrb[0].mxu0
        %2404 = vdwg.mxu0
        %v2406 = vsel %vm1427, %v2239, 0
        %v2409 = vsel %vm1427, %v2263, 0
        %2411 = vmatprep.subr.bf16.mxu0 0
        %2412 = vmatpush1.bf16.xpose.msra.mxu0 %v2409
        %2413 = vmatprep.subr.bf16.mxu0 0
        %2414 = vmatpush1.bf16.xpose.msra.mxu0 0
        %2415 = vmatprep.subr.bf16.mxu0 0
        %2416 = vmatpush1.bf16.xpose.msra.mxu0 0
        %2417 = vmatprep.subr.bf16.mxu0 0
        %2418 = vmatpush1.bf16.xpose.msra.mxu0 0
        %2419 = vmatprep.subr.bf16.mxu0 0
        %2420 = vmatpush1.bf16.xpose.msra.mxu0 0
        %2421 = vmatprep.subr.bf16.mxu0 0
        %2422 = vmatpush1.bf16.xpose.msra.mxu0 0
        %2423 = vmatprep.subr.bf16.mxu0 0
        %2424 = vmatpush1.bf16.xpose.msra.mxu0 0
        %2425 = vmatprep.subr.bf16.mxu0 0
        %2426 = vmatpush1.bf16.xpose.msra.mxu0 0
        %2427 = vmatprep.subr.bf16.mxu0 0
        %2428 = vmatpush1.bf16.xpose.msra.mxu0 0
        %2429 = vmatprep.subr.bf16.mxu0 0
        %2430 = vmatpush1.bf16.xpose.msra.mxu0 0
        %2431 = vmatprep.subr.bf16.mxu0 0
        %2432 = vmatpush1.bf16.xpose.msra.mxu0 0
        %2433 = vmatprep.subr.bf16.mxu0 0
        %2434 = vmatpush1.bf16.xpose.msra.mxu0 0
        %2435 = vmatprep.subr.bf16.mxu0 0
        %2436 = vmatpush1.bf16.xpose.msra.mxu0 0
        %2437 = vmatprep.subr.bf16.mxu0 0
        %2438 = vmatpush1.bf16.xpose.msra.mxu0 0
        %2439 = vmatprep.subr.bf16.mxu0 0
        %2440 = vmatpush1.bf16.xpose.msra.mxu0 0
        %2441 = vmatprep.subr.bf16.mxu0 0
        %2442 = vmatpush1.bf16.xpose.msra.mxu0 0
        %2443 = vmatprep.mubr.bf16.mxu0 0
        %2444 = vmatmul.mubr.bf16.gmra.mrb[0].mxu0 %v2406
        %v2445 = vpop.f32.mrb[0].mxu0
        %v2446 = vadd.f32 0.0, %v2445
        %v2447 = vpop.f32.mrb[0].mxu0
        %v2448 = vpop.f32.mrb[0].mxu0
        %v2449 = vadd.f32 0.0, %v2448
        %v2450 = vpop.f32.mrb[0].mxu0
        %2451 = vdwg.mxu0
        %v2452 = vmul.f32 %v2305, 0.35355338
        %v2453 = vmul.f32 %v2308, 0.35355338
        %v2454 = vmul.f32 %v2352, 0.35355338
        %v2455 = vmul.f32 %v2355, 0.35355338
        %v2456 = vmul.f32 %v2399, 0.35355338
        %v2457 = vmul.f32 %v2402, 0.35355338
        %v2458 = vmul.f32 %v2446, 0.35355338
        %v2459 = vmul.f32 %v2449, 0.35355338
        %v2460 = vadd.f32 %v2452, %v2073
        %v2461 = vadd.f32 %v2453, %v2074
        %v2462 = vadd.f32 %v2454, %v2073
        %v2463 = vadd.f32 %v2455, %v2074
        %v2464 = vadd.f32 %v2456, %v2073
        %v2465 = vadd.f32 %v2457, %v2074
        %v2466 = vadd.f32 %v2458, %v2073
        %v2467 = vadd.f32 %v2459, %v2074
        %v2468 = vsel %vm1632, %v2460, -inf
        %2469 = vmax.xlane.f32.xlu0 %v2468
        %v2470 = vpop.xlane.xlu0 %2469
        %v2471 = vsel %vm1632, %v2461, -inf
        %2472 = vmax.xlane.f32.xlu0 %v2471
        %v2473 = vpop.xlane.xlu0 %2472
        %v2474 = vsel %vm1632, %v2462, -inf
        %2475 = vmax.xlane.f32.xlu0 %v2474
        %v2476 = vpop.xlane.xlu0 %2475
        %v2477 = vsel %vm1632, %v2463, -inf
        %2478 = vmax.xlane.f32.xlu0 %v2477
        %v2479 = vpop.xlane.xlu0 %2478
        %v2480 = vsel %vm1632, %v2464, -inf
        %2481 = vmax.xlane.f32.xlu0 %v2480
        %v2482 = vpop.xlane.xlu0 %2481
        %v2483 = vsel %vm1632, %v2465, -inf
        %2484 = vmax.xlane.f32.xlu0 %v2483
        %v2485 = vpop.xlane.xlu0 %2484
        %v2486 = vsel %vm1632, %v2466, -inf
        %2487 = vmax.xlane.f32.xlu0 %v2486
        %v2488 = vpop.xlane.xlu0 %2487
        %v2489 = vsel %vm1632, %v2467, -inf
        %2490 = vmax.xlane.f32.xlu0 %v2489
        %v2491 = vpop.xlane.xlu0 %2490
        %v2492 = vsub.f32 %v2460, %v2470
        %v2493 = vsub.f32 %v2461, %v2473
        %v2494 = vsub.f32 %v2462, %v2476
        %v2495 = vsub.f32 %v2463, %v2479
        %v2496 = vsub.f32 %v2464, %v2482
        %v2497 = vsub.f32 %v2465, %v2485
        %v2498 = vsub.f32 %v2466, %v2488
        %v2499 = vsub.f32 %v2467, %v2491
        %v2500 = vmul.f32 %v2492, 1.442695
        %v2501 = vpow.pop %v2500
        %v2502 = vmul.f32 %v2493, 1.442695
        %v2503 = vpow.pop %v2502
        %v2504 = vmul.f32 %v2494, 1.442695
        %v2505 = vpow.pop %v2504
        %v2506 = vmul.f32 %v2495, 1.442695
        %v2507 = vpow.pop %v2506
        %v2508 = vmul.f32 %v2496, 1.442695
        %v2509 = vpow.pop %v2508
        %v2510 = vmul.f32 %v2497, 1.442695
        %v2511 = vpow.pop %v2510
        %v2512 = vmul.f32 %v2498, 1.442695
        %v2513 = vpow.pop %v2512
        %v2514 = vmul.f32 %v2499, 1.442695
        %v2515 = vpow.pop %v2514
        %v2516 = vsel %vm1632, %v2501, 0.0
        %2517 = vadd.xlane.f32.xlu0 %v2516
        %v2518 = vpop.xlane.xlu0 %2517
        %v2519 = vsel %vm1632, %v2503, 0.0
        %2520 = vadd.xlane.f32.xlu0 %v2519
        %v2521 = vpop.xlane.xlu0 %2520
        %v2522 = vsel %vm1632, %v2505, 0.0
        %2523 = vadd.xlane.f32.xlu0 %v2522
        %v2524 = vpop.xlane.xlu0 %2523
        %v2525 = vsel %vm1632, %v2507, 0.0
        %2526 = vadd.xlane.f32.xlu0 %v2525
        %v2527 = vpop.xlane.xlu0 %2526
        %v2528 = vsel %vm1632, %v2509, 0.0
        %2529 = vadd.xlane.f32.xlu0 %v2528
        %v2530 = vpop.xlane.xlu0 %2529
        %v2531 = vsel %vm1632, %v2511, 0.0
        %2532 = vadd.xlane.f32.xlu0 %v2531
        %v2533 = vpop.xlane.xlu0 %2532
        %v2534 = vsel %vm1632, %v2513, 0.0
        %2535 = vadd.xlane.f32.xlu0 %v2534
        %v2536 = vpop.xlane.xlu0 %2535
        %v2537 = vsel %vm1632, %v2515, 0.0
        %2538 = vadd.xlane.f32.xlu0 %v2537
        %v2539 = vpop.xlane.xlu0 %2538
        %v2540 = vrcp.pop %v2518
        %v2541 = vmul.f32 %v2501, %v2540
        %v2542 = vrcp.pop %v2521
        %v2543 = vmul.f32 %v2503, %v2542
        %v2544 = vrcp.pop %v2524
        %v2545 = vmul.f32 %v2505, %v2544
        %v2546 = vrcp.pop %v2527
        %v2547 = vmul.f32 %v2507, %v2546
        %v2548 = vrcp.pop %v2530
        %v2549 = vmul.f32 %v2509, %v2548
        %v2550 = vrcp.pop %v2533
        %v2551 = vmul.f32 %v2511, %v2550
        %v2552 = vrcp.pop %v2536
        %v2553 = vmul.f32 %v2513, %v2552
        %v2554 = vrcp.pop %v2539
        %v2555 = vmul.f32 %v2515, %v2554
        %v2556 = vpack.c.bf16 %v2543, %v2541
        %v2557 = vpack.c.bf16 %v2547, %v2545
        %v2558 = vpack.c.bf16 %v2551, %v2549
        %v2559 = vpack.c.bf16 %v2555, %v2553
        %2561 = vrot.lane.b32.xlu0 %v2260, 96
        %v2562 = vpop.permute.xlu0 %2561
        %v2565 = vsel %vm1632, %v2556, 0
        %2567 = vmatprep.subr.bf16.mxu0 0
        %2568 = vmatpush1.bf16.msra.mxu0 %v2562
        %2569 = vmatprep.subr.bf16.mxu0 0
        %2570 = vmatpush1.bf16.msra.mxu0 0
        %2571 = vmatprep.subr.bf16.mxu0 0
        %2572 = vmatpush1.bf16.msra.mxu0 0
        %2573 = vmatprep.subr.bf16.mxu0 0
        %2574 = vmatpush1.bf16.msra.mxu0 0
        %2575 = vmatprep.subr.bf16.mxu0 0
        %2576 = vmatpush1.bf16.msra.mxu0 0
        %2577 = vmatprep.subr.bf16.mxu0 0
        %2578 = vmatpush1.bf16.msra.mxu0 0
        %2579 = vmatprep.subr.bf16.mxu0 0
        %2580 = vmatpush1.bf16.msra.mxu0 0
        %2581 = vmatprep.subr.bf16.mxu0 0
        %2582 = vmatpush1.bf16.msra.mxu0 0
        %2583 = vmatprep.subr.bf16.mxu0 0
        %2584 = vmatpush1.bf16.msra.mxu0 0
        %2585 = vmatprep.subr.bf16.mxu0 0
        %2586 = vmatpush1.bf16.msra.mxu0 0
        %2587 = vmatprep.subr.bf16.mxu0 0
        %2588 = vmatpush1.bf16.msra.mxu0 0
        %2589 = vmatprep.subr.bf16.mxu0 0
        %2590 = vmatpush1.bf16.msra.mxu0 0
        %2591 = vmatprep.subr.bf16.mxu0 0
        %2592 = vmatpush1.bf16.msra.mxu0 0
        %2593 = vmatprep.subr.bf16.mxu0 0
        %2594 = vmatpush1.bf16.msra.mxu0 0
        %2595 = vmatprep.subr.bf16.mxu0 0
        %2596 = vmatpush1.bf16.msra.mxu0 0
        %2597 = vmatprep.subr.bf16.mxu0 0
        %2598 = vmatpush1.bf16.msra.mxu0 0
        %2599 = vmatprep.mubr.bf16.mxu0 0
        %2600 = vmatmul.mubr.bf16.gmra.mrb[0].mxu0 %v2565
        %v2601 = vpop.f32.mrb[0].mxu0
        %v2602 = vadd.f32 0.0, %v2601
        %v2603 = vpop.f32.mrb[0].mxu0
        %v2604 = vpop.f32.mrb[0].mxu0
        %v2605 = vadd.f32 0.0, %v2604
        %v2606 = vpop.f32.mrb[0].mxu0
        %2607 = vdwg.mxu0
        %2609 = vrot.lane.b32.xlu0 %v2261, 96
        %v2610 = vpop.permute.xlu0 %2609
        %v2613 = vsel %vm1632, %v2557, 0
        %2615 = vmatprep.subr.bf16.mxu0 0
        %2616 = vmatpush1.bf16.msra.mxu0 %v2610
        %2617 = vmatprep.subr.bf16.mxu0 0
        %2618 = vmatpush1.bf16.msra.mxu0 0
        %2619 = vmatprep.subr.bf16.mxu0 0
        %2620 = vmatpush1.bf16.msra.mxu0 0
        %2621 = vmatprep.subr.bf16.mxu0 0
        %2622 = vmatpush1.bf16.msra.mxu0 0
        %2623 = vmatprep.subr.bf16.mxu0 0
        %2624 = vmatpush1.bf16.msra.mxu0 0
        %2625 = vmatprep.subr.bf16.mxu0 0
        %2626 = vmatpush1.bf16.msra.mxu0 0
        %2627 = vmatprep.subr.bf16.mxu0 0
        %2628 = vmatpush1.bf16.msra.mxu0 0
        %2629 = vmatprep.subr.bf16.mxu0 0
        %2630 = vmatpush1.bf16.msra.mxu0 0
        %2631 = vmatprep.subr.bf16.mxu0 0
        %2632 = vmatpush1.bf16.msra.mxu0 0
        %2633 = vmatprep.subr.bf16.mxu0 0
        %2634 = vmatpush1.bf16.msra.mxu0 0
        %2635 = vmatprep.subr.bf16.mxu0 0
        %2636 = vmatpush1.bf16.msra.mxu0 0
        %2637 = vmatprep.subr.bf16.mxu0 0
        %2638 = vmatpush1.bf16.msra.mxu0 0
        %2639 = vmatprep.subr.bf16.mxu0 0
        %2640 = vmatpush1.bf16.msra.mxu0 0
        %2641 = vmatprep.subr.bf16.mxu0 0
        %2642 = vmatpush1.bf16.msra.mxu0 0
        %2643 = vmatprep.subr.bf16.mxu0 0
        %2644 = vmatpush1.bf16.msra.mxu0 0
        %2645 = vmatprep.subr.bf16.mxu0 0
        %2646 = vmatpush1.bf16.msra.mxu0 0
        %2647 = vmatprep.mubr.bf16.mxu0 0
        %2648 = vmatmul.mubr.bf16.gmra.mrb[0].mxu0 %v2613
        %v2649 = vpop.f32.mrb[0].mxu0
        %v2650 = vadd.f32 0.0, %v2649
        %v2651 = vpop.f32.mrb[0].mxu0
        %v2652 = vpop.f32.mrb[0].mxu0
        %v2653 = vadd.f32 0.0, %v2652
        %v2654 = vpop.f32.mrb[0].mxu0
        %2655 = vdwg.mxu0
        %2657 = vrot.lane.b32.xlu0 %v2262, 96
        %v2658 = vpop.permute.xlu0 %2657
        %v2661 = vsel %vm1632, %v2558, 0
        %2663 = vmatprep.subr.bf16.mxu0 0
        %2664 = vmatpush1.bf16.msra.mxu0 %v2658
        %2665 = vmatprep.subr.bf16.mxu0 0
        %2666 = vmatpush1.bf16.msra.mxu0 0
        %2667 = vmatprep.subr.bf16.mxu0 0
        %2668 = vmatpush1.bf16.msra.mxu0 0
        %2669 = vmatprep.subr.bf16.mxu0 0
        %2670 = vmatpush1.bf16.msra.mxu0 0
        %2671 = vmatprep.subr.bf16.mxu0 0
        %2672 = vmatpush1.bf16.msra.mxu0 0
        %2673 = vmatprep.subr.bf16.mxu0 0
        %2674 = vmatpush1.bf16.msra.mxu0 0
        %2675 = vmatprep.subr.bf16.mxu0 0
        %2676 = vmatpush1.bf16.msra.mxu0 0
        %2677 = vmatprep.subr.bf16.mxu0 0
        %2678 = vmatpush1.bf16.msra.mxu0 0
        %2679 = vmatprep.subr.bf16.mxu0 0
        %2680 = vmatpush1.bf16.msra.mxu0 0
        %2681 = vmatprep.subr.bf16.mxu0 0
        %2682 = vmatpush1.bf16.msra.mxu0 0
        %2683 = vmatprep.subr.bf16.mxu0 0
        %2684 = vmatpush1.bf16.msra.mxu0 0
        %2685 = vmatprep.subr.bf16.mxu0 0
        %2686 = vmatpush1.bf16.msra.mxu0 0
        %2687 = vmatprep.subr.bf16.mxu0 0
        %2688 = vmatpush1.bf16.msra.mxu0 0
        %2689 = vmatprep.subr.bf16.mxu0 0
        %2690 = vmatpush1.bf16.msra.mxu0 0
        %2691 = vmatprep.subr.bf16.mxu0 0
        %2692 = vmatpush1.bf16.msra.mxu0 0
        %2693 = vmatprep.subr.bf16.mxu0 0
        %2694 = vmatpush1.bf16.msra.mxu0 0
        %2695 = vmatprep.mubr.bf16.mxu0 0
        %2696 = vmatmul.mubr.bf16.gmra.mrb[0].mxu0 %v2661
        %v2697 = vpop.f32.mrb[0].mxu0
        %v2698 = vadd.f32 0.0, %v2697
        %v2699 = vpop.f32.mrb[0].mxu0
        %v2700 = vpop.f32.mrb[0].mxu0
        %v2701 = vadd.f32 0.0, %v2700
        %v2702 = vpop.f32.mrb[0].mxu0
        %2703 = vdwg.mxu0
        %2705 = vrot.lane.b32.xlu0 %v2263, 96
        %v2706 = vpop.permute.xlu0 %2705
        %v2709 = vsel %vm1632, %v2559, 0
        %2711 = vmatprep.subr.bf16.mxu0 0
        %2712 = vmatpush1.bf16.msra.mxu0 %v2706
        %2713 = vmatprep.subr.bf16.mxu0 0
        %2714 = vmatpush1.bf16.msra.mxu0 0
        %2715 = vmatprep.subr.bf16.mxu0 0
        %2716 = vmatpush1.bf16.msra.mxu0 0
        %2717 = vmatprep.subr.bf16.mxu0 0
        %2718 = vmatpush1.bf16.msra.mxu0 0
        %2719 = vmatprep.subr.bf16.mxu0 0
        %2720 = vmatpush1.bf16.msra.mxu0 0
        %2721 = vmatprep.subr.bf16.mxu0 0
        %2722 = vmatpush1.bf16.msra.mxu0 0
        %2723 = vmatprep.subr.bf16.mxu0 0
        %2724 = vmatpush1.bf16.msra.mxu0 0
        %2725 = vmatprep.subr.bf16.mxu0 0
        %2726 = vmatpush1.bf16.msra.mxu0 0
        %2727 = vmatprep.subr.bf16.mxu0 0
        %2728 = vmatpush1.bf16.msra.mxu0 0
        %2729 = vmatprep.subr.bf16.mxu0 0
        %2730 = vmatpush1.bf16.msra.mxu0 0
        %2731 = vmatprep.subr.bf16.mxu0 0
        %2732 = vmatpush1.bf16.msra.mxu0 0
        %2733 = vmatprep.subr.bf16.mxu0 0
        %2734 = vmatpush1.bf16.msra.mxu0 0
        %2735 = vmatprep.subr.bf16.mxu0 0
        %2736 = vmatpush1.bf16.msra.mxu0 0
        %2737 = vmatprep.subr.bf16.mxu0 0
        %2738 = vmatpush1.bf16.msra.mxu0 0
        %2739 = vmatprep.subr.bf16.mxu0 0
        %2740 = vmatpush1.bf16.msra.mxu0 0
        %2741 = vmatprep.subr.bf16.mxu0 0
        %2742 = vmatpush1.bf16.msra.mxu0 0
        %2743 = vmatprep.mubr.bf16.mxu0 0
        %2744 = vmatmul.mubr.bf16.gmra.mrb[0].mxu0 %v2709
        %v2745 = vpop.f32.mrb[0].mxu0
        %v2746 = vadd.f32 0.0, %v2745
        %v2747 = vpop.f32.mrb[0].mxu0
        %v2748 = vpop.f32.mrb[0].mxu0
        %v2749 = vadd.f32 0.0, %v2748
        %v2750 = vpop.f32.mrb[0].mxu0
        %2751 = vdwg.mxu0
        %2754 = vrot.lane.b32.xlu0 %v2650, 8
        %v2755 = vpop.permute.xlu0 %2754
        %2756 = vrot.lane.b32.xlu0 %v2653, 8
        %v2757 = vpop.permute.xlu0 %2756
        %2762 = vrot.lane.b32.xlu0 %v2698, 16
        %v2763 = vpop.permute.xlu0 %2762
        %2764 = vrot.lane.b32.xlu0 %v2701, 16
        %v2765 = vpop.permute.xlu0 %2764
        %2770 = vrot.lane.b32.xlu0 %v2746, 24
        %v2771 = vpop.permute.xlu0 %2770
        %2772 = vrot.lane.b32.xlu0 %v2749, 24
        %v2773 = vpop.permute.xlu0 %2772
        %v2776 = vsel %vm1427, %v2602, %v2755
        %v2777 = vsel %vm1427, %v2605, %v2757
        %v2778 = vsel %vm1632, %v2776, %v2763
        %v2779 = vsel %vm1632, %v2777, %v2765
        %v2780 = vsel %vm1945, %v2778, %v2771
        %v2781 = vsel %vm1945, %v2779, %v2773
        %v2782 = vpack.c.bf16 %v2781, %v2780
        %v2784 = vlaneseq
        %v2785 = vshrl.u32 %v2784, 7
        %v2786 = vsub.s32 0, %v2785
        %v2787 = vrot.slane %v2089, %v2786
        %v2793 = vunpack.c.l.b16 %v2085
        %v2794 = vunpack.c.l.b16 %v2086
        %v2795 = vunpack.c.l.b16 %v2087
        %v2796 = vunpack.c.l.b16 %v2088
        %v2797 = vpack.c.b16 %v2794, %v2793
        %v2798 = vpack.c.b16 %v2796, %v2795
        %v2802 = vsel %vm1182, %v2782, 0
        %2804 = vmatprep.subr.bf16.mxu0 0
        %2805 = vmatpush1.bf16.msra.mxu0 %v2797
        %2806 = vmatprep.subr.bf16.mxu0 0
        %2807 = vmatpush1.bf16.msra.mxu0 %v2798
        %2808 = vmatprep.subr.bf16.mxu0 0
        %2809 = vmatpush1.bf16.msra.mxu0 0
        %2810 = vmatprep.subr.bf16.mxu0 0
        %2811 = vmatpush1.bf16.msra.mxu0 0
        %2812 = vmatprep.subr.bf16.mxu0 0
        %2813 = vmatpush1.bf16.msra.mxu0 0
        %2814 = vmatprep.subr.bf16.mxu0 0
        %2815 = vmatpush1.bf16.msra.mxu0 0
        %2816 = vmatprep.subr.bf16.mxu0 0
        %2817 = vmatpush1.bf16.msra.mxu0 0
        %2818 = vmatprep.subr.bf16.mxu0 0
        %2819 = vmatpush1.bf16.msra.mxu0 0
        %2820 = vmatprep.subr.bf16.mxu0 0
        %2821 = vmatpush1.bf16.msra.mxu0 0
        %2822 = vmatprep.subr.bf16.mxu0 0
        %2823 = vmatpush1.bf16.msra.mxu0 0
        %2824 = vmatprep.subr.bf16.mxu0 0
        %2825 = vmatpush1.bf16.msra.mxu0 0
        %2826 = vmatprep.subr.bf16.mxu0 0
        %2827 = vmatpush1.bf16.msra.mxu0 0
        %2828 = vmatprep.subr.bf16.mxu0 0
        %2829 = vmatpush1.bf16.msra.mxu0 0
        %2830 = vmatprep.subr.bf16.mxu0 0
        %2831 = vmatpush1.bf16.msra.mxu0 0
        %2832 = vmatprep.subr.bf16.mxu0 0
        %2833 = vmatpush1.bf16.msra.mxu0 0
        %2834 = vmatprep.subr.bf16.mxu0 0
        %2835 = vmatpush1.bf16.msra.mxu0 0
        %2836 = vmatprep.mubr.bf16.mxu0 0
        %2837 = vmatmul.mubr.bf16.gmra.mrb[0].mxu0 %v2802
        %v2838 = vpop.f32.mrb[0].mxu0
        %v2839 = vadd.f32 %v2787, %v2838
        %v2840 = vpop.f32.mrb[0].mxu0
        %v2841 = vpop.f32.mrb[0].mxu0
        %v2842 = vadd.f32 %v2787, %v2841
        %v2843 = vpop.f32.mrb[0].mxu0
        %2844 = vdwg.mxu0
        %v2845 = vadd.f32 %v2011, %v2839
        %v2846 = vadd.f32 %v2012, %v2842
        %v2847 = vld [vmem:[%s1148] sm:$0x1]
        %v2848 = vld [vmem:[%s1151] sm:$0x1]
        %v2849 = vsel %vm1182, %v2845, 0.0
        %2850 = vadd.xlane.f32.xlu0 %v2849
        %v2851 = vpop.xlane.xlu0 %2850
        %v2852 = vsel %vm1182, %v2846, 0.0
        %2853 = vadd.xlane.f32.xlu0 %v2852
        %v2854 = vpop.xlane.xlu0 %2853
        %v2855 = vmul.f32 %v2851, %v1189
        %v2856 = vmul.f32 %v2854, %v1189
        %v2857 = vsub.f32 %v2845, %v2855
        %v2858 = vsub.f32 %v2846, %v2856
        %v2859 = vmul.f32 %v2857, %v2857
        %v2860 = vmul.f32 %v2858, %v2858
        %v2861 = vsel %vm1182, %v2859, 0.0
        %2862 = vadd.xlane.f32.xlu0 %v2861
        %v2863 = vpop.xlane.xlu0 %2862
        %v2864 = vsel %vm1182, %v2860, 0.0
        %2865 = vadd.xlane.f32.xlu0 %v2864
        %v2866 = vpop.xlane.xlu0 %2865
        %v2867 = vmul.f32 %v2863, 0.032258064
        %v2868 = vmul.f32 %v2866, 0.032258064
        %v2870 = vlaneseq
        %v2871 = vshrl.u32 %v2870, 7
        %v2872 = vsub.s32 0, %v2871
        %v2873 = vrot.slane %v2847, %v2872
        %v2875 = vmul.f32 %v2873, %v2857
        %v2876 = vmul.f32 %v2873, %v2858
        %v2877 = vrsqrt.pop %v2867
        %v2878 = vmul.f32 %v2867, %v2877
        %vm2879 = vcmp.eq.f32.partialorder %v2867, inf
        %v2880 = vsel %vm2879, %v2867, %v2878
        %vm2881 = vcmp.eq.f32.partialorder %v2867, 0.0
        %v2882 = vand.u32 %v2867, 2147483648
        %v2883 = vsel %vm2881, %v2882, %v2880
        %v2884 = vrsqrt.pop %v2868
        %v2885 = vmul.f32 %v2868, %v2884
        %vm2886 = vcmp.eq.f32.partialorder %v2868, inf
        %v2887 = vsel %vm2886, %v2868, %v2885
        %vm2888 = vcmp.eq.f32.partialorder %v2868, 0.0
        %v2889 = vand.u32 %v2868, 2147483648
        %v2890 = vsel %vm2888, %v2889, %v2887
        %v2891 = vadd.f32 %v2883, 1e-06
        %v2892 = vadd.f32 %v2890, 1e-06
        %v2893 = vrcp.pop %v2891
        %v2894 = vmul.f32 %v2875, %v2893
        %v2895 = vrcp.pop %v2892
        %v2896 = vmul.f32 %v2876, %v2895
        %v2898 = vlaneseq
        %v2899 = vshrl.u32 %v2898, 7
        %v2900 = vsub.s32 0, %v2899
        %v2901 = vrot.slane %v2848, %v2900
        %v2903 = vadd.f32 %v2894, %v2901
        %v2904 = vadd.f32 %v2896, %v2901
        %v2905 = vpack.c.bf16 %v2904, %v2903
        %v2906 = vld [vmem:[%s1156] sm:$0xf]
        %v2907 = vld [vmem:[%s1156 + $0x4] sm:$0xf]
        %v2908 = vld [vmem:[%s1156 + $0x8] sm:$0xf]
        %v2909 = vld [vmem:[%s1156 + $0xc] sm:$0xf]
        %v2910 = vld [vmem:[%s1159] sm:$0x1]
        %v2912 = vlaneseq
        %v2913 = vshrl.u32 %v2912, 7
        %v2914 = vsub.s32 0, %v2913
        %v2915 = vrot.slane %v2910, %v2914
        %v2921 = vunpack.c.l.b16 %v2906
        %v2922 = vunpack.c.l.b16 %v2907
        %v2923 = vunpack.c.l.b16 %v2908
        %v2924 = vunpack.c.l.b16 %v2909
        %v2925 = vpack.c.b16 %v2922, %v2921
        %v2926 = vpack.c.b16 %v2924, %v2923
        %v2930 = vsel %vm1182, %v2905, 0
        %2932 = vmatprep.subr.bf16.mxu0 0
        %2933 = vmatpush1.bf16.msra.mxu0 %v2925
        %2934 = vmatprep.subr.bf16.mxu0 0
        %2935 = vmatpush1.bf16.msra.mxu0 %v2926
        %2936 = vmatprep.subr.bf16.mxu0 0
        %2937 = vmatpush1.bf16.msra.mxu0 0
        %2938 = vmatprep.subr.bf16.mxu0 0
        %2939 = vmatpush1.bf16.msra.mxu0 0
        %2940 = vmatprep.subr.bf16.mxu0 0
        %2941 = vmatpush1.bf16.msra.mxu0 0
        %2942 = vmatprep.subr.bf16.mxu0 0
        %2943 = vmatpush1.bf16.msra.mxu0 0
        %2944 = vmatprep.subr.bf16.mxu0 0
        %2945 = vmatpush1.bf16.msra.mxu0 0
        %2946 = vmatprep.subr.bf16.mxu0 0
        %2947 = vmatpush1.bf16.msra.mxu0 0
        %2948 = vmatprep.subr.bf16.mxu0 0
        %2949 = vmatpush1.bf16.msra.mxu0 0
        %2950 = vmatprep.subr.bf16.mxu0 0
        %2951 = vmatpush1.bf16.msra.mxu0 0
        %2952 = vmatprep.subr.bf16.mxu0 0
        %2953 = vmatpush1.bf16.msra.mxu0 0
        %2954 = vmatprep.subr.bf16.mxu0 0
        %2955 = vmatpush1.bf16.msra.mxu0 0
        %2956 = vmatprep.subr.bf16.mxu0 0
        %2957 = vmatpush1.bf16.msra.mxu0 0
        %2958 = vmatprep.subr.bf16.mxu0 0
        %2959 = vmatpush1.bf16.msra.mxu0 0
        %2960 = vmatprep.subr.bf16.mxu0 0
        %2961 = vmatpush1.bf16.msra.mxu0 0
        %2962 = vmatprep.subr.bf16.mxu0 0
        %2963 = vmatpush1.bf16.msra.mxu0 0
        %2964 = vmatprep.mubr.bf16.mxu0 0
        %2965 = vmatmul.mubr.bf16.gmra.mrb[0].mxu0 %v2930
        %v2966 = vpop.f32.mrb[0].mxu0
        %v2967 = vadd.f32 %v2915, %v2966
        %v2968 = vpop.f32.mrb[0].mxu0
        %v2969 = vpop.f32.mrb[0].mxu0
        %v2970 = vadd.f32 %v2915, %v2969
        %v2971 = vpop.f32.mrb[0].mxu0
        %2972 = vdwg.mxu0
        %v2973 = vmax.f32 %v2967, 0.0
        %v2974 = vmax.f32 %v2970, 0.0
        %v2975 = vpack.c.bf16 %v2974, %v2973
        %v2976 = vld [vmem:[%s1164] sm:$0xf]
        %v2977 = vld [vmem:[%s1164 + $0x4] sm:$0xf]
        %v2978 = vld [vmem:[%s1164 + $0x8] sm:$0xf]
        %v2979 = vld [vmem:[%s1164 + $0xc] sm:$0xf]
        %v2980 = vld [vmem:[%s1164 + $0x10] sm:$0xf]
        %v2981 = vld [vmem:[%s1164 + $0x14] sm:$0xf]
        %v2982 = vld [vmem:[%s1164 + $0x18] sm:$0xf]
        %v2983 = vld [vmem:[%s1164 + $0x1c] sm:$0xf]
        %v2984 = vld [vmem:[%s1167] sm:$0x1]
        %v2986 = vlaneseq
        %v2987 = vshrl.u32 %v2986, 7
        %v2988 = vsub.s32 0, %v2987
        %v2989 = vrot.slane %v2984, %v2988
        %v2999 = vunpack.c.l.b16 %v2976
        %v3000 = vunpack.c.l.b16 %v2977
        %v3001 = vunpack.c.l.b16 %v2978
        %v3002 = vunpack.c.l.b16 %v2979
        %v3003 = vunpack.c.l.b16 %v2980
        %v3004 = vunpack.c.l.b16 %v2981
        %v3005 = vunpack.c.l.b16 %v2982
        %v3006 = vunpack.c.l.b16 %v2983
        %v3007 = vpack.c.b16 %v3000, %v2999
        %v3008 = vpack.c.b16 %v3002, %v3001
        %v3009 = vpack.c.b16 %v3004, %v3003
        %v3010 = vpack.c.b16 %v3006, %v3005
        %vm3015 = vcmask 523264
        %v3017 = vsel %vm3015, %v2975, 0
        %3019 = vmatprep.subr.bf16.mxu0 0
        %3020 = vmatpush1.bf16.msra.mxu0 %v3007
        %3021 = vmatprep.subr.bf16.mxu0 0
        %3022 = vmatpush1.bf16.msra.mxu0 %v3008
        %3023 = vmatprep.subr.bf16.mxu0 0
        %3024 = vmatpush1.bf16.msra.mxu0 %v3009
        %3025 = vmatprep.subr.bf16.mxu0 0
        %3026 = vmatpush1.bf16.msra.mxu0 %v3010
        %3027 = vmatprep.subr.bf16.mxu0 0
        %3028 = vmatpush1.bf16.msra.mxu0 0
        %3029 = vmatprep.subr.bf16.mxu0 0
        %3030 = vmatpush1.bf16.msra.mxu0 0
        %3031 = vmatprep.subr.bf16.mxu0 0
        %3032 = vmatpush1.bf16.msra.mxu0 0
        %3033 = vmatprep.subr.bf16.mxu0 0
        %3034 = vmatpush1.bf16.msra.mxu0 0
        %3035 = vmatprep.subr.bf16.mxu0 0
        %3036 = vmatpush1.bf16.msra.mxu0 0
        %3037 = vmatprep.subr.bf16.mxu0 0
        %3038 = vmatpush1.bf16.msra.mxu0 0
        %3039 = vmatprep.subr.bf16.mxu0 0
        %3040 = vmatpush1.bf16.msra.mxu0 0
        %3041 = vmatprep.subr.bf16.mxu0 0
        %3042 = vmatpush1.bf16.msra.mxu0 0
        %3043 = vmatprep.subr.bf16.mxu0 0
        %3044 = vmatpush1.bf16.msra.mxu0 0
        %3045 = vmatprep.subr.bf16.mxu0 0
        %3046 = vmatpush1.bf16.msra.mxu0 0
        %3047 = vmatprep.subr.bf16.mxu0 0
        %3048 = vmatpush1.bf16.msra.mxu0 0
        %3049 = vmatprep.subr.bf16.mxu0 0
        %3050 = vmatpush1.bf16.msra.mxu0 0
        %3051 = vmatprep.mubr.bf16.mxu0 0
        %3052 = vmatmul.mubr.bf16.gmra.mrb[0].mxu0 %v3017
        %v3053 = vpop.f32.mrb[0].mxu0
        %v3054 = vadd.f32 %v2989, %v3053
        %v3055 = vpop.f32.mrb[0].mxu0
        %v3056 = vpop.f32.mrb[0].mxu0
        %v3057 = vadd.f32 %v2989, %v3056
        %v3058 = vpop.f32.mrb[0].mxu0
        %3059 = vdwg.mxu0
        %v3060 = vadd.f32 %v2845, %v3054
        %v3061 = vadd.f32 %v2846, %v3057
        %3062 = vst.msk [vmem:[#allocation2] sm:$0xff] %vm1182, %v3060
        %3063 = vst.msk [vmem:[#allocation2 + $0x8] sm:$0xff] %vm1182, %v3061
        %p3064 = scmp.eq.s32.totalorder %s40, 1
        // Predicated region
        $region137: #{decoder_forward.1} parent=131 // pred_check
          %p3065 = pneg %p3064
        $region138: #{decoder_forward.1} parent=131 // pred_check_branch
          %3067 = sbr.rel (%p3065) target = $region140
        $region139: #{decoder_forward.1} parent=131 // pred_region
          %v3068 = vld [vmem:[%s4] sm:$0x1]
          %v3069 = vld [vmem:[%s5] sm:$0x1]
          %v3070 = vsel %vm1182, %v3060, 0.0
          %3071 = vadd.xlane.f32.xlu0 %v3070
          %v3072 = vpop.xlane.xlu0 %3071
          %v3073 = vsel %vm1182, %v3061, 0.0
          %3074 = vadd.xlane.f32.xlu0 %v3073
          %v3075 = vpop.xlane.xlu0 %3074
          %v3076 = vmul.f32 %v3072, %v1189
          %v3077 = vmul.f32 %v3075, %v1189
          %v3078 = vsub.f32 %v3060, %v3076
          %v3079 = vsub.f32 %v3061, %v3077
          %v3080 = vmul.f32 %v3078, %v3078
          %v3081 = vmul.f32 %v3079, %v3079
          %v3082 = vsel %vm1182, %v3080, 0.0
          %3083 = vadd.xlane.f32.xlu0 %v3082
          %v3084 = vpop.xlane.xlu0 %3083
          %v3085 = vsel %vm1182, %v3081, 0.0
          %3086 = vadd.xlane.f32.xlu0 %v3085
          %v3087 = vpop.xlane.xlu0 %3086
          %v3088 = vmul.f32 %v3084, 0.032258064
          %v3089 = vmul.f32 %v3087, 0.032258064
          %v3091 = vlaneseq
          %v3092 = vshrl.u32 %v3091, 7
          %v3093 = vsub.s32 0, %v3092
          %v3094 = vrot.slane %v3068, %v3093
          %v3096 = vmul.f32 %v3094, %v3078
          %v3097 = vmul.f32 %v3094, %v3079
          %v3098 = vrsqrt.pop %v3088
          %v3099 = vmul.f32 %v3088, %v3098
          %vm3100 = vcmp.eq.f32.partialorder %v3088, inf
          %v3101 = vsel %vm3100, %v3088, %v3099
          %vm3102 = vcmp.eq.f32.partialorder %v3088, 0.0
          %v3103 = vand.u32 %v3088, 2147483648
          %v3104 = vsel %vm3102, %v3103, %v3101
          %v3105 = vrsqrt.pop %v3089
          %v3106 = vmul.f32 %v3089, %v3105
          %vm3107 = vcmp.eq.f32.partialorder %v3089, inf
          %v3108 = vsel %vm3107, %v3089, %v3106
          %vm3109 = vcmp.eq.f32.partialorder %v3089, 0.0
          %v3110 = vand.u32 %v3089, 2147483648
          %v3111 = vsel %vm3109, %v3110, %v3108
          %v3112 = vadd.f32 %v3104, 1e-06
          %v3113 = vadd.f32 %v3111, 1e-06
          %v3114 = vrcp.pop %v3112
          %v3115 = vmul.f32 %v3096, %v3114
          %v3116 = vrcp.pop %v3113
          %v3117 = vmul.f32 %v3097, %v3116
          %v3119 = vlaneseq
          %v3120 = vshrl.u32 %v3119, 7
          %v3121 = vsub.s32 0, %v3120
          %v3122 = vrot.slane %v3069, %v3121
          %v3124 = vadd.f32 %v3115, %v3122
          %v3125 = vadd.f32 %v3117, %v3122
          %3126 = vst.msk [vmem:[#allocation3] sm:$0xff] %vm1182, %v3124
          %3127 = vst.msk [vmem:[#allocation3 + $0x8] sm:$0xff] %vm1182, %v3125
        $region140: #{decoder_forward.1} parent=131 // pred_fallthru
          _
        // Predicated region
        $region141: #{decoder_forward.1} parent=131 // pred_check
          %p3128 = pneg %p751
        $region142: #{decoder_forward.1} parent=131 // pred_check_branch
          %3130 = sbr.rel (%p3128) target = $region144
        $region143: #{decoder_forward.1} parent=131 // pred_region
          %s3132 = ssub.s32 256, 256
          %3133 = vsyncadd [#allocation4], %s3132
          %s3134 = sshll.u32 [#allocation3], 4
          %s3135 = int_to_ptr.vmem [resolvable:$true] %s3134
          %3140 = dma.vmem_to_hbm [thread:$0]  %s3135, 256, %s28, [#allocation4], 128, 128, 8
        $region144: #{decoder_forward.1} parent=131 // pred_fallthru
          _
        // Predicated region
        $region145: #{decoder_forward.1} parent=131 // pred_check
          %p3141 = pneg %p751
        $region146: #{decoder_forward.1} parent=131 // pred_check_branch
          %3143 = sbr.rel (%p3141) target = $region148
        $region147: #{decoder_forward.1} parent=131 // pred_region
          %3144 = dma.done [#allocation4], 256
        $region148: #{decoder_forward.1} parent=131 // pred_fallthru
          _
      $region132: #{decoder_forward.1} parent=5 // pred_fallthru
        _
      %p3145 = scmp.le.s32.totalorder 2, %s35
      // Predicated region
      $region149: #{decoder_forward.1} parent=5 // pred_check
        %p3146 = pneg %p3145
      $region150: #{decoder_forward.1} parent=5 // pred_check_branch
        %3148 = sbr.rel (%p3146) target = $region152
      $region151: #{decoder_forward.1} parent=5 // pred_region
        %s3149 = ssub.s32 %s35, 2
      $region152: #{decoder_forward.1} parent=5 // pred_fallthru
        _
    $region6: #{decoder_forward.1} parent=1 // loop_footer
      %s39 = sadd.s32 1, %s35
    $region7: #{decoder_forward.1} parent=1 // loop_footer_branch
      %34 = sbr.rel target = $region3
    $region8: #{decoder_forward.1} parent=1 // loop_exit
      _
    %3150 = vsyncpa [#allocation4], 1
    %s3151 = scalar_lea.sflag [#allocation4], 1
    %3152 = vsyncpa %s3151, 1

</llo_original>
